<compile_context>
chip_gen: v7x
topology: tpu7x:2x2x1
jax: 0.10.0
libtpu: 0.0.40
codegen_flags: <defaults>
</compile_context>

<pallas_src>
import jax
import jax.numpy as jnp
from jax.experimental import pallas as pl
from jax.experimental.pallas import tpu as pltpu

# ---------------- configuration (small, consistent with the module) ----------
EMBED_DIM = 768          # fixed by BERT / conv kernel width
IN_CHANNELS = 8          # hidden_state[:, -8:]
OUT_CHANNELS = 8         # must be divisible by groups=4
GROUPS = 4
NUM_CLASSES = 5
KS = (3, 4, 5)
SEQ_LEN = 16
BATCH = 2

IC_PER_G = IN_CHANNELS // GROUPS       # 2
OC_PER_G = OUT_CHANNELS // GROUPS      # 2
NCOL_G = sum(KS) * OC_PER_G            # 24 dense columns per group (no zeros)
NC_PAD = 128                           # lane-dense padded classifier width

# column offset of each conv branch inside the 24 per-group columns
_BOFF = []
_off = 0
for _k in KS:
    _BOFF.append(_off)
    _off += _k * OC_PER_G
BOFF = tuple(_BOFF)                    # (0, 6, 14)


# ---------------- Pallas kernel ----------------------------------------------
def hierarchy_kernel(x_ref, wc_ref, bc_ref, wl_ref, bl_ref, out_ref):
    """Single grid step covering the whole (tiny) batch.

    x_ref  : (B, C, L, D)   f32, stacked last-8 BERT hidden states (native layout)
    wc_ref : (C, D, 24)     bf16, per-input-channel conv weights (dense, no zeros)
    bc_ref : (3, OC)        f32, per-branch conv biases
    wl_ref : (3*OC, NC_PAD) bf16, classifier weight, zero-padded to 128 lanes
    bl_ref : (1, NC_PAD)    f32
    out_ref: (B, NC_PAD)    f32
    """
    B, C, L, D = x_ref.shape
    BL = B * L

    x = x_ref[...]                                    # (B, C, L, D) f32
    bc = bc_ref[...]                                  # (3, OC) f32

    feats = [[] for _ in KS]                          # feats[branch][group] -> (B, OCg)
    for g in range(GROUPS):
        # Per-channel MXU accumulation: no structurally-zero K rows.
        y = None
        for icg in range(IC_PER_G):
            c = g * IC_PER_G + icg
            xc = x[:, c].astype(jnp.bfloat16).reshape(BL, D)          # (B*L, D) bf16
            p = jnp.dot(xc, wc_ref[c],
                        preferred_element_type=jnp.float32)           # (B*L, 24) f32
            y = p if y is None else y + p
        y3 = y.reshape(B, L, NCOL_G)                                  # (B, L, 24)

        # Shifted-add tap sum + bias + ReLU + time max, per branch (VPU/XLU work).
        for bi, k in enumerate(KS):
            T = L - k + 1
            c0 = BOFF[bi]
            acc = y3[:, 0:T, c0:c0 + OC_PER_G]                        # init from dt=0
            for dt in range(1, k):
                cs = c0 + dt * OC_PER_G
                acc = acc + y3[:, dt:dt + T, cs:cs + OC_PER_G]
            bias = bc[bi:bi + 1, g * OC_PER_G:(g + 1) * OC_PER_G]     # (1, OCg)
            acc = jnp.maximum(acc + bias[:, None, :], 0.0)            # (B, T, OCg)
            feats[bi].append(jnp.max(acc, axis=1))                    # (B, OCg)

    # Feature order matches PyTorch: [branch0 oc0..7, branch1 oc0..7, branch2 oc0..7].
    feat = jnp.concatenate(
        [jnp.concatenate(fb, axis=1) for fb in feats], axis=1)        # (B, 3*OC) f32

    logits = jnp.dot(feat.astype(jnp.bfloat16), wl_ref[...],
                     preferred_element_type=jnp.float32) + bl_ref[...]
    out_ref[...] = jnp.tanh(logits)                                   # (B, NC_PAD)


# ---------------- host-side weight packing (done ONCE at param-load time) -----
def _pack_branch(w, k):
    """PyTorch grouped conv weight (OC, IC/groups, k, D) ->
    dense per-input-channel weight (C, D, k*OCg) with no group-zero blocks."""
    oc, icg, kk, d = w.shape
    assert oc == OUT_CHANNELS and icg == IC_PER_G and kk == k and d == EMBED_DIM
    wg = w.reshape(GROUPS, OC_PER_G, IC_PER_G, k, d)      # (G, OCg, ICg, k, D)
    wt = jnp.transpose(wg, (0, 2, 4, 3, 1))               # (G, ICg, D, k, OCg)
    return wt.reshape(IN_CHANNELS, d, k * OC_PER_G)       # (C, D, k*OCg)


def pack_params(raw_params):
    """Hoisted out of the per-call forward path."""
    w1, b1, w2, b2, w3, b3, wl, bl = raw_params
    wc = jnp.concatenate(
        [_pack_branch(w1, KS[0]),
         _pack_branch(w2, KS[1]),
         _pack_branch(w3, KS[2])], axis=-1).astype(jnp.bfloat16)      # (C, D, 24)
    bc = jnp.stack([b1, b2, b3], axis=0).astype(jnp.float32)          # (3, OC)
    nc = wl.shape[1]
    wl_p = jnp.zeros((wl.shape[0], NC_PAD), jnp.bfloat16).at[:, :nc].set(
        wl.astype(jnp.bfloat16))                                      # (3*OC, 128) bf16
    bl_p = jnp.zeros((1, NC_PAD), jnp.float32).at[:, :nc].set(
        bl.astype(jnp.float32))                                       # (1, 128) f32
    return wc, bc, wl_p, bl_p


# ---------------- glue: pallas_call on native-layout input --------------------
@jax.jit
def hierarchy_forward(hidden_state, wc, bc, wl_p, bl_p):
    """hidden_state: (B, C, L, D) float32 (native stacked-BERT layout).
    Returns (B, NC_PAD); slice [:, :num_classes] outside."""
    B, C, L, D = hidden_state.shape
    assert C == IN_CHANNELS and D == EMBED_DIM
    assert L >= max(KS), "sequence length must be >= largest conv kernel"

    conv_flops = 2 * (B * L) * D * NCOL_G * C
    cls_flops = 2 * B * (len(KS) * OUT_CHANNELS) * NC_PAD
    bytes_accessed = (hidden_state.size * 4 + wc.size * 2 + bc.size * 4
                      + wl_p.size * 2 + bl_p.size * 4 + B * NC_PAD * 4)

    out = pl.pallas_call(
        hierarchy_kernel,
        out_shape=jax.ShapeDtypeStruct((B, NC_PAD), jnp.float32),
        grid=(1,),                                   # whole batch fused: one grid step
        in_specs=[
            pl.BlockSpec((B, C, L, D), lambda i: (0, 0, 0, 0)),
            pl.BlockSpec(wc.shape, lambda i: (0, 0, 0)),
            pl.BlockSpec(bc.shape, lambda i: (0, 0)),
            pl.BlockSpec(wl_p.shape, lambda i: (0, 0)),
            pl.BlockSpec(bl_p.shape, lambda i: (0, 0)),
        ],
        out_specs=pl.BlockSpec((B, NC_PAD), lambda i: (0, 0)),
        compiler_params=pltpu.CompilerParams(
            dimension_semantics=("arbitrary",)),
        cost_estimate=pl.CostEstimate(
            flops=conv_flops + cls_flops,
            transcendentals=B * NC_PAD,
            bytes_accessed=bytes_accessed),
    )(hidden_state, wc, bc, wl_p, bl_p)
    return out


# ---------------- pure-JAX reference (for correctness check, f32) -------------
def reference_forward(hidden_state, raw_params):
    w1, b1, w2, b2, w3, b3, wl, bl = raw_params

    def conv_branch(w, b):
        y = jax.lax.conv_general_dilated(
            hidden_state, w, window_strides=(1, 1), padding="VALID",
            dimension_numbers=("NCHW", "OIHW", "NCHW"),
            feature_group_count=GROUPS)
        y = y + b.reshape(1, -1, 1, 1)
        y = jnp.squeeze(y, axis=3)
        y = jax.nn.relu(y)
        return jnp.max(y, axis=2)                       # (B, OC)

    feats = jnp.concatenate(
        [conv_branch(w1, b1), conv_branch(w2, b2), conv_branch(w3, b3)], axis=1)
    return jnp.tanh(feats @ wl + bl)


# ---------------- main --------------------------------------------------------
if __name__ == "__main__":
    key = jax.random.PRNGKey(0)
    ks = jax.random.split(key, 10)

    # deterministic synthetic parameters (PyTorch grouped-conv weight layout OIHW)
    w1 = 0.02 * jax.random.normal(ks[0], (OUT_CHANNELS, IC_PER_G, KS[0], EMBED_DIM), jnp.float32)
    b1 = 0.02 * jax.random.normal(ks[1], (OUT_CHANNELS,), jnp.float32)
    w2 = 0.02 * jax.random.normal(ks[2], (OUT_CHANNELS, IC_PER_G, KS[1], EMBED_DIM), jnp.float32)
    b2 = 0.02 * jax.random.normal(ks[3], (OUT_CHANNELS,), jnp.float32)
    w3 = 0.02 * jax.random.normal(ks[4], (OUT_CHANNELS, IC_PER_G, KS[2], EMBED_DIM), jnp.float32)
    b3 = 0.02 * jax.random.normal(ks[5], (OUT_CHANNELS,), jnp.float32)
    wl = 0.05 * jax.random.normal(ks[6], (len(KS) * OUT_CHANNELS, NUM_CLASSES), jnp.float32)
    bl = 0.05 * jax.random.normal(ks[7], (NUM_CLASSES,), jnp.float32)
    params = (w1, b1, w2, b2, w3, b3, wl, bl)

    # synthetic stacked BERT hidden states: [B, 8 layers, L, 768]
    hidden_state = jax.random.normal(
        ks[8], (BATCH, IN_CHANNELS, SEQ_LEN, EMBED_DIM), jnp.float32)

    packed = pack_params(params)                 # packed once, outside the forward path
    out_full = hierarchy_forward(hidden_state, *packed)
    out_full = jax.block_until_ready(out_full)
    out = out_full[:, :NUM_CLASSES]

    ref = jax.block_until_ready(reference_forward(hidden_state, params))
    assert out.shape == (BATCH, NUM_CLASSES)
    # bf16 matmul operands vs f32 reference -> loose-but-safe tolerance
    # (the head runs in bf16 with f32 accumulation).
    assert jnp.allclose(out, ref, atol=2e-2, rtol=2e-2), (out, ref)

    print("KERNEL_OK")
</pallas_src>

<mosaic_0001>
module attributes {stable_mosaic.version = 11 : i64} {
  func.func @hierarchy_kernel(%arg0: i32, %arg1: memref<2x8x16x768xf32, #tpu.memory_space<vmem>>, %arg2: memref<8x768x24xbf16, #tpu.memory_space<vmem>>, %arg3: memref<3x8xf32, #tpu.memory_space<vmem>>, %arg4: memref<24x128xbf16, #tpu.memory_space<vmem>>, %arg5: memref<1x128xf32, #tpu.memory_space<vmem>>, %arg6: memref<2x128xf32, #tpu.memory_space<vmem>>) attributes {dimension_semantics = [#tpu.dimension_semantics<arbitrary>], iteration_bounds = array<i64: 1>, scalar_prefetch = 0 : i64, scratch_operands = 0 : i64, tpu.core_type = #tpu.core_type<tc>, window_params = [{pipeline_mode = #tpu.pipeline_mode<synchronous>, transform_indices = @transform_0, window_bounds = array<i64: 2, 8, 16, 768>}, {pipeline_mode = #tpu.pipeline_mode<synchronous>, transform_indices = @transform_1, window_bounds = array<i64: 8, 768, 24>}, {pipeline_mode = #tpu.pipeline_mode<synchronous>, transform_indices = @transform_2, window_bounds = array<i64: 3, 8>}, {pipeline_mode = #tpu.pipeline_mode<synchronous>, transform_indices = @transform_3, window_bounds = array<i64: 24, 128>}, {pipeline_mode = #tpu.pipeline_mode<synchronous>, transform_indices = @transform_4, window_bounds = array<i64: 1, 128>}, {pipeline_mode = #tpu.pipeline_mode<synchronous>, transform_indices = @transform_5, window_bounds = array<i64: 2, 128>}]} {
    %c0 = arith.constant 0 : index
    %c0_0 = arith.constant 0 : index
    %c0_1 = arith.constant 0 : index
    %c0_2 = arith.constant 0 : index
    %0 = vector.load %arg1[%c0, %c0_0, %c0_1, %c0_2] : memref<2x8x16x768xf32, #tpu.memory_space<vmem>>, vector<2x8x16x768xf32>
    %c0_3 = arith.constant 0 : index
    %c0_4 = arith.constant 0 : index
    %1 = vector.load %arg3[%c0_3, %c0_4] : memref<3x8xf32, #tpu.memory_space<vmem>>, vector<3x8xf32>
    %2 = vector.extract_strided_slice %0 {offsets = [0, 0, 0, 0], sizes = [2, 1, 16, 768], strides = [1, 1, 1, 1]} : vector<2x8x16x768xf32> to vector<2x1x16x768xf32>
    %3 = vector.shape_cast %2 : vector<2x1x16x768xf32> to vector<2x16x768xf32>
    %4 = arith.truncf %3 : vector<2x16x768xf32> to vector<2x16x768xbf16>
    %5 = vector.shape_cast %4 : vector<2x16x768xbf16> to vector<32x768xbf16>
    %c0_5 = arith.constant 0 : index
    %c0_6 = arith.constant 0 : index
    %c0_7 = arith.constant 0 : index
    %6 = vector.load %arg2[%c0_5, %c0_6, %c0_7] : memref<8x768x24xbf16, #tpu.memory_space<vmem>>, vector<1x768x24xbf16>
    %7 = vector.shape_cast %6 : vector<1x768x24xbf16> to vector<768x24xbf16>
    %cst = arith.constant dense<0.000000e+00> : vector<32x24xf32>
    %8 = tpu.matmul %5, %7, %cst {dimension_numbers = #tpu.dot_dimension_numbers<[1], [0], [0], [1], [0, 0, 1, 1], [], []>} : vector<32x768xbf16>, vector<768x24xbf16>, vector<32x24xf32> -> vector<32x24xf32>
    %9 = vector.extract_strided_slice %0 {offsets = [0, 1, 0, 0], sizes = [2, 1, 16, 768], strides = [1, 1, 1, 1]} : vector<2x8x16x768xf32> to vector<2x1x16x768xf32>
    %10 = vector.shape_cast %9 : vector<2x1x16x768xf32> to vector<2x16x768xf32>
    %11 = arith.truncf %10 : vector<2x16x768xf32> to vector<2x16x768xbf16>
    %12 = vector.shape_cast %11 : vector<2x16x768xbf16> to vector<32x768xbf16>
    %c1 = arith.constant 1 : index
    %c0_8 = arith.constant 0 : index
    %c0_9 = arith.constant 0 : index
    %13 = vector.load %arg2[%c1, %c0_8, %c0_9] : memref<8x768x24xbf16, #tpu.memory_space<vmem>>, vector<1x768x24xbf16>
    %14 = vector.shape_cast %13 : vector<1x768x24xbf16> to vector<768x24xbf16>
    %cst_10 = arith.constant dense<0.000000e+00> : vector<32x24xf32>
    %15 = tpu.matmul %12, %14, %cst_10 {dimension_numbers = #tpu.dot_dimension_numbers<[1], [0], [0], [1], [0, 0, 1, 1], [], []>} : vector<32x768xbf16>, vector<768x24xbf16>, vector<32x24xf32> -> vector<32x24xf32>
    %16 = arith.addf %8, %15 : vector<32x24xf32>
    %17 = vector.shape_cast %16 : vector<32x24xf32> to vector<2x16x24xf32>
    %18 = vector.extract_strided_slice %17 {offsets = [0, 0, 0], sizes = [2, 14, 2], strides = [1, 1, 1]} : vector<2x16x24xf32> to vector<2x14x2xf32>
    %19 = vector.extract_strided_slice %17 {offsets = [0, 1, 2], sizes = [2, 14, 2], strides = [1, 1, 1]} : vector<2x16x24xf32> to vector<2x14x2xf32>
    %20 = arith.addf %18, %19 : vector<2x14x2xf32>
    %21 = vector.extract_strided_slice %17 {offsets = [0, 2, 4], sizes = [2, 14, 2], strides = [1, 1, 1]} : vector<2x16x24xf32> to vector<2x14x2xf32>
    %22 = arith.addf %20, %21 : vector<2x14x2xf32>
    %23 = vector.extract_strided_slice %1 {offsets = [0, 0], sizes = [1, 2], strides = [1, 1]} : vector<3x8xf32> to vector<1x2xf32>
    %24 = vector.shape_cast %23 : vector<1x2xf32> to vector<1x1x2xf32>
    %25 = vector.broadcast %24 : vector<1x1x2xf32> to vector<2x14x2xf32>
    %26 = arith.addf %22, %25 : vector<2x14x2xf32>
    %cst_11 = arith.constant 0.000000e+00 : f32
    %27 = vector.broadcast %cst_11 : f32 to vector<2x14x2xf32>
    %28 = arith.maximumf %26, %27 : vector<2x14x2xf32>
    %cst_12 = arith.constant dense<0xFF800000> : vector<2x2xf32>
    %29 = vector.multi_reduction <maximumf>, %28, %cst_12 [1] : vector<2x14x2xf32> to vector<2x2xf32>
    %30 = vector.extract_strided_slice %17 {offsets = [0, 0, 6], sizes = [2, 13, 2], strides = [1, 1, 1]} : vector<2x16x24xf32> to vector<2x13x2xf32>
    %31 = vector.extract_strided_slice %17 {offsets = [0, 1, 8], sizes = [2, 13, 2], strides = [1, 1, 1]} : vector<2x16x24xf32> to vector<2x13x2xf32>
    %32 = arith.addf %30, %31 : vector<2x13x2xf32>
    %33 = vector.extract_strided_slice %17 {offsets = [0, 2, 10], sizes = [2, 13, 2], strides = [1, 1, 1]} : vector<2x16x24xf32> to vector<2x13x2xf32>
    %34 = arith.addf %32, %33 : vector<2x13x2xf32>
    %35 = vector.extract_strided_slice %17 {offsets = [0, 3, 12], sizes = [2, 13, 2], strides = [1, 1, 1]} : vector<2x16x24xf32> to vector<2x13x2xf32>
    %36 = arith.addf %34, %35 : vector<2x13x2xf32>
    %37 = vector.extract_strided_slice %1 {offsets = [1, 0], sizes = [1, 2], strides = [1, 1]} : vector<3x8xf32> to vector<1x2xf32>
    %38 = vector.shape_cast %37 : vector<1x2xf32> to vector<1x1x2xf32>
    %39 = vector.broadcast %38 : vector<1x1x2xf32> to vector<2x13x2xf32>
    %40 = arith.addf %36, %39 : vector<2x13x2xf32>
    %cst_13 = arith.constant 0.000000e+00 : f32
    %41 = vector.broadcast %cst_13 : f32 to vector<2x13x2xf32>
    %42 = arith.maximumf %40, %41 : vector<2x13x2xf32>
    %cst_14 = arith.constant dense<0xFF800000> : vector<2x2xf32>
    %43 = vector.multi_reduction <maximumf>, %42, %cst_14 [1] : vector<2x13x2xf32> to vector<2x2xf32>
    %44 = vector.extract_strided_slice %17 {offsets = [0, 0, 14], sizes = [2, 12, 2], strides = [1, 1, 1]} : vector<2x16x24xf32> to vector<2x12x2xf32>
    %45 = vector.extract_strided_slice %17 {offsets = [0, 1, 16], sizes = [2, 12, 2], strides = [1, 1, 1]} : vector<2x16x24xf32> to vector<2x12x2xf32>
    %46 = arith.addf %44, %45 : vector<2x12x2xf32>
    %47 = vector.extract_strided_slice %17 {offsets = [0, 2, 18], sizes = [2, 12, 2], strides = [1, 1, 1]} : vector<2x16x24xf32> to vector<2x12x2xf32>
    %48 = arith.addf %46, %47 : vector<2x12x2xf32>
    %49 = vector.extract_strided_slice %17 {offsets = [0, 3, 20], sizes = [2, 12, 2], strides = [1, 1, 1]} : vector<2x16x24xf32> to vector<2x12x2xf32>
    %50 = arith.addf %48, %49 : vector<2x12x2xf32>
    %51 = vector.extract_strided_slice %17 {offsets = [0, 4, 22], sizes = [2, 12, 2], strides = [1, 1, 1]} : vector<2x16x24xf32> to vector<2x12x2xf32>
    %52 = arith.addf %50, %51 : vector<2x12x2xf32>
    %53 = vector.extract_strided_slice %1 {offsets = [2, 0], sizes = [1, 2], strides = [1, 1]} : vector<3x8xf32> to vector<1x2xf32>
    %54 = vector.shape_cast %53 : vector<1x2xf32> to vector<1x1x2xf32>
    %55 = vector.broadcast %54 : vector<1x1x2xf32> to vector<2x12x2xf32>
    %56 = arith.addf %52, %55 : vector<2x12x2xf32>
    %cst_15 = arith.constant 0.000000e+00 : f32
    %57 = vector.broadcast %cst_15 : f32 to vector<2x12x2xf32>
    %58 = arith.maximumf %56, %57 : vector<2x12x2xf32>
    %cst_16 = arith.constant dense<0xFF800000> : vector<2x2xf32>
    %59 = vector.multi_reduction <maximumf>, %58, %cst_16 [1] : vector<2x12x2xf32> to vector<2x2xf32>
    %60 = vector.extract_strided_slice %0 {offsets = [0, 2, 0, 0], sizes = [2, 1, 16, 768], strides = [1, 1, 1, 1]} : vector<2x8x16x768xf32> to vector<2x1x16x768xf32>
    %61 = vector.shape_cast %60 : vector<2x1x16x768xf32> to vector<2x16x768xf32>
    %62 = arith.truncf %61 : vector<2x16x768xf32> to vector<2x16x768xbf16>
    %63 = vector.shape_cast %62 : vector<2x16x768xbf16> to vector<32x768xbf16>
    %c2 = arith.constant 2 : index
    %c0_17 = arith.constant 0 : index
    %c0_18 = arith.constant 0 : index
    %64 = vector.load %arg2[%c2, %c0_17, %c0_18] : memref<8x768x24xbf16, #tpu.memory_space<vmem>>, vector<1x768x24xbf16>
    %65 = vector.shape_cast %64 : vector<1x768x24xbf16> to vector<768x24xbf16>
    %cst_19 = arith.constant dense<0.000000e+00> : vector<32x24xf32>
    %66 = tpu.matmul %63, %65, %cst_19 {dimension_numbers = #tpu.dot_dimension_numbers<[1], [0], [0], [1], [0, 0, 1, 1], [], []>} : vector<32x768xbf16>, vector<768x24xbf16>, vector<32x24xf32> -> vector<32x24xf32>
    %67 = vector.extract_strided_slice %0 {offsets = [0, 3, 0, 0], sizes = [2, 1, 16, 768], strides = [1, 1, 1, 1]} : vector<2x8x16x768xf32> to vector<2x1x16x768xf32>
    %68 = vector.shape_cast %67 : vector<2x1x16x768xf32> to vector<2x16x768xf32>
    %69 = arith.truncf %68 : vector<2x16x768xf32> to vector<2x16x768xbf16>
    %70 = vector.shape_cast %69 : vector<2x16x768xbf16> to vector<32x768xbf16>
    %c3 = arith.constant 3 : index
    %c0_20 = arith.constant 0 : index
    %c0_21 = arith.constant 0 : index
    %71 = vector.load %arg2[%c3, %c0_20, %c0_21] : memref<8x768x24xbf16, #tpu.memory_space<vmem>>, vector<1x768x24xbf16>
    %72 = vector.shape_cast %71 : vector<1x768x24xbf16> to vector<768x24xbf16>
    %cst_22 = arith.constant dense<0.000000e+00> : vector<32x24xf32>
    %73 = tpu.matmul %70, %72, %cst_22 {dimension_numbers = #tpu.dot_dimension_numbers<[1], [0], [0], [1], [0, 0, 1, 1], [], []>} : vector<32x768xbf16>, vector<768x24xbf16>, vector<32x24xf32> -> vector<32x24xf32>
    %74 = arith.addf %66, %73 : vector<32x24xf32>
    %75 = vector.shape_cast %74 : vector<32x24xf32> to vector<2x16x24xf32>
    %76 = vector.extract_strided_slice %75 {offsets = [0, 0, 0], sizes = [2, 14, 2], strides = [1, 1, 1]} : vector<2x16x24xf32> to vector<2x14x2xf32>
    %77 = vector.extract_strided_slice %75 {offsets = [0, 1, 2], sizes = [2, 14, 2], strides = [1, 1, 1]} : vector<2x16x24xf32> to vector<2x14x2xf32>
    %78 = arith.addf %76, %77 : vector<2x14x2xf32>
    %79 = vector.extract_strided_slice %75 {offsets = [0, 2, 4], sizes = [2, 14, 2], strides = [1, 1, 1]} : vector<2x16x24xf32> to vector<2x14x2xf32>
    %80 = arith.addf %78, %79 : vector<2x14x2xf32>
    %81 = vector.extract_strided_slice %1 {offsets = [0, 2], sizes = [1, 2], strides = [1, 1]} : vector<3x8xf32> to vector<1x2xf32>
    %82 = vector.shape_cast %81 : vector<1x2xf32> to vector<1x1x2xf32>
    %83 = vector.broadcast %82 : vector<1x1x2xf32> to vector<2x14x2xf32>
    %84 = arith.addf %80, %83 : vector<2x14x2xf32>
    %cst_23 = arith.constant 0.000000e+00 : f32
    %85 = vector.broadcast %cst_23 : f32 to vector<2x14x2xf32>
    %86 = arith.maximumf %84, %85 : vector<2x14x2xf32>
    %cst_24 = arith.constant dense<0xFF800000> : vector<2x2xf32>
    %87 = vector.multi_reduction <maximumf>, %86, %cst_24 [1] : vector<2x14x2xf32> to vector<2x2xf32>
    %88 = vector.extract_strided_slice %75 {offsets = [0, 0, 6], sizes = [2, 13, 2], strides = [1, 1, 1]} : vector<2x16x24xf32> to vector<2x13x2xf32>
    %89 = vector.extract_strided_slice %75 {offsets = [0, 1, 8], sizes = [2, 13, 2], strides = [1, 1, 1]} : vector<2x16x24xf32> to vector<2x13x2xf32>
    %90 = arith.addf %88, %89 : vector<2x13x2xf32>
    %91 = vector.extract_strided_slice %75 {offsets = [0, 2, 10], sizes = [2, 13, 2], strides = [1, 1, 1]} : vector<2x16x24xf32> to vector<2x13x2xf32>
    %92 = arith.addf %90, %91 : vector<2x13x2xf32>
    %93 = vector.extract_strided_slice %75 {offsets = [0, 3, 12], sizes = [2, 13, 2], strides = [1, 1, 1]} : vector<2x16x24xf32> to vector<2x13x2xf32>
    %94 = arith.addf %92, %93 : vector<2x13x2xf32>
    %95 = vector.extract_strided_slice %1 {offsets = [1, 2], sizes = [1, 2], strides = [1, 1]} : vector<3x8xf32> to vector<1x2xf32>
    %96 = vector.shape_cast %95 : vector<1x2xf32> to vector<1x1x2xf32>
    %97 = vector.broadcast %96 : vector<1x1x2xf32> to vector<2x13x2xf32>
    %98 = arith.addf %94, %97 : vector<2x13x2xf32>
    %cst_25 = arith.constant 0.000000e+00 : f32
    %99 = vector.broadcast %cst_25 : f32 to vector<2x13x2xf32>
    %100 = arith.maximumf %98, %99 : vector<2x13x2xf32>
    %cst_26 = arith.constant dense<0xFF800000> : vector<2x2xf32>
    %101 = vector.multi_reduction <maximumf>, %100, %cst_26 [1] : vector<2x13x2xf32> to vector<2x2xf32>
    %102 = vector.extract_strided_slice %75 {offsets = [0, 0, 14], sizes = [2, 12, 2], strides = [1, 1, 1]} : vector<2x16x24xf32> to vector<2x12x2xf32>
    %103 = vector.extract_strided_slice %75 {offsets = [0, 1, 16], sizes = [2, 12, 2], strides = [1, 1, 1]} : vector<2x16x24xf32> to vector<2x12x2xf32>
    %104 = arith.addf %102, %103 : vector<2x12x2xf32>
    %105 = vector.extract_strided_slice %75 {offsets = [0, 2, 18], sizes = [2, 12, 2], strides = [1, 1, 1]} : vector<2x16x24xf32> to vector<2x12x2xf32>
    %106 = arith.addf %104, %105 : vector<2x12x2xf32>
    %107 = vector.extract_strided_slice %75 {offsets = [0, 3, 20], sizes = [2, 12, 2], strides = [1, 1, 1]} : vector<2x16x24xf32> to vector<2x12x2xf32>
    %108 = arith.addf %106, %107 : vector<2x12x2xf32>
    %109 = vector.extract_strided_slice %75 {offsets = [0, 4, 22], sizes = [2, 12, 2], strides = [1, 1, 1]} : vector<2x16x24xf32> to vector<2x12x2xf32>
    %110 = arith.addf %108, %109 : vector<2x12x2xf32>
    %111 = vector.extract_strided_slice %1 {offsets = [2, 2], sizes = [1, 2], strides = [1, 1]} : vector<3x8xf32> to vector<1x2xf32>
    %112 = vector.shape_cast %111 : vector<1x2xf32> to vector<1x1x2xf32>
    %113 = vector.broadcast %112 : vector<1x1x2xf32> to vector<2x12x2xf32>
    %114 = arith.addf %110, %113 : vector<2x12x2xf32>
    %cst_27 = arith.constant 0.000000e+00 : f32
    %115 = vector.broadcast %cst_27 : f32 to vector<2x12x2xf32>
    %116 = arith.maximumf %114, %115 : vector<2x12x2xf32>
    %cst_28 = arith.constant dense<0xFF800000> : vector<2x2xf32>
    %117 = vector.multi_reduction <maximumf>, %116, %cst_28 [1] : vector<2x12x2xf32> to vector<2x2xf32>
    %118 = vector.extract_strided_slice %0 {offsets = [0, 4, 0, 0], sizes = [2, 1, 16, 768], strides = [1, 1, 1, 1]} : vector<2x8x16x768xf32> to vector<2x1x16x768xf32>
    %119 = vector.shape_cast %118 : vector<2x1x16x768xf32> to vector<2x16x768xf32>
    %120 = arith.truncf %119 : vector<2x16x768xf32> to vector<2x16x768xbf16>
    %121 = vector.shape_cast %120 : vector<2x16x768xbf16> to vector<32x768xbf16>
    %c4 = arith.constant 4 : index
    %c0_29 = arith.constant 0 : index
    %c0_30 = arith.constant 0 : index
    %122 = vector.load %arg2[%c4, %c0_29, %c0_30] : memref<8x768x24xbf16, #tpu.memory_space<vmem>>, vector<1x768x24xbf16>
    %123 = vector.shape_cast %122 : vector<1x768x24xbf16> to vector<768x24xbf16>
    %cst_31 = arith.constant dense<0.000000e+00> : vector<32x24xf32>
    %124 = tpu.matmul %121, %123, %cst_31 {dimension_numbers = #tpu.dot_dimension_numbers<[1], [0], [0], [1], [0, 0, 1, 1], [], []>} : vector<32x768xbf16>, vector<768x24xbf16>, vector<32x24xf32> -> vector<32x24xf32>
    %125 = vector.extract_strided_slice %0 {offsets = [0, 5, 0, 0], sizes = [2, 1, 16, 768], strides = [1, 1, 1, 1]} : vector<2x8x16x768xf32> to vector<2x1x16x768xf32>
    %126 = vector.shape_cast %125 : vector<2x1x16x768xf32> to vector<2x16x768xf32>
    %127 = arith.truncf %126 : vector<2x16x768xf32> to vector<2x16x768xbf16>
    %128 = vector.shape_cast %127 : vector<2x16x768xbf16> to vector<32x768xbf16>
    %c5 = arith.constant 5 : index
    %c0_32 = arith.constant 0 : index
    %c0_33 = arith.constant 0 : index
    %129 = vector.load %arg2[%c5, %c0_32, %c0_33] : memref<8x768x24xbf16, #tpu.memory_space<vmem>>, vector<1x768x24xbf16>
    %130 = vector.shape_cast %129 : vector<1x768x24xbf16> to vector<768x24xbf16>
    %cst_34 = arith.constant dense<0.000000e+00> : vector<32x24xf32>
    %131 = tpu.matmul %128, %130, %cst_34 {dimension_numbers = #tpu.dot_dimension_numbers<[1], [0], [0], [1], [0, 0, 1, 1], [], []>} : vector<32x768xbf16>, vector<768x24xbf16>, vector<32x24xf32> -> vector<32x24xf32>
    %132 = arith.addf %124, %131 : vector<32x24xf32>
    %133 = vector.shape_cast %132 : vector<32x24xf32> to vector<2x16x24xf32>
    %134 = vector.extract_strided_slice %133 {offsets = [0, 0, 0], sizes = [2, 14, 2], strides = [1, 1, 1]} : vector<2x16x24xf32> to vector<2x14x2xf32>
    %135 = vector.extract_strided_slice %133 {offsets = [0, 1, 2], sizes = [2, 14, 2], strides = [1, 1, 1]} : vector<2x16x24xf32> to vector<2x14x2xf32>
    %136 = arith.addf %134, %135 : vector<2x14x2xf32>
    %137 = vector.extract_strided_slice %133 {offsets = [0, 2, 4], sizes = [2, 14, 2], strides = [1, 1, 1]} : vector<2x16x24xf32> to vector<2x14x2xf32>
    %138 = arith.addf %136, %137 : vector<2x14x2xf32>
    %139 = vector.extract_strided_slice %1 {offsets = [0, 4], sizes = [1, 2], strides = [1, 1]} : vector<3x8xf32> to vector<1x2xf32>
    %140 = vector.shape_cast %139 : vector<1x2xf32> to vector<1x1x2xf32>
    %141 = vector.broadcast %140 : vector<1x1x2xf32> to vector<2x14x2xf32>
    %142 = arith.addf %138, %141 : vector<2x14x2xf32>
    %cst_35 = arith.constant 0.000000e+00 : f32
    %143 = vector.broadcast %cst_35 : f32 to vector<2x14x2xf32>
    %144 = arith.maximumf %142, %143 : vector<2x14x2xf32>
    %cst_36 = arith.constant dense<0xFF800000> : vector<2x2xf32>
    %145 = vector.multi_reduction <maximumf>, %144, %cst_36 [1] : vector<2x14x2xf32> to vector<2x2xf32>
    %146 = vector.extract_strided_slice %133 {offsets = [0, 0, 6], sizes = [2, 13, 2], strides = [1, 1, 1]} : vector<2x16x24xf32> to vector<2x13x2xf32>
    %147 = vector.extract_strided_slice %133 {offsets = [0, 1, 8], sizes = [2, 13, 2], strides = [1, 1, 1]} : vector<2x16x24xf32> to vector<2x13x2xf32>
    %148 = arith.addf %146, %147 : vector<2x13x2xf32>
    %149 = vector.extract_strided_slice %133 {offsets = [0, 2, 10], sizes = [2, 13, 2], strides = [1, 1, 1]} : vector<2x16x24xf32> to vector<2x13x2xf32>
    %150 = arith.addf %148, %149 : vector<2x13x2xf32>
    %151 = vector.extract_strided_slice %133 {offsets = [0, 3, 12], sizes = [2, 13, 2], strides = [1, 1, 1]} : vector<2x16x24xf32> to vector<2x13x2xf32>
    %152 = arith.addf %150, %151 : vector<2x13x2xf32>
    %153 = vector.extract_strided_slice %1 {offsets = [1, 4], sizes = [1, 2], strides = [1, 1]} : vector<3x8xf32> to vector<1x2xf32>
    %154 = vector.shape_cast %153 : vector<1x2xf32> to vector<1x1x2xf32>
    %155 = vector.broadcast %154 : vector<1x1x2xf32> to vector<2x13x2xf32>
    %156 = arith.addf %152, %155 : vector<2x13x2xf32>
    %cst_37 = arith.constant 0.000000e+00 : f32
    %157 = vector.broadcast %cst_37 : f32 to vector<2x13x2xf32>
    %158 = arith.maximumf %156, %157 : vector<2x13x2xf32>
    %cst_38 = arith.constant dense<0xFF800000> : vector<2x2xf32>
    %159 = vector.multi_reduction <maximumf>, %158, %cst_38 [1] : vector<2x13x2xf32> to vector<2x2xf32>
    %160 = vector.extract_strided_slice %133 {offsets = [0, 0, 14], sizes = [2, 12, 2], strides = [1, 1, 1]} : vector<2x16x24xf32> to vector<2x12x2xf32>
    %161 = vector.extract_strided_slice %133 {offsets = [0, 1, 16], sizes = [2, 12, 2], strides = [1, 1, 1]} : vector<2x16x24xf32> to vector<2x12x2xf32>
    %162 = arith.addf %160, %161 : vector<2x12x2xf32>
    %163 = vector.extract_strided_slice %133 {offsets = [0, 2, 18], sizes = [2, 12, 2], strides = [1, 1, 1]} : vector<2x16x24xf32> to vector<2x12x2xf32>
    %164 = arith.addf %162, %163 : vector<2x12x2xf32>
    %165 = vector.extract_strided_slice %133 {offsets = [0, 3, 20], sizes = [2, 12, 2], strides = [1, 1, 1]} : vector<2x16x24xf32> to vector<2x12x2xf32>
    %166 = arith.addf %164, %165 : vector<2x12x2xf32>
    %167 = vector.extract_strided_slice %133 {offsets = [0, 4, 22], sizes = [2, 12, 2], strides = [1, 1, 1]} : vector<2x16x24xf32> to vector<2x12x2xf32>
    %168 = arith.addf %166, %167 : vector<2x12x2xf32>
    %169 = vector.extract_strided_slice %1 {offsets = [2, 4], sizes = [1, 2], strides = [1, 1]} : vector<3x8xf32> to vector<1x2xf32>
    %170 = vector.shape_cast %169 : vector<1x2xf32> to vector<1x1x2xf32>
    %171 = vector.broadcast %170 : vector<1x1x2xf32> to vector<2x12x2xf32>
    %172 = arith.addf %168, %171 : vector<2x12x2xf32>
    %cst_39 = arith.constant 0.000000e+00 : f32
    %173 = vector.broadcast %cst_39 : f32 to vector<2x12x2xf32>
    %174 = arith.maximumf %172, %173 : vector<2x12x2xf32>
    %cst_40 = arith.constant dense<0xFF800000> : vector<2x2xf32>
    %175 = vector.multi_reduction <maximumf>, %174, %cst_40 [1] : vector<2x12x2xf32> to vector<2x2xf32>
    %176 = vector.extract_strided_slice %0 {offsets = [0, 6, 0, 0], sizes = [2, 1, 16, 768], strides = [1, 1, 1, 1]} : vector<2x8x16x768xf32> to vector<2x1x16x768xf32>
    %177 = vector.shape_cast %176 : vector<2x1x16x768xf32> to vector<2x16x768xf32>
    %178 = arith.truncf %177 : vector<2x16x768xf32> to vector<2x16x768xbf16>
    %179 = vector.shape_cast %178 : vector<2x16x768xbf16> to vector<32x768xbf16>
    %c6 = arith.constant 6 : index
    %c0_41 = arith.constant 0 : index
    %c0_42 = arith.constant 0 : index
    %180 = vector.load %arg2[%c6, %c0_41, %c0_42] : memref<8x768x24xbf16, #tpu.memory_space<vmem>>, vector<1x768x24xbf16>
    %181 = vector.shape_cast %180 : vector<1x768x24xbf16> to vector<768x24xbf16>
    %cst_43 = arith.constant dense<0.000000e+00> : vector<32x24xf32>
    %182 = tpu.matmul %179, %181, %cst_43 {dimension_numbers = #tpu.dot_dimension_numbers<[1], [0], [0], [1], [0, 0, 1, 1], [], []>} : vector<32x768xbf16>, vector<768x24xbf16>, vector<32x24xf32> -> vector<32x24xf32>
    %183 = vector.extract_strided_slice %0 {offsets = [0, 7, 0, 0], sizes = [2, 1, 16, 768], strides = [1, 1, 1, 1]} : vector<2x8x16x768xf32> to vector<2x1x16x768xf32>
    %184 = vector.shape_cast %183 : vector<2x1x16x768xf32> to vector<2x16x768xf32>
    %185 = arith.truncf %184 : vector<2x16x768xf32> to vector<2x16x768xbf16>
    %186 = vector.shape_cast %185 : vector<2x16x768xbf16> to vector<32x768xbf16>
    %c7 = arith.constant 7 : index
    %c0_44 = arith.constant 0 : index
    %c0_45 = arith.constant 0 : index
    %187 = vector.load %arg2[%c7, %c0_44, %c0_45] : memref<8x768x24xbf16, #tpu.memory_space<vmem>>, vector<1x768x24xbf16>
    %188 = vector.shape_cast %187 : vector<1x768x24xbf16> to vector<768x24xbf16>
    %cst_46 = arith.constant dense<0.000000e+00> : vector<32x24xf32>
    %189 = tpu.matmul %186, %188, %cst_46 {dimension_numbers = #tpu.dot_dimension_numbers<[1], [0], [0], [1], [0, 0, 1, 1], [], []>} : vector<32x768xbf16>, vector<768x24xbf16>, vector<32x24xf32> -> vector<32x24xf32>
    %190 = arith.addf %182, %189 : vector<32x24xf32>
    %191 = vector.shape_cast %190 : vector<32x24xf32> to vector<2x16x24xf32>
    %192 = vector.extract_strided_slice %191 {offsets = [0, 0, 0], sizes = [2, 14, 2], strides = [1, 1, 1]} : vector<2x16x24xf32> to vector<2x14x2xf32>
    %193 = vector.extract_strided_slice %191 {offsets = [0, 1, 2], sizes = [2, 14, 2], strides = [1, 1, 1]} : vector<2x16x24xf32> to vector<2x14x2xf32>
    %194 = arith.addf %192, %193 : vector<2x14x2xf32>
    %195 = vector.extract_strided_slice %191 {offsets = [0, 2, 4], sizes = [2, 14, 2], strides = [1, 1, 1]} : vector<2x16x24xf32> to vector<2x14x2xf32>
    %196 = arith.addf %194, %195 : vector<2x14x2xf32>
    %197 = vector.extract_strided_slice %1 {offsets = [0, 6], sizes = [1, 2], strides = [1, 1]} : vector<3x8xf32> to vector<1x2xf32>
    %198 = vector.shape_cast %197 : vector<1x2xf32> to vector<1x1x2xf32>
    %199 = vector.broadcast %198 : vector<1x1x2xf32> to vector<2x14x2xf32>
    %200 = arith.addf %196, %199 : vector<2x14x2xf32>
    %cst_47 = arith.constant 0.000000e+00 : f32
    %201 = vector.broadcast %cst_47 : f32 to vector<2x14x2xf32>
    %202 = arith.maximumf %200, %201 : vector<2x14x2xf32>
    %cst_48 = arith.constant dense<0xFF800000> : vector<2x2xf32>
    %203 = vector.multi_reduction <maximumf>, %202, %cst_48 [1] : vector<2x14x2xf32> to vector<2x2xf32>
    %204 = vector.extract_strided_slice %191 {offsets = [0, 0, 6], sizes = [2, 13, 2], strides = [1, 1, 1]} : vector<2x16x24xf32> to vector<2x13x2xf32>
    %205 = vector.extract_strided_slice %191 {offsets = [0, 1, 8], sizes = [2, 13, 2], strides = [1, 1, 1]} : vector<2x16x24xf32> to vector<2x13x2xf32>
    %206 = arith.addf %204, %205 : vector<2x13x2xf32>
    %207 = vector.extract_strided_slice %191 {offsets = [0, 2, 10], sizes = [2, 13, 2], strides = [1, 1, 1]} : vector<2x16x24xf32> to vector<2x13x2xf32>
    %208 = arith.addf %206, %207 : vector<2x13x2xf32>
    %209 = vector.extract_strided_slice %191 {offsets = [0, 3, 12], sizes = [2, 13, 2], strides = [1, 1, 1]} : vector<2x16x24xf32> to vector<2x13x2xf32>
    %210 = arith.addf %208, %209 : vector<2x13x2xf32>
    %211 = vector.extract_strided_slice %1 {offsets = [1, 6], sizes = [1, 2], strides = [1, 1]} : vector<3x8xf32> to vector<1x2xf32>
    %212 = vector.shape_cast %211 : vector<1x2xf32> to vector<1x1x2xf32>
    %213 = vector.broadcast %212 : vector<1x1x2xf32> to vector<2x13x2xf32>
    %214 = arith.addf %210, %213 : vector<2x13x2xf32>
    %cst_49 = arith.constant 0.000000e+00 : f32
    %215 = vector.broadcast %cst_49 : f32 to vector<2x13x2xf32>
    %216 = arith.maximumf %214, %215 : vector<2x13x2xf32>
    %cst_50 = arith.constant dense<0xFF800000> : vector<2x2xf32>
    %217 = vector.multi_reduction <maximumf>, %216, %cst_50 [1] : vector<2x13x2xf32> to vector<2x2xf32>
    %218 = vector.extract_strided_slice %191 {offsets = [0, 0, 14], sizes = [2, 12, 2], strides = [1, 1, 1]} : vector<2x16x24xf32> to vector<2x12x2xf32>
    %219 = vector.extract_strided_slice %191 {offsets = [0, 1, 16], sizes = [2, 12, 2], strides = [1, 1, 1]} : vector<2x16x24xf32> to vector<2x12x2xf32>
    %220 = arith.addf %218, %219 : vector<2x12x2xf32>
    %221 = vector.extract_strided_slice %191 {offsets = [0, 2, 18], sizes = [2, 12, 2], strides = [1, 1, 1]} : vector<2x16x24xf32> to vector<2x12x2xf32>
    %222 = arith.addf %220, %221 : vector<2x12x2xf32>
    %223 = vector.extract_strided_slice %191 {offsets = [0, 3, 20], sizes = [2, 12, 2], strides = [1, 1, 1]} : vector<2x16x24xf32> to vector<2x12x2xf32>
    %224 = arith.addf %222, %223 : vector<2x12x2xf32>
    %225 = vector.extract_strided_slice %191 {offsets = [0, 4, 22], sizes = [2, 12, 2], strides = [1, 1, 1]} : vector<2x16x24xf32> to vector<2x12x2xf32>
    %226 = arith.addf %224, %225 : vector<2x12x2xf32>
    %227 = vector.extract_strided_slice %1 {offsets = [2, 6], sizes = [1, 2], strides = [1, 1]} : vector<3x8xf32> to vector<1x2xf32>
    %228 = vector.shape_cast %227 : vector<1x2xf32> to vector<1x1x2xf32>
    %229 = vector.broadcast %228 : vector<1x1x2xf32> to vector<2x12x2xf32>
    %230 = arith.addf %226, %229 : vector<2x12x2xf32>
    %cst_51 = arith.constant 0.000000e+00 : f32
    %231 = vector.broadcast %cst_51 : f32 to vector<2x12x2xf32>
    %232 = arith.maximumf %230, %231 : vector<2x12x2xf32>
    %cst_52 = arith.constant dense<0xFF800000> : vector<2x2xf32>
    %233 = vector.multi_reduction <maximumf>, %232, %cst_52 [1] : vector<2x12x2xf32> to vector<2x2xf32>
    %234 = tpu.concatenate %29, %87, %145, %203 in 1 : vector<2x2xf32>, vector<2x2xf32>, vector<2x2xf32>, vector<2x2xf32> -> vector<2x8xf32>
    %235 = tpu.concatenate %43, %101, %159, %217 in 1 : vector<2x2xf32>, vector<2x2xf32>, vector<2x2xf32>, vector<2x2xf32> -> vector<2x8xf32>
    %236 = tpu.concatenate %59, %117, %175, %233 in 1 : vector<2x2xf32>, vector<2x2xf32>, vector<2x2xf32>, vector<2x2xf32> -> vector<2x8xf32>
    %237 = tpu.concatenate %234, %235, %236 in 1 : vector<2x8xf32>, vector<2x8xf32>, vector<2x8xf32> -> vector<2x24xf32>
    %238 = arith.truncf %237 : vector<2x24xf32> to vector<2x24xbf16>
    %c0_53 = arith.constant 0 : index
    %c0_54 = arith.constant 0 : index
    %239 = vector.load %arg4[%c0_53, %c0_54] : memref<24x128xbf16, #tpu.memory_space<vmem>>, vector<24x128xbf16>
    %cst_55 = arith.constant dense<0.000000e+00> : vector<2x128xf32>
    %240 = tpu.matmul %238, %239, %cst_55 {dimension_numbers = #tpu.dot_dimension_numbers<[1], [0], [0], [1], [0, 0, 1, 1], [], []>} : vector<2x24xbf16>, vector<24x128xbf16>, vector<2x128xf32> -> vector<2x128xf32>
    %c0_56 = arith.constant 0 : index
    %c0_57 = arith.constant 0 : index
    %241 = vector.load %arg5[%c0_56, %c0_57] : memref<1x128xf32, #tpu.memory_space<vmem>>, vector<1x128xf32>
    %242 = vector.broadcast %241 : vector<1x128xf32> to vector<2x128xf32>
    %243 = arith.addf %240, %242 : vector<2x128xf32>
    %244 = math.tanh %243 : vector<2x128xf32>
    %c0_58 = arith.constant 0 : index
    %c0_59 = arith.constant 0 : index
    %245 = vector.load %arg6[%c0_58, %c0_59] : memref<2x128xf32, #tpu.memory_space<vmem>>, vector<2x128xf32>
    tpu.vector_store %arg6[%c0_58, %c0_59], %244 {strides = array<i32>} : memref<2x128xf32, #tpu.memory_space<vmem>>, vector<2x128xf32>,
    return
  }
  func.func @transform_0(%arg0: i32) -> (i32, i32, i32, i32) {
    %c0_i32 = arith.constant 0 : i32
    %c0_i32_0 = arith.constant 0 : i32
    %c0_i32_1 = arith.constant 0 : i32
    %c0_i32_2 = arith.constant 0 : i32
    %c0_i32_3 = arith.constant 0 : i32
    return %c0_i32, %c0_i32_0, %c0_i32_1, %c0_i32_2 : i32, i32, i32, i32
  }
  func.func @transform_1(%arg0: i32) -> (i32, i32, i32) {
    %c0_i32 = arith.constant 0 : i32
    %c0_i32_0 = arith.constant 0 : i32
    %c0_i32_1 = arith.constant 0 : i32
    %c0_i32_2 = arith.constant 0 : i32
    return %c0_i32, %c0_i32_0, %c0_i32_1 : i32, i32, i32
  }
  func.func @transform_2(%arg0: i32) -> (i32, i32) {
    %c0_i32 = arith.constant 0 : i32
    %c0_i32_0 = arith.constant 0 : i32
    %c0_i32_1 = arith.constant 0 : i32
    return %c0_i32, %c0_i32_0 : i32, i32
  }
  func.func @transform_3(%arg0: i32) -> (i32, i32) {
    %c0_i32 = arith.constant 0 : i32
    %c0_i32_0 = arith.constant 0 : i32
    %c0_i32_1 = arith.constant 0 : i32
    return %c0_i32, %c0_i32_0 : i32, i32
  }
  func.func @transform_4(%arg0: i32) -> (i32, i32) {
    %c0_i32 = arith.constant 0 : i32
    %c0_i32_0 = arith.constant 0 : i32
    %c0_i32_1 = arith.constant 0 : i32
    return %c0_i32, %c0_i32_0 : i32, i32
  }
  func.func @transform_5(%arg0: i32) -> (i32, i32) {
    %c0_i32 = arith.constant 0 : i32
    %c0_i32_0 = arith.constant 0 : i32
    %c0_i32_1 = arith.constant 0 : i32
    return %c0_i32, %c0_i32_0 : i32, i32
  }
}

</mosaic_0001>

<llo_original>
// kernel: hierarchy_forward.1
$region0: #{hierarchy_forward.1}
  #allocation0 [shape = 'u32[]', space=smem, size = 0x4, offset = 0x4, fixed_abs, tag = 'smem constant byte address 0x4 - core index']
  #allocation1 [shape = 'u32[144,128]{1,0:T(1,128)}', space=vmem, size = 0x12000, scoped, tag = 'internal scratch']
  %s0 = inlined_call_operand.vmem [shape: f32[2,8,16,768], index: 0, kind: input, shape index: {}]
  %s1 = inlined_call_operand.vmem [shape: bf16[8,768,24], index: 1, kind: input, shape index: {}]
  %s2 = inlined_call_operand.vmem [shape: f32[3,8], index: 2, kind: input, shape index: {}]
  %s3 = inlined_call_operand.vmem [shape: bf16[24,128], index: 3, kind: input, shape index: {}]
  %s4 = inlined_call_operand.vmem [shape: f32[1,128], index: 4, kind: input, shape index: {}]
  %s5 = inlined_call_operand.hbm [shape: f32[2,128], index: 5, kind: output, shape index: {}]
  %s6 = sld [smem:[#allocation0]]
  $region30: #{hierarchy_forward.1} parent=0
    _
  %s8 = ssub.s32 1, %s6
  %s9 = scalar_select 0, %s8, %s6
  $region1: #{hierarchy_forward.1} parent=0
    #allocation2 [shape = 'u8[1024]{0}', space=vmem, size = 0x400, scoped, tag = 'output window, operand 0, single buffered']
    #allocation3 [shape = 's32[1]{0}', space=sflag, size = 0x4, scoped, tag = 'scoped memory for hierarchy_forward.1']
    %10 = vsyncpa [#allocation3], 0
    // Predicated region
    $region2: #{hierarchy_forward.1} parent=1 // pred_check
      _
    $region3: #{hierarchy_forward.1} parent=1 // pred_check_branch
      %12 = sbr.rel (0) target = $region5
    $region4: #{hierarchy_forward.1} parent=1 // pred_region
      _
    $region5: #{hierarchy_forward.1} parent=1 // pred_fallthru
      _
    // Predicated region
    $region6: #{hierarchy_forward.1} parent=1 // pred_check
      _
    $region7: #{hierarchy_forward.1} parent=1 // pred_check_branch
      %14 = sbr.rel (0) target = $region9
    $region8: #{hierarchy_forward.1} parent=1 // pred_region
      _
    $region9: #{hierarchy_forward.1} parent=1 // pred_fallthru
      _
    // Predicated region
    $region10: #{hierarchy_forward.1} parent=1 // pred_check
      _
    $region11: #{hierarchy_forward.1} parent=1 // pred_check_branch
      %16 = sbr.rel (0) target = $region13
    $region12: #{hierarchy_forward.1} parent=1 // pred_region
      _
    $region13: #{hierarchy_forward.1} parent=1 // pred_fallthru
      _
    // Predicated region
    $region14: #{hierarchy_forward.1} parent=1 // pred_check
      _
    $region15: #{hierarchy_forward.1} parent=1 // pred_check_branch
      %18 = sbr.rel (0) target = $region17
    $region16: #{hierarchy_forward.1} parent=1 // pred_region
      _
    $region17: #{hierarchy_forward.1} parent=1 // pred_fallthru
      _
    // Predicated region
    $region18: #{hierarchy_forward.1} parent=1 // pred_check
      _
    $region19: #{hierarchy_forward.1} parent=1 // pred_check_branch
      %20 = sbr.rel (0) target = $region21
    $region20: #{hierarchy_forward.1} parent=1 // pred_region
      _
    $region21: #{hierarchy_forward.1} parent=1 // pred_fallthru
      _
    %v22 = vld [vmem:[%s0] sm:$0xff]
    %v23 = vld [vmem:[%s0 + $0x8] sm:$0xff]
    %v24 = vld [vmem:[%s0 + $0x10] sm:$0xff]
    %v25 = vld [vmem:[%s0 + $0x18] sm:$0xff]
    %v26 = vld [vmem:[%s0 + $0x20] sm:$0xff]
    %v27 = vld [vmem:[%s0 + $0x28] sm:$0xff]
    %v28 = vld [vmem:[%s0 + $0x30] sm:$0xff]
    %v29 = vld [vmem:[%s0 + $0x38] sm:$0xff]
    %v30 = vld [vmem:[%s0 + $0x40] sm:$0xff]
    %v31 = vld [vmem:[%s0 + $0x48] sm:$0xff]
    %v32 = vld [vmem:[%s0 + $0x50] sm:$0xff]
    %v33 = vld [vmem:[%s0 + $0x58] sm:$0xff]
    %v34 = vld [vmem:[%s0 + $0x60] sm:$0xff]
    %v35 = vld [vmem:[%s0 + $0x68] sm:$0xff]
    %v36 = vld [vmem:[%s0 + $0x70] sm:$0xff]
    %v37 = vld [vmem:[%s0 + $0x78] sm:$0xff]
    %v38 = vld [vmem:[%s0 + $0x80] sm:$0xff]
    %v39 = vld [vmem:[%s0 + $0x88] sm:$0xff]
    %v40 = vld [vmem:[%s0 + $0x90] sm:$0xff]
    %v41 = vld [vmem:[%s0 + $0x98] sm:$0xff]
    %v42 = vld [vmem:[%s0 + $0xa0] sm:$0xff]
    %v43 = vld [vmem:[%s0 + $0xa8] sm:$0xff]
    %v44 = vld [vmem:[%s0 + $0xb0] sm:$0xff]
    %v45 = vld [vmem:[%s0 + $0xb8] sm:$0xff]
    %v46 = vld [vmem:[%s0 + $0xc0] sm:$0xff]
    %v47 = vld [vmem:[%s0 + $0xc8] sm:$0xff]
    %v48 = vld [vmem:[%s0 + $0xd0] sm:$0xff]
    %v49 = vld [vmem:[%s0 + $0xd8] sm:$0xff]
    %v50 = vld [vmem:[%s0 + $0xe0] sm:$0xff]
    %v51 = vld [vmem:[%s0 + $0xe8] sm:$0xff]
    %v52 = vld [vmem:[%s0 + $0xf0] sm:$0xff]
    %v53 = vld [vmem:[%s0 + $0xf8] sm:$0xff]
    %v54 = vld [vmem:[%s0 + $0x100] sm:$0xff]
    %v55 = vld [vmem:[%s0 + $0x108] sm:$0xff]
    %v56 = vld [vmem:[%s0 + $0x110] sm:$0xff]
    %v57 = vld [vmem:[%s0 + $0x118] sm:$0xff]
    %v58 = vld [vmem:[%s0 + $0x120] sm:$0xff]
    %v59 = vld [vmem:[%s0 + $0x128] sm:$0xff]
    %v60 = vld [vmem:[%s0 + $0x130] sm:$0xff]
    %v61 = vld [vmem:[%s0 + $0x138] sm:$0xff]
    %v62 = vld [vmem:[%s0 + $0x140] sm:$0xff]
    %v63 = vld [vmem:[%s0 + $0x148] sm:$0xff]
    %v64 = vld [vmem:[%s0 + $0x150] sm:$0xff]
    %v65 = vld [vmem:[%s0 + $0x158] sm:$0xff]
    %v66 = vld [vmem:[%s0 + $0x160] sm:$0xff]
    %v67 = vld [vmem:[%s0 + $0x168] sm:$0xff]
    %v68 = vld [vmem:[%s0 + $0x170] sm:$0xff]
    %v69 = vld [vmem:[%s0 + $0x178] sm:$0xff]
    %v70 = vld [vmem:[%s0 + $0x180] sm:$0xff]
    %v71 = vld [vmem:[%s0 + $0x188] sm:$0xff]
    %v72 = vld [vmem:[%s0 + $0x190] sm:$0xff]
    %v73 = vld [vmem:[%s0 + $0x198] sm:$0xff]
    %v74 = vld [vmem:[%s0 + $0x1a0] sm:$0xff]
    %v75 = vld [vmem:[%s0 + $0x1a8] sm:$0xff]
    %v76 = vld [vmem:[%s0 + $0x1b0] sm:$0xff]
    %v77 = vld [vmem:[%s0 + $0x1b8] sm:$0xff]
    %v78 = vld [vmem:[%s0 + $0x1c0] sm:$0xff]
    %v79 = vld [vmem:[%s0 + $0x1c8] sm:$0xff]
    %v80 = vld [vmem:[%s0 + $0x1d0] sm:$0xff]
    %v81 = vld [vmem:[%s0 + $0x1d8] sm:$0xff]
    %v82 = vld [vmem:[%s0 + $0x1e0] sm:$0xff]
    %v83 = vld [vmem:[%s0 + $0x1e8] sm:$0xff]
    %v84 = vld [vmem:[%s0 + $0x1f0] sm:$0xff]
    %v85 = vld [vmem:[%s0 + $0x1f8] sm:$0xff]
    %v86 = vld [vmem:[%s0 + $0x200] sm:$0xff]
    %v87 = vld [vmem:[%s0 + $0x208] sm:$0xff]
    %v88 = vld [vmem:[%s0 + $0x210] sm:$0xff]
    %v89 = vld [vmem:[%s0 + $0x218] sm:$0xff]
    %v90 = vld [vmem:[%s0 + $0x220] sm:$0xff]
    %v91 = vld [vmem:[%s0 + $0x228] sm:$0xff]
    %v92 = vld [vmem:[%s0 + $0x230] sm:$0xff]
    %v93 = vld [vmem:[%s0 + $0x238] sm:$0xff]
    %v94 = vld [vmem:[%s0 + $0x240] sm:$0xff]
    %v95 = vld [vmem:[%s0 + $0x248] sm:$0xff]
    %v96 = vld [vmem:[%s0 + $0x250] sm:$0xff]
    %v97 = vld [vmem:[%s0 + $0x258] sm:$0xff]
    %v98 = vld [vmem:[%s0 + $0x260] sm:$0xff]
    %v99 = vld [vmem:[%s0 + $0x268] sm:$0xff]
    %v100 = vld [vmem:[%s0 + $0x270] sm:$0xff]
    %v101 = vld [vmem:[%s0 + $0x278] sm:$0xff]
    %v102 = vld [vmem:[%s0 + $0x280] sm:$0xff]
    %v103 = vld [vmem:[%s0 + $0x288] sm:$0xff]
    %v104 = vld [vmem:[%s0 + $0x290] sm:$0xff]
    %v105 = vld [vmem:[%s0 + $0x298] sm:$0xff]
    %v106 = vld [vmem:[%s0 + $0x2a0] sm:$0xff]
    %v107 = vld [vmem:[%s0 + $0x2a8] sm:$0xff]
    %v108 = vld [vmem:[%s0 + $0x2b0] sm:$0xff]
    %v109 = vld [vmem:[%s0 + $0x2b8] sm:$0xff]
    %v110 = vld [vmem:[%s0 + $0x2c0] sm:$0xff]
    %v111 = vld [vmem:[%s0 + $0x2c8] sm:$0xff]
    %v112 = vld [vmem:[%s0 + $0x2d0] sm:$0xff]
    %v113 = vld [vmem:[%s0 + $0x2d8] sm:$0xff]
    %v114 = vld [vmem:[%s0 + $0x2e0] sm:$0xff]
    %v115 = vld [vmem:[%s0 + $0x2e8] sm:$0xff]
    %v116 = vld [vmem:[%s0 + $0x2f0] sm:$0xff]
    %v117 = vld [vmem:[%s0 + $0x2f8] sm:$0xff]
    %v118 = vld [vmem:[%s0 + $0x300] sm:$0xff]
    %v119 = vld [vmem:[%s0 + $0x308] sm:$0xff]
    %v120 = vld [vmem:[%s0 + $0x310] sm:$0xff]
    %v121 = vld [vmem:[%s0 + $0x318] sm:$0xff]
    %v122 = vld [vmem:[%s0 + $0x320] sm:$0xff]
    %v123 = vld [vmem:[%s0 + $0x328] sm:$0xff]
    %v124 = vld [vmem:[%s0 + $0x330] sm:$0xff]
    %v125 = vld [vmem:[%s0 + $0x338] sm:$0xff]
    %v126 = vld [vmem:[%s0 + $0x340] sm:$0xff]
    %v127 = vld [vmem:[%s0 + $0x348] sm:$0xff]
    %v128 = vld [vmem:[%s0 + $0x350] sm:$0xff]
    %v129 = vld [vmem:[%s0 + $0x358] sm:$0xff]
    %v130 = vld [vmem:[%s0 + $0x360] sm:$0xff]
    %v131 = vld [vmem:[%s0 + $0x368] sm:$0xff]
    %v132 = vld [vmem:[%s0 + $0x370] sm:$0xff]
    %v133 = vld [vmem:[%s0 + $0x378] sm:$0xff]
    %v134 = vld [vmem:[%s0 + $0x380] sm:$0xff]
    %v135 = vld [vmem:[%s0 + $0x388] sm:$0xff]
    %v136 = vld [vmem:[%s0 + $0x390] sm:$0xff]
    %v137 = vld [vmem:[%s0 + $0x398] sm:$0xff]
    %v138 = vld [vmem:[%s0 + $0x3a0] sm:$0xff]
    %v139 = vld [vmem:[%s0 + $0x3a8] sm:$0xff]
    %v140 = vld [vmem:[%s0 + $0x3b0] sm:$0xff]
    %v141 = vld [vmem:[%s0 + $0x3b8] sm:$0xff]
    %v142 = vld [vmem:[%s0 + $0x3c0] sm:$0xff]
    %v143 = vld [vmem:[%s0 + $0x3c8] sm:$0xff]
    %v144 = vld [vmem:[%s0 + $0x3d0] sm:$0xff]
    %v145 = vld [vmem:[%s0 + $0x3d8] sm:$0xff]
    %v146 = vld [vmem:[%s0 + $0x3e0] sm:$0xff]
    %v147 = vld [vmem:[%s0 + $0x3e8] sm:$0xff]
    %v148 = vld [vmem:[%s0 + $0x3f0] sm:$0xff]
    %v149 = vld [vmem:[%s0 + $0x3f8] sm:$0xff]
    %v150 = vld [vmem:[%s0 + $0x400] sm:$0xff]
    %v151 = vld [vmem:[%s0 + $0x408] sm:$0xff]
    %v152 = vld [vmem:[%s0 + $0x410] sm:$0xff]
    %v153 = vld [vmem:[%s0 + $0x418] sm:$0xff]
    %v154 = vld [vmem:[%s0 + $0x420] sm:$0xff]
    %v155 = vld [vmem:[%s0 + $0x428] sm:$0xff]
    %v156 = vld [vmem:[%s0 + $0x430] sm:$0xff]
    %v157 = vld [vmem:[%s0 + $0x438] sm:$0xff]
    %v158 = vld [vmem:[%s0 + $0x440] sm:$0xff]
    %v159 = vld [vmem:[%s0 + $0x448] sm:$0xff]
    %v160 = vld [vmem:[%s0 + $0x450] sm:$0xff]
    %v161 = vld [vmem:[%s0 + $0x458] sm:$0xff]
    %v162 = vld [vmem:[%s0 + $0x460] sm:$0xff]
    %v163 = vld [vmem:[%s0 + $0x468] sm:$0xff]
    %v164 = vld [vmem:[%s0 + $0x470] sm:$0xff]
    %v165 = vld [vmem:[%s0 + $0x478] sm:$0xff]
    %v166 = vld [vmem:[%s0 + $0x480] sm:$0xff]
    %v167 = vld [vmem:[%s0 + $0x488] sm:$0xff]
    %v168 = vld [vmem:[%s0 + $0x490] sm:$0xff]
    %v169 = vld [vmem:[%s0 + $0x498] sm:$0xff]
    %v170 = vld [vmem:[%s0 + $0x4a0] sm:$0xff]
    %v171 = vld [vmem:[%s0 + $0x4a8] sm:$0xff]
    %v172 = vld [vmem:[%s0 + $0x4b0] sm:$0xff]
    %v173 = vld [vmem:[%s0 + $0x4b8] sm:$0xff]
    %v174 = vld [vmem:[%s0 + $0x4c0] sm:$0xff]
    %v175 = vld [vmem:[%s0 + $0x4c8] sm:$0xff]
    %v176 = vld [vmem:[%s0 + $0x4d0] sm:$0xff]
    %v177 = vld [vmem:[%s0 + $0x4d8] sm:$0xff]
    %v178 = vld [vmem:[%s0 + $0x4e0] sm:$0xff]
    %v179 = vld [vmem:[%s0 + $0x4e8] sm:$0xff]
    %v180 = vld [vmem:[%s0 + $0x4f0] sm:$0xff]
    %v181 = vld [vmem:[%s0 + $0x4f8] sm:$0xff]
    %v182 = vld [vmem:[%s0 + $0x500] sm:$0xff]
    %v183 = vld [vmem:[%s0 + $0x508] sm:$0xff]
    %v184 = vld [vmem:[%s0 + $0x510] sm:$0xff]
    %v185 = vld [vmem:[%s0 + $0x518] sm:$0xff]
    %v186 = vld [vmem:[%s0 + $0x520] sm:$0xff]
    %v187 = vld [vmem:[%s0 + $0x528] sm:$0xff]
    %v188 = vld [vmem:[%s0 + $0x530] sm:$0xff]
    %v189 = vld [vmem:[%s0 + $0x538] sm:$0xff]
    %v190 = vld [vmem:[%s0 + $0x540] sm:$0xff]
    %v191 = vld [vmem:[%s0 + $0x548] sm:$0xff]
    %v192 = vld [vmem:[%s0 + $0x550] sm:$0xff]
    %v193 = vld [vmem:[%s0 + $0x558] sm:$0xff]
    %v194 = vld [vmem:[%s0 + $0x560] sm:$0xff]
    %v195 = vld [vmem:[%s0 + $0x568] sm:$0xff]
    %v196 = vld [vmem:[%s0 + $0x570] sm:$0xff]
    %v197 = vld [vmem:[%s0 + $0x578] sm:$0xff]
    %v198 = vld [vmem:[%s0 + $0x580] sm:$0xff]
    %v199 = vld [vmem:[%s0 + $0x588] sm:$0xff]
    %v200 = vld [vmem:[%s0 + $0x590] sm:$0xff]
    %v201 = vld [vmem:[%s0 + $0x598] sm:$0xff]
    %v202 = vld [vmem:[%s0 + $0x5a0] sm:$0xff]
    %v203 = vld [vmem:[%s0 + $0x5a8] sm:$0xff]
    %v204 = vld [vmem:[%s0 + $0x5b0] sm:$0xff]
    %v205 = vld [vmem:[%s0 + $0x5b8] sm:$0xff]
    %v206 = vld [vmem:[%s0 + $0x5c0] sm:$0xff]
    %v207 = vld [vmem:[%s0 + $0x5c8] sm:$0xff]
    %v208 = vld [vmem:[%s0 + $0x5d0] sm:$0xff]
    %v209 = vld [vmem:[%s0 + $0x5d8] sm:$0xff]
    %v210 = vld [vmem:[%s0 + $0x5e0] sm:$0xff]
    %v211 = vld [vmem:[%s0 + $0x5e8] sm:$0xff]
    %v212 = vld [vmem:[%s0 + $0x5f0] sm:$0xff]
    %v213 = vld [vmem:[%s0 + $0x5f8] sm:$0xff]
    %v214 = vld [vmem:[%s2] sm:$0x7]
    %v215 = vpack.c.bf16 %v28, %v22
    %v216 = vpack.c.bf16 %v29, %v23
    %v217 = vpack.c.bf16 %v30, %v24
    %v218 = vpack.c.bf16 %v31, %v25
    %v219 = vpack.c.bf16 %v32, %v26
    %v220 = vpack.c.bf16 %v33, %v27
    %v221 = vpack.c.bf16 %v124, %v118
    %v222 = vpack.c.bf16 %v125, %v119
    %v223 = vpack.c.bf16 %v126, %v120
    %v224 = vpack.c.bf16 %v127, %v121
    %v225 = vpack.c.bf16 %v128, %v122
    %v226 = vpack.c.bf16 %v129, %v123
    %v227 = vld [vmem:[%s1] sm:$0xf]
    %v228 = vld [vmem:[%s1 + $0x4] sm:$0xf]
    %v229 = vld [vmem:[%s1 + $0x8] sm:$0xf]
    %v230 = vld [vmem:[%s1 + $0xc] sm:$0xf]
    %v231 = vld [vmem:[%s1 + $0x10] sm:$0xf]
    %v232 = vld [vmem:[%s1 + $0x14] sm:$0xf]
    %v233 = vld [vmem:[%s1 + $0x18] sm:$0xf]
    %v234 = vld [vmem:[%s1 + $0x1c] sm:$0xf]
    %v235 = vld [vmem:[%s1 + $0x20] sm:$0xf]
    %v236 = vld [vmem:[%s1 + $0x24] sm:$0xf]
    %v237 = vld [vmem:[%s1 + $0x28] sm:$0xf]
    %v238 = vld [vmem:[%s1 + $0x2c] sm:$0xf]
    %v239 = vld [vmem:[%s1 + $0x30] sm:$0xf]
    %v240 = vld [vmem:[%s1 + $0x34] sm:$0xf]
    %v241 = vld [vmem:[%s1 + $0x38] sm:$0xf]
    %v242 = vld [vmem:[%s1 + $0x3c] sm:$0xf]
    %v243 = vld [vmem:[%s1 + $0x40] sm:$0xf]
    %v244 = vld [vmem:[%s1 + $0x44] sm:$0xf]
    %v245 = vld [vmem:[%s1 + $0x48] sm:$0xf]
    %v246 = vld [vmem:[%s1 + $0x4c] sm:$0xf]
    %v247 = vld [vmem:[%s1 + $0x50] sm:$0xf]
    %v248 = vld [vmem:[%s1 + $0x54] sm:$0xf]
    %v249 = vld [vmem:[%s1 + $0x58] sm:$0xf]
    %v250 = vld [vmem:[%s1 + $0x5c] sm:$0xf]
    %v251 = vld [vmem:[%s1 + $0x60] sm:$0xf]
    %v252 = vld [vmem:[%s1 + $0x64] sm:$0xf]
    %v253 = vld [vmem:[%s1 + $0x68] sm:$0xf]
    %v254 = vld [vmem:[%s1 + $0x6c] sm:$0xf]
    %v255 = vld [vmem:[%s1 + $0x70] sm:$0xf]
    %v256 = vld [vmem:[%s1 + $0x74] sm:$0xf]
    %v257 = vld [vmem:[%s1 + $0x78] sm:$0xf]
    %v258 = vld [vmem:[%s1 + $0x7c] sm:$0xf]
    %v259 = vld [vmem:[%s1 + $0x80] sm:$0xf]
    %v260 = vld [vmem:[%s1 + $0x84] sm:$0xf]
    %v261 = vld [vmem:[%s1 + $0x88] sm:$0xf]
    %v262 = vld [vmem:[%s1 + $0x8c] sm:$0xf]
    %v263 = vld [vmem:[%s1 + $0x90] sm:$0xf]
    %v264 = vld [vmem:[%s1 + $0x94] sm:$0xf]
    %v265 = vld [vmem:[%s1 + $0x98] sm:$0xf]
    %v266 = vld [vmem:[%s1 + $0x9c] sm:$0xf]
    %v267 = vld [vmem:[%s1 + $0xa0] sm:$0xf]
    %v268 = vld [vmem:[%s1 + $0xa4] sm:$0xf]
    %v269 = vld [vmem:[%s1 + $0xa8] sm:$0xf]
    %v270 = vld [vmem:[%s1 + $0xac] sm:$0xf]
    %v271 = vld [vmem:[%s1 + $0xb0] sm:$0xf]
    %v272 = vld [vmem:[%s1 + $0xb4] sm:$0xf]
    %v273 = vld [vmem:[%s1 + $0xb8] sm:$0xf]
    %v274 = vld [vmem:[%s1 + $0xbc] sm:$0xf]
    %v275 = vld [vmem:[%s1 + $0xc0] sm:$0xf]
    %v276 = vld [vmem:[%s1 + $0xc4] sm:$0xf]
    %v277 = vld [vmem:[%s1 + $0xc8] sm:$0xf]
    %v278 = vld [vmem:[%s1 + $0xcc] sm:$0xf]
    %v279 = vld [vmem:[%s1 + $0xd0] sm:$0xf]
    %v280 = vld [vmem:[%s1 + $0xd4] sm:$0xf]
    %v281 = vld [vmem:[%s1 + $0xd8] sm:$0xf]
    %v282 = vld [vmem:[%s1 + $0xdc] sm:$0xf]
    %v283 = vld [vmem:[%s1 + $0xe0] sm:$0xf]
    %v284 = vld [vmem:[%s1 + $0xe4] sm:$0xf]
    %v285 = vld [vmem:[%s1 + $0xe8] sm:$0xf]
    %v286 = vld [vmem:[%s1 + $0xec] sm:$0xf]
    %v287 = vld [vmem:[%s1 + $0xf0] sm:$0xf]
    %v288 = vld [vmem:[%s1 + $0xf4] sm:$0xf]
    %v289 = vld [vmem:[%s1 + $0xf8] sm:$0xf]
    %v290 = vld [vmem:[%s1 + $0xfc] sm:$0xf]
    %v291 = vld [vmem:[%s1 + $0x100] sm:$0xf]
    %v292 = vld [vmem:[%s1 + $0x104] sm:$0xf]
    %v293 = vld [vmem:[%s1 + $0x108] sm:$0xf]
    %v294 = vld [vmem:[%s1 + $0x10c] sm:$0xf]
    %v295 = vld [vmem:[%s1 + $0x110] sm:$0xf]
    %v296 = vld [vmem:[%s1 + $0x114] sm:$0xf]
    %v297 = vld [vmem:[%s1 + $0x118] sm:$0xf]
    %v298 = vld [vmem:[%s1 + $0x11c] sm:$0xf]
    %v299 = vld [vmem:[%s1 + $0x120] sm:$0xf]
    %v300 = vld [vmem:[%s1 + $0x124] sm:$0xf]
    %v301 = vld [vmem:[%s1 + $0x128] sm:$0xf]
    %v302 = vld [vmem:[%s1 + $0x12c] sm:$0xf]
    %v303 = vld [vmem:[%s1 + $0x130] sm:$0xf]
    %v304 = vld [vmem:[%s1 + $0x134] sm:$0xf]
    %v305 = vld [vmem:[%s1 + $0x138] sm:$0xf]
    %v306 = vld [vmem:[%s1 + $0x13c] sm:$0xf]
    %v307 = vld [vmem:[%s1 + $0x140] sm:$0xf]
    %v308 = vld [vmem:[%s1 + $0x144] sm:$0xf]
    %v309 = vld [vmem:[%s1 + $0x148] sm:$0xf]
    %v310 = vld [vmem:[%s1 + $0x14c] sm:$0xf]
    %v311 = vld [vmem:[%s1 + $0x150] sm:$0xf]
    %v312 = vld [vmem:[%s1 + $0x154] sm:$0xf]
    %v313 = vld [vmem:[%s1 + $0x158] sm:$0xf]
    %v314 = vld [vmem:[%s1 + $0x15c] sm:$0xf]
    %v315 = vld [vmem:[%s1 + $0x160] sm:$0xf]
    %v316 = vld [vmem:[%s1 + $0x164] sm:$0xf]
    %v317 = vld [vmem:[%s1 + $0x168] sm:$0xf]
    %v318 = vld [vmem:[%s1 + $0x16c] sm:$0xf]
    %v319 = vld [vmem:[%s1 + $0x170] sm:$0xf]
    %v320 = vld [vmem:[%s1 + $0x174] sm:$0xf]
    %v321 = vld [vmem:[%s1 + $0x178] sm:$0xf]
    %v322 = vld [vmem:[%s1 + $0x17c] sm:$0xf]
    %v323 = vpack.c.bf16 %v40, %v34
    %v324 = vpack.c.bf16 %v41, %v35
    %v325 = vpack.c.bf16 %v42, %v36
    %v326 = vpack.c.bf16 %v43, %v37
    %v327 = vpack.c.bf16 %v44, %v38
    %v328 = vpack.c.bf16 %v45, %v39
    %v329 = vpack.c.bf16 %v136, %v130
    %v330 = vpack.c.bf16 %v137, %v131
    %v331 = vpack.c.bf16 %v138, %v132
    %v332 = vpack.c.bf16 %v139, %v133
    %v333 = vpack.c.bf16 %v140, %v134
    %v334 = vpack.c.bf16 %v141, %v135
    %s335 = scalar_lea.vmem %s1, 384
    %v336 = vld [vmem:[%s335] sm:$0xf]
    %v337 = vld [vmem:[%s335 + $0x4] sm:$0xf]
    %v338 = vld [vmem:[%s335 + $0x8] sm:$0xf]
    %v339 = vld [vmem:[%s335 + $0xc] sm:$0xf]
    %v340 = vld [vmem:[%s335 + $0x10] sm:$0xf]
    %v341 = vld [vmem:[%s335 + $0x14] sm:$0xf]
    %v342 = vld [vmem:[%s335 + $0x18] sm:$0xf]
    %v343 = vld [vmem:[%s335 + $0x1c] sm:$0xf]
    %v344 = vld [vmem:[%s335 + $0x20] sm:$0xf]
    %v345 = vld [vmem:[%s335 + $0x24] sm:$0xf]
    %v346 = vld [vmem:[%s335 + $0x28] sm:$0xf]
    %v347 = vld [vmem:[%s335 + $0x2c] sm:$0xf]
    %v348 = vld [vmem:[%s335 + $0x30] sm:$0xf]
    %v349 = vld [vmem:[%s335 + $0x34] sm:$0xf]
    %v350 = vld [vmem:[%s335 + $0x38] sm:$0xf]
    %v351 = vld [vmem:[%s335 + $0x3c] sm:$0xf]
    %v352 = vld [vmem:[%s335 + $0x40] sm:$0xf]
    %v353 = vld [vmem:[%s335 + $0x44] sm:$0xf]
    %v354 = vld [vmem:[%s335 + $0x48] sm:$0xf]
    %v355 = vld [vmem:[%s335 + $0x4c] sm:$0xf]
    %v356 = vld [vmem:[%s335 + $0x50] sm:$0xf]
    %v357 = vld [vmem:[%s335 + $0x54] sm:$0xf]
    %v358 = vld [vmem:[%s335 + $0x58] sm:$0xf]
    %v359 = vld [vmem:[%s335 + $0x5c] sm:$0xf]
    %v360 = vld [vmem:[%s335 + $0x60] sm:$0xf]
    %v361 = vld [vmem:[%s335 + $0x64] sm:$0xf]
    %v362 = vld [vmem:[%s335 + $0x68] sm:$0xf]
    %v363 = vld [vmem:[%s335 + $0x6c] sm:$0xf]
    %v364 = vld [vmem:[%s335 + $0x70] sm:$0xf]
    %v365 = vld [vmem:[%s335 + $0x74] sm:$0xf]
    %v366 = vld [vmem:[%s335 + $0x78] sm:$0xf]
    %v367 = vld [vmem:[%s335 + $0x7c] sm:$0xf]
    %v368 = vld [vmem:[%s335 + $0x80] sm:$0xf]
    %v369 = vld [vmem:[%s335 + $0x84] sm:$0xf]
    %v370 = vld [vmem:[%s335 + $0x88] sm:$0xf]
    %v371 = vld [vmem:[%s335 + $0x8c] sm:$0xf]
    %v372 = vld [vmem:[%s335 + $0x90] sm:$0xf]
    %v373 = vld [vmem:[%s335 + $0x94] sm:$0xf]
    %v374 = vld [vmem:[%s335 + $0x98] sm:$0xf]
    %v375 = vld [vmem:[%s335 + $0x9c] sm:$0xf]
    %v376 = vld [vmem:[%s335 + $0xa0] sm:$0xf]
    %v377 = vld [vmem:[%s335 + $0xa4] sm:$0xf]
    %v378 = vld [vmem:[%s335 + $0xa8] sm:$0xf]
    %v379 = vld [vmem:[%s335 + $0xac] sm:$0xf]
    %v380 = vld [vmem:[%s335 + $0xb0] sm:$0xf]
    %v381 = vld [vmem:[%s335 + $0xb4] sm:$0xf]
    %v382 = vld [vmem:[%s335 + $0xb8] sm:$0xf]
    %v383 = vld [vmem:[%s335 + $0xbc] sm:$0xf]
    %v384 = vld [vmem:[%s335 + $0xc0] sm:$0xf]
    %v385 = vld [vmem:[%s335 + $0xc4] sm:$0xf]
    %v386 = vld [vmem:[%s335 + $0xc8] sm:$0xf]
    %v387 = vld [vmem:[%s335 + $0xcc] sm:$0xf]
    %v388 = vld [vmem:[%s335 + $0xd0] sm:$0xf]
    %v389 = vld [vmem:[%s335 + $0xd4] sm:$0xf]
    %v390 = vld [vmem:[%s335 + $0xd8] sm:$0xf]
    %v391 = vld [vmem:[%s335 + $0xdc] sm:$0xf]
    %v392 = vld [vmem:[%s335 + $0xe0] sm:$0xf]
    %v393 = vld [vmem:[%s335 + $0xe4] sm:$0xf]
    %v394 = vld [vmem:[%s335 + $0xe8] sm:$0xf]
    %v395 = vld [vmem:[%s335 + $0xec] sm:$0xf]
    %v396 = vld [vmem:[%s335 + $0xf0] sm:$0xf]
    %v397 = vld [vmem:[%s335 + $0xf4] sm:$0xf]
    %v398 = vld [vmem:[%s335 + $0xf8] sm:$0xf]
    %v399 = vld [vmem:[%s335 + $0xfc] sm:$0xf]
    %v400 = vld [vmem:[%s335 + $0x100] sm:$0xf]
    %v401 = vld [vmem:[%s335 + $0x104] sm:$0xf]
    %v402 = vld [vmem:[%s335 + $0x108] sm:$0xf]
    %v403 = vld [vmem:[%s335 + $0x10c] sm:$0xf]
    %v404 = vld [vmem:[%s335 + $0x110] sm:$0xf]
    %v405 = vld [vmem:[%s335 + $0x114] sm:$0xf]
    %v406 = vld [vmem:[%s335 + $0x118] sm:$0xf]
    %v407 = vld [vmem:[%s335 + $0x11c] sm:$0xf]
    %v408 = vld [vmem:[%s335 + $0x120] sm:$0xf]
    %v409 = vld [vmem:[%s335 + $0x124] sm:$0xf]
    %v410 = vld [vmem:[%s335 + $0x128] sm:$0xf]
    %v411 = vld [vmem:[%s335 + $0x12c] sm:$0xf]
    %v412 = vld [vmem:[%s335 + $0x130] sm:$0xf]
    %v413 = vld [vmem:[%s335 + $0x134] sm:$0xf]
    %v414 = vld [vmem:[%s335 + $0x138] sm:$0xf]
    %v415 = vld [vmem:[%s335 + $0x13c] sm:$0xf]
    %v416 = vld [vmem:[%s335 + $0x140] sm:$0xf]
    %v417 = vld [vmem:[%s335 + $0x144] sm:$0xf]
    %v418 = vld [vmem:[%s335 + $0x148] sm:$0xf]
    %v419 = vld [vmem:[%s335 + $0x14c] sm:$0xf]
    %v420 = vld [vmem:[%s335 + $0x150] sm:$0xf]
    %v421 = vld [vmem:[%s335 + $0x154] sm:$0xf]
    %v422 = vld [vmem:[%s335 + $0x158] sm:$0xf]
    %v423 = vld [vmem:[%s335 + $0x15c] sm:$0xf]
    %v424 = vld [vmem:[%s335 + $0x160] sm:$0xf]
    %v425 = vld [vmem:[%s335 + $0x164] sm:$0xf]
    %v426 = vld [vmem:[%s335 + $0x168] sm:$0xf]
    %v427 = vld [vmem:[%s335 + $0x16c] sm:$0xf]
    %v428 = vld [vmem:[%s335 + $0x170] sm:$0xf]
    %v429 = vld [vmem:[%s335 + $0x174] sm:$0xf]
    %v430 = vld [vmem:[%s335 + $0x178] sm:$0xf]
    %v431 = vld [vmem:[%s335 + $0x17c] sm:$0xf]
    %v528 = vunpack.c.l.b16 %v336
    %v529 = vunpack.c.l.b16 %v337
    %v530 = vunpack.c.l.b16 %v338
    %v531 = vunpack.c.l.b16 %v339
    %v532 = vunpack.c.l.b16 %v340
    %v533 = vunpack.c.l.b16 %v341
    %v534 = vunpack.c.l.b16 %v342
    %v535 = vunpack.c.l.b16 %v343
    %v536 = vunpack.c.l.b16 %v344
    %v537 = vunpack.c.l.b16 %v345
    %v538 = vunpack.c.l.b16 %v346
    %v539 = vunpack.c.l.b16 %v347
    %v540 = vunpack.c.l.b16 %v348
    %v541 = vunpack.c.l.b16 %v349
    %v542 = vunpack.c.l.b16 %v350
    %v543 = vunpack.c.l.b16 %v351
    %v544 = vunpack.c.l.b16 %v352
    %v545 = vunpack.c.l.b16 %v353
    %v546 = vunpack.c.l.b16 %v354
    %v547 = vunpack.c.l.b16 %v355
    %v548 = vunpack.c.l.b16 %v356
    %v549 = vunpack.c.l.b16 %v357
    %v550 = vunpack.c.l.b16 %v358
    %v551 = vunpack.c.l.b16 %v359
    %v552 = vunpack.c.l.b16 %v360
    %v553 = vunpack.c.l.b16 %v361
    %v554 = vunpack.c.l.b16 %v362
    %v555 = vunpack.c.l.b16 %v363
    %v556 = vunpack.c.l.b16 %v364
    %v557 = vunpack.c.l.b16 %v365
    %v558 = vunpack.c.l.b16 %v366
    %v559 = vunpack.c.l.b16 %v367
    %v560 = vunpack.c.l.b16 %v368
    %v561 = vunpack.c.l.b16 %v369
    %v562 = vunpack.c.l.b16 %v370
    %v563 = vunpack.c.l.b16 %v371
    %v564 = vunpack.c.l.b16 %v372
    %v565 = vunpack.c.l.b16 %v373
    %v566 = vunpack.c.l.b16 %v374
    %v567 = vunpack.c.l.b16 %v375
    %v568 = vunpack.c.l.b16 %v376
    %v569 = vunpack.c.l.b16 %v377
    %v570 = vunpack.c.l.b16 %v378
    %v571 = vunpack.c.l.b16 %v379
    %v572 = vunpack.c.l.b16 %v380
    %v573 = vunpack.c.l.b16 %v381
    %v574 = vunpack.c.l.b16 %v382
    %v575 = vunpack.c.l.b16 %v383
    %v576 = vunpack.c.l.b16 %v384
    %v577 = vunpack.c.l.b16 %v385
    %v578 = vunpack.c.l.b16 %v386
    %v579 = vunpack.c.l.b16 %v387
    %v580 = vunpack.c.l.b16 %v388
    %v581 = vunpack.c.l.b16 %v389
    %v582 = vunpack.c.l.b16 %v390
    %v583 = vunpack.c.l.b16 %v391
    %v584 = vunpack.c.l.b16 %v392
    %v585 = vunpack.c.l.b16 %v393
    %v586 = vunpack.c.l.b16 %v394
    %v587 = vunpack.c.l.b16 %v395
    %v588 = vunpack.c.l.b16 %v396
    %v589 = vunpack.c.l.b16 %v397
    %v590 = vunpack.c.l.b16 %v398
    %v591 = vunpack.c.l.b16 %v399
    %v592 = vunpack.c.l.b16 %v400
    %v593 = vunpack.c.l.b16 %v401
    %v594 = vunpack.c.l.b16 %v402
    %v595 = vunpack.c.l.b16 %v403
    %v596 = vunpack.c.l.b16 %v404
    %v597 = vunpack.c.l.b16 %v405
    %v598 = vunpack.c.l.b16 %v406
    %v599 = vunpack.c.l.b16 %v407
    %v600 = vunpack.c.l.b16 %v408
    %v601 = vunpack.c.l.b16 %v409
    %v602 = vunpack.c.l.b16 %v410
    %v603 = vunpack.c.l.b16 %v411
    %v604 = vunpack.c.l.b16 %v412
    %v605 = vunpack.c.l.b16 %v413
    %v606 = vunpack.c.l.b16 %v414
    %v607 = vunpack.c.l.b16 %v415
    %v608 = vunpack.c.l.b16 %v416
    %v609 = vunpack.c.l.b16 %v417
    %v610 = vunpack.c.l.b16 %v418
    %v611 = vunpack.c.l.b16 %v419
    %v612 = vunpack.c.l.b16 %v420
    %v613 = vunpack.c.l.b16 %v421
    %v614 = vunpack.c.l.b16 %v422
    %v615 = vunpack.c.l.b16 %v423
    %v616 = vunpack.c.l.b16 %v424
    %v617 = vunpack.c.l.b16 %v425
    %v618 = vunpack.c.l.b16 %v426
    %v619 = vunpack.c.l.b16 %v427
    %v620 = vunpack.c.l.b16 %v428
    %v621 = vunpack.c.l.b16 %v429
    %v622 = vunpack.c.l.b16 %v430
    %v623 = vunpack.c.l.b16 %v431
    %v624 = vpack.c.b16 %v529, %v528
    %v625 = vpack.c.b16 %v531, %v530
    %v626 = vpack.c.b16 %v533, %v532
    %v627 = vpack.c.b16 %v535, %v534
    %v628 = vpack.c.b16 %v537, %v536
    %v629 = vpack.c.b16 %v539, %v538
    %v630 = vpack.c.b16 %v541, %v540
    %v631 = vpack.c.b16 %v543, %v542
    %v632 = vpack.c.b16 %v545, %v544
    %v633 = vpack.c.b16 %v547, %v546
    %v634 = vpack.c.b16 %v549, %v548
    %v635 = vpack.c.b16 %v551, %v550
    %v636 = vpack.c.b16 %v553, %v552
    %v637 = vpack.c.b16 %v555, %v554
    %v638 = vpack.c.b16 %v557, %v556
    %v639 = vpack.c.b16 %v559, %v558
    %v640 = vpack.c.b16 %v561, %v560
    %v641 = vpack.c.b16 %v563, %v562
    %v642 = vpack.c.b16 %v565, %v564
    %v643 = vpack.c.b16 %v567, %v566
    %v644 = vpack.c.b16 %v569, %v568
    %v645 = vpack.c.b16 %v571, %v570
    %v646 = vpack.c.b16 %v573, %v572
    %v647 = vpack.c.b16 %v575, %v574
    %v648 = vpack.c.b16 %v577, %v576
    %v649 = vpack.c.b16 %v579, %v578
    %v650 = vpack.c.b16 %v581, %v580
    %v651 = vpack.c.b16 %v583, %v582
    %v652 = vpack.c.b16 %v585, %v584
    %v653 = vpack.c.b16 %v587, %v586
    %v654 = vpack.c.b16 %v589, %v588
    %v655 = vpack.c.b16 %v591, %v590
    %v656 = vpack.c.b16 %v593, %v592
    %v657 = vpack.c.b16 %v595, %v594
    %v658 = vpack.c.b16 %v597, %v596
    %v659 = vpack.c.b16 %v599, %v598
    %v660 = vpack.c.b16 %v601, %v600
    %v661 = vpack.c.b16 %v603, %v602
    %v662 = vpack.c.b16 %v605, %v604
    %v663 = vpack.c.b16 %v607, %v606
    %v664 = vpack.c.b16 %v609, %v608
    %v665 = vpack.c.b16 %v611, %v610
    %v666 = vpack.c.b16 %v613, %v612
    %v667 = vpack.c.b16 %v615, %v614
    %v668 = vpack.c.b16 %v617, %v616
    %v669 = vpack.c.b16 %v619, %v618
    %v670 = vpack.c.b16 %v621, %v620
    %v671 = vpack.c.b16 %v623, %v622
    %720 = vmatprep.subr.bf16.mxu0 0
    %721 = vmatpush1.bf16.msra.mxu0 %v624
    %722 = vmatprep.subr.bf16.mxu0 0
    %723 = vmatpush1.bf16.msra.mxu0 %v625
    %724 = vmatprep.subr.bf16.mxu0 0
    %725 = vmatpush1.bf16.msra.mxu0 %v626
    %726 = vmatprep.subr.bf16.mxu0 0
    %727 = vmatpush1.bf16.msra.mxu0 %v627
    %728 = vmatprep.subr.bf16.mxu0 0
    %729 = vmatpush1.bf16.msra.mxu0 %v628
    %730 = vmatprep.subr.bf16.mxu0 0
    %731 = vmatpush1.bf16.msra.mxu0 %v629
    %732 = vmatprep.subr.bf16.mxu0 0
    %733 = vmatpush1.bf16.msra.mxu0 %v630
    %734 = vmatprep.subr.bf16.mxu0 0
    %735 = vmatpush1.bf16.msra.mxu0 %v631
    %736 = vmatprep.subr.bf16.mxu0 0
    %737 = vmatpush1.bf16.msra.mxu0 %v632
    %738 = vmatprep.subr.bf16.mxu0 0
    %739 = vmatpush1.bf16.msra.mxu0 %v633
    %740 = vmatprep.subr.bf16.mxu0 0
    %741 = vmatpush1.bf16.msra.mxu0 %v634
    %742 = vmatprep.subr.bf16.mxu0 0
    %743 = vmatpush1.bf16.msra.mxu0 %v635
    %744 = vmatprep.subr.bf16.mxu0 0
    %745 = vmatpush1.bf16.msra.mxu0 %v636
    %746 = vmatprep.subr.bf16.mxu0 0
    %747 = vmatpush1.bf16.msra.mxu0 %v637
    %748 = vmatprep.subr.bf16.mxu0 0
    %749 = vmatpush1.bf16.msra.mxu0 %v638
    %750 = vmatprep.subr.bf16.mxu0 0
    %751 = vmatpush1.bf16.msra.mxu0 %v639
    %752 = vmatprep.mubr.bf16.mxu0 %v324
    %753 = vmatmul.mubr.bf16.gmra.mrb[0].mxu0 %v323
    %v754 = vpop.f32.mrb[0].mxu0
    %v755 = vadd.f32 0.0, %v754
    %v756 = vpop.f32.mrb[0].mxu0
    %v757 = vpop.f32.mrb[0].mxu0
    %v758 = vadd.f32 0.0, %v757
    %v759 = vpop.f32.mrb[0].mxu0
    %760 = vmatprep.mubr.bf16.mxu0 %v330
    %761 = vmatmul.mubr.bf16.gmra.mrb[0].mxu0 %v329
    %v762 = vpop.f32.mrb[0].mxu0
    %v763 = vadd.f32 0.0, %v762
    %v764 = vpop.f32.mrb[0].mxu0
    %v765 = vpop.f32.mrb[0].mxu0
    %v766 = vadd.f32 0.0, %v765
    %v767 = vpop.f32.mrb[0].mxu0
    %768 = vdwg.mxu0
    %769 = vmatprep.subr.bf16.mxu0 0
    %770 = vmatpush1.bf16.msra.mxu0 %v640
    %771 = vmatprep.subr.bf16.mxu0 0
    %772 = vmatpush1.bf16.msra.mxu0 %v641
    %773 = vmatprep.subr.bf16.mxu0 0
    %774 = vmatpush1.bf16.msra.mxu0 %v642
    %775 = vmatprep.subr.bf16.mxu0 0
    %776 = vmatpush1.bf16.msra.mxu0 %v643
    %777 = vmatprep.subr.bf16.mxu0 0
    %778 = vmatpush1.bf16.msra.mxu0 %v644
    %779 = vmatprep.subr.bf16.mxu0 0
    %780 = vmatpush1.bf16.msra.mxu0 %v645
    %781 = vmatprep.subr.bf16.mxu0 0
    %782 = vmatpush1.bf16.msra.mxu0 %v646
    %783 = vmatprep.subr.bf16.mxu0 0
    %784 = vmatpush1.bf16.msra.mxu0 %v647
    %785 = vmatprep.subr.bf16.mxu0 0
    %786 = vmatpush1.bf16.msra.mxu0 %v648
    %787 = vmatprep.subr.bf16.mxu0 0
    %788 = vmatpush1.bf16.msra.mxu0 %v649
    %789 = vmatprep.subr.bf16.mxu0 0
    %790 = vmatpush1.bf16.msra.mxu0 %v650
    %791 = vmatprep.subr.bf16.mxu0 0
    %792 = vmatpush1.bf16.msra.mxu0 %v651
    %793 = vmatprep.subr.bf16.mxu0 0
    %794 = vmatpush1.bf16.msra.mxu0 %v652
    %795 = vmatprep.subr.bf16.mxu0 0
    %796 = vmatpush1.bf16.msra.mxu0 %v653
    %797 = vmatprep.subr.bf16.mxu0 0
    %798 = vmatpush1.bf16.msra.mxu0 %v654
    %799 = vmatprep.subr.bf16.mxu0 0
    %800 = vmatpush1.bf16.msra.mxu0 %v655
    %801 = vmatprep.mubr.bf16.mxu0 %v326
    %802 = vmatmul.mubr.bf16.gmra.mrb[0].mxu0 %v325
    %v803 = vpop.f32.mrb[0].mxu0
    %v804 = vadd.f32 %v755, %v803
    %v805 = vpop.f32.mrb[0].mxu0
    %v806 = vpop.f32.mrb[0].mxu0
    %v807 = vadd.f32 %v758, %v806
    %v808 = vpop.f32.mrb[0].mxu0
    %809 = vmatprep.mubr.bf16.mxu0 %v332
    %810 = vmatmul.mubr.bf16.gmra.mrb[0].mxu0 %v331
    %v811 = vpop.f32.mrb[0].mxu0
    %v812 = vadd.f32 %v763, %v811
    %v813 = vpop.f32.mrb[0].mxu0
    %v814 = vpop.f32.mrb[0].mxu0
    %v815 = vadd.f32 %v766, %v814
    %v816 = vpop.f32.mrb[0].mxu0
    %817 = vdwg.mxu0
    %818 = vmatprep.subr.bf16.mxu0 0
    %819 = vmatpush1.bf16.msra.mxu0 %v656
    %820 = vmatprep.subr.bf16.mxu0 0
    %821 = vmatpush1.bf16.msra.mxu0 %v657
    %822 = vmatprep.subr.bf16.mxu0 0
    %823 = vmatpush1.bf16.msra.mxu0 %v658
    %824 = vmatprep.subr.bf16.mxu0 0
    %825 = vmatpush1.bf16.msra.mxu0 %v659
    %826 = vmatprep.subr.bf16.mxu0 0
    %827 = vmatpush1.bf16.msra.mxu0 %v660
    %828 = vmatprep.subr.bf16.mxu0 0
    %829 = vmatpush1.bf16.msra.mxu0 %v661
    %830 = vmatprep.subr.bf16.mxu0 0
    %831 = vmatpush1.bf16.msra.mxu0 %v662
    %832 = vmatprep.subr.bf16.mxu0 0
    %833 = vmatpush1.bf16.msra.mxu0 %v663
    %834 = vmatprep.subr.bf16.mxu0 0
    %835 = vmatpush1.bf16.msra.mxu0 %v664
    %836 = vmatprep.subr.bf16.mxu0 0
    %837 = vmatpush1.bf16.msra.mxu0 %v665
    %838 = vmatprep.subr.bf16.mxu0 0
    %839 = vmatpush1.bf16.msra.mxu0 %v666
    %840 = vmatprep.subr.bf16.mxu0 0
    %841 = vmatpush1.bf16.msra.mxu0 %v667
    %842 = vmatprep.subr.bf16.mxu0 0
    %843 = vmatpush1.bf16.msra.mxu0 %v668
    %844 = vmatprep.subr.bf16.mxu0 0
    %845 = vmatpush1.bf16.msra.mxu0 %v669
    %846 = vmatprep.subr.bf16.mxu0 0
    %847 = vmatpush1.bf16.msra.mxu0 %v670
    %848 = vmatprep.subr.bf16.mxu0 0
    %849 = vmatpush1.bf16.msra.mxu0 %v671
    %850 = vmatprep.mubr.bf16.mxu0 %v328
    %851 = vmatmul.mubr.bf16.gmra.mrb[0].mxu0 %v327
    %v852 = vpop.f32.mrb[0].mxu0
    %v853 = vadd.f32 %v804, %v852
    %v854 = vpop.f32.mrb[0].mxu0
    %v855 = vpop.f32.mrb[0].mxu0
    %v856 = vadd.f32 %v807, %v855
    %v857 = vpop.f32.mrb[0].mxu0
    %858 = vmatprep.mubr.bf16.mxu0 %v334
    %859 = vmatmul.mubr.bf16.gmra.mrb[0].mxu0 %v333
    %v860 = vpop.f32.mrb[0].mxu0
    %v861 = vadd.f32 %v812, %v860
    %v862 = vpop.f32.mrb[0].mxu0
    %v863 = vpop.f32.mrb[0].mxu0
    %v864 = vadd.f32 %v815, %v863
    %v865 = vpop.f32.mrb[0].mxu0
    %866 = vdwg.mxu0
    %v963 = vunpack.c.l.b16 %v227
    %v964 = vunpack.c.l.b16 %v228
    %v965 = vunpack.c.l.b16 %v229
    %v966 = vunpack.c.l.b16 %v230
    %v967 = vunpack.c.l.b16 %v231
    %v968 = vunpack.c.l.b16 %v232
    %v969 = vunpack.c.l.b16 %v233
    %v970 = vunpack.c.l.b16 %v234
    %v971 = vunpack.c.l.b16 %v235
    %v972 = vunpack.c.l.b16 %v236
    %v973 = vunpack.c.l.b16 %v237
    %v974 = vunpack.c.l.b16 %v238
    %v975 = vunpack.c.l.b16 %v239
    %v976 = vunpack.c.l.b16 %v240
    %v977 = vunpack.c.l.b16 %v241
    %v978 = vunpack.c.l.b16 %v242
    %v979 = vunpack.c.l.b16 %v243
    %v980 = vunpack.c.l.b16 %v244
    %v981 = vunpack.c.l.b16 %v245
    %v982 = vunpack.c.l.b16 %v246
    %v983 = vunpack.c.l.b16 %v247
    %v984 = vunpack.c.l.b16 %v248
    %v985 = vunpack.c.l.b16 %v249
    %v986 = vunpack.c.l.b16 %v250
    %v987 = vunpack.c.l.b16 %v251
    %v988 = vunpack.c.l.b16 %v252
    %v989 = vunpack.c.l.b16 %v253
    %v990 = vunpack.c.l.b16 %v254
    %v991 = vunpack.c.l.b16 %v255
    %v992 = vunpack.c.l.b16 %v256
    %v993 = vunpack.c.l.b16 %v257
    %v994 = vunpack.c.l.b16 %v258
    %v995 = vunpack.c.l.b16 %v259
    %v996 = vunpack.c.l.b16 %v260
    %v997 = vunpack.c.l.b16 %v261
    %v998 = vunpack.c.l.b16 %v262
    %v999 = vunpack.c.l.b16 %v263
    %v1000 = vunpack.c.l.b16 %v264
    %v1001 = vunpack.c.l.b16 %v265
    %v1002 = vunpack.c.l.b16 %v266
    %v1003 = vunpack.c.l.b16 %v267
    %v1004 = vunpack.c.l.b16 %v268
    %v1005 = vunpack.c.l.b16 %v269
    %v1006 = vunpack.c.l.b16 %v270
    %v1007 = vunpack.c.l.b16 %v271
    %v1008 = vunpack.c.l.b16 %v272
    %v1009 = vunpack.c.l.b16 %v273
    %v1010 = vunpack.c.l.b16 %v274
    %v1011 = vunpack.c.l.b16 %v275
    %v1012 = vunpack.c.l.b16 %v276
    %v1013 = vunpack.c.l.b16 %v277
    %v1014 = vunpack.c.l.b16 %v278
    %v1015 = vunpack.c.l.b16 %v279
    %v1016 = vunpack.c.l.b16 %v280
    %v1017 = vunpack.c.l.b16 %v281
    %v1018 = vunpack.c.l.b16 %v282
    %v1019 = vunpack.c.l.b16 %v283
    %v1020 = vunpack.c.l.b16 %v284
    %v1021 = vunpack.c.l.b16 %v285
    %v1022 = vunpack.c.l.b16 %v286
    %v1023 = vunpack.c.l.b16 %v287
    %v1024 = vunpack.c.l.b16 %v288
    %v1025 = vunpack.c.l.b16 %v289
    %v1026 = vunpack.c.l.b16 %v290
    %v1027 = vunpack.c.l.b16 %v291
    %v1028 = vunpack.c.l.b16 %v292
    %v1029 = vunpack.c.l.b16 %v293
    %v1030 = vunpack.c.l.b16 %v294
    %v1031 = vunpack.c.l.b16 %v295
    %v1032 = vunpack.c.l.b16 %v296
    %v1033 = vunpack.c.l.b16 %v297
    %v1034 = vunpack.c.l.b16 %v298
    %v1035 = vunpack.c.l.b16 %v299
    %v1036 = vunpack.c.l.b16 %v300
    %v1037 = vunpack.c.l.b16 %v301
    %v1038 = vunpack.c.l.b16 %v302
    %v1039 = vunpack.c.l.b16 %v303
    %v1040 = vunpack.c.l.b16 %v304
    %v1041 = vunpack.c.l.b16 %v305
    %v1042 = vunpack.c.l.b16 %v306
    %v1043 = vunpack.c.l.b16 %v307
    %v1044 = vunpack.c.l.b16 %v308
    %v1045 = vunpack.c.l.b16 %v309
    %v1046 = vunpack.c.l.b16 %v310
    %v1047 = vunpack.c.l.b16 %v311
    %v1048 = vunpack.c.l.b16 %v312
    %v1049 = vunpack.c.l.b16 %v313
    %v1050 = vunpack.c.l.b16 %v314
    %v1051 = vunpack.c.l.b16 %v315
    %v1052 = vunpack.c.l.b16 %v316
    %v1053 = vunpack.c.l.b16 %v317
    %v1054 = vunpack.c.l.b16 %v318
    %v1055 = vunpack.c.l.b16 %v319
    %v1056 = vunpack.c.l.b16 %v320
    %v1057 = vunpack.c.l.b16 %v321
    %v1058 = vunpack.c.l.b16 %v322
    %v1059 = vpack.c.b16 %v964, %v963
    %v1060 = vpack.c.b16 %v966, %v965
    %v1061 = vpack.c.b16 %v968, %v967
    %v1062 = vpack.c.b16 %v970, %v969
    %v1063 = vpack.c.b16 %v972, %v971
    %v1064 = vpack.c.b16 %v974, %v973
    %v1065 = vpack.c.b16 %v976, %v975
    %v1066 = vpack.c.b16 %v978, %v977
    %v1067 = vpack.c.b16 %v980, %v979
    %v1068 = vpack.c.b16 %v982, %v981
    %v1069 = vpack.c.b16 %v984, %v983
    %v1070 = vpack.c.b16 %v986, %v985
    %v1071 = vpack.c.b16 %v988, %v987
    %v1072 = vpack.c.b16 %v990, %v989
    %v1073 = vpack.c.b16 %v992, %v991
    %v1074 = vpack.c.b16 %v994, %v993
    %v1075 = vpack.c.b16 %v996, %v995
    %v1076 = vpack.c.b16 %v998, %v997
    %v1077 = vpack.c.b16 %v1000, %v999
    %v1078 = vpack.c.b16 %v1002, %v1001
    %v1079 = vpack.c.b16 %v1004, %v1003
    %v1080 = vpack.c.b16 %v1006, %v1005
    %v1081 = vpack.c.b16 %v1008, %v1007
    %v1082 = vpack.c.b16 %v1010, %v1009
    %v1083 = vpack.c.b16 %v1012, %v1011
    %v1084 = vpack.c.b16 %v1014, %v1013
    %v1085 = vpack.c.b16 %v1016, %v1015
    %v1086 = vpack.c.b16 %v1018, %v1017
    %v1087 = vpack.c.b16 %v1020, %v1019
    %v1088 = vpack.c.b16 %v1022, %v1021
    %v1089 = vpack.c.b16 %v1024, %v1023
    %v1090 = vpack.c.b16 %v1026, %v1025
    %v1091 = vpack.c.b16 %v1028, %v1027
    %v1092 = vpack.c.b16 %v1030, %v1029
    %v1093 = vpack.c.b16 %v1032, %v1031
    %v1094 = vpack.c.b16 %v1034, %v1033
    %v1095 = vpack.c.b16 %v1036, %v1035
    %v1096 = vpack.c.b16 %v1038, %v1037
    %v1097 = vpack.c.b16 %v1040, %v1039
    %v1098 = vpack.c.b16 %v1042, %v1041
    %v1099 = vpack.c.b16 %v1044, %v1043
    %v1100 = vpack.c.b16 %v1046, %v1045
    %v1101 = vpack.c.b16 %v1048, %v1047
    %v1102 = vpack.c.b16 %v1050, %v1049
    %v1103 = vpack.c.b16 %v1052, %v1051
    %v1104 = vpack.c.b16 %v1054, %v1053
    %v1105 = vpack.c.b16 %v1056, %v1055
    %v1106 = vpack.c.b16 %v1058, %v1057
    %1155 = vmatprep.subr.bf16.mxu0 0
    %1156 = vmatpush1.bf16.msra.mxu0 %v1059
    %1157 = vmatprep.subr.bf16.mxu0 0
    %1158 = vmatpush1.bf16.msra.mxu0 %v1060
    %1159 = vmatprep.subr.bf16.mxu0 0
    %1160 = vmatpush1.bf16.msra.mxu0 %v1061
    %1161 = vmatprep.subr.bf16.mxu0 0
    %1162 = vmatpush1.bf16.msra.mxu0 %v1062
    %1163 = vmatprep.subr.bf16.mxu0 0
    %1164 = vmatpush1.bf16.msra.mxu0 %v1063
    %1165 = vmatprep.subr.bf16.mxu0 0
    %1166 = vmatpush1.bf16.msra.mxu0 %v1064
    %1167 = vmatprep.subr.bf16.mxu0 0
    %1168 = vmatpush1.bf16.msra.mxu0 %v1065
    %1169 = vmatprep.subr.bf16.mxu0 0
    %1170 = vmatpush1.bf16.msra.mxu0 %v1066
    %1171 = vmatprep.subr.bf16.mxu0 0
    %1172 = vmatpush1.bf16.msra.mxu0 %v1067
    %1173 = vmatprep.subr.bf16.mxu0 0
    %1174 = vmatpush1.bf16.msra.mxu0 %v1068
    %1175 = vmatprep.subr.bf16.mxu0 0
    %1176 = vmatpush1.bf16.msra.mxu0 %v1069
    %1177 = vmatprep.subr.bf16.mxu0 0
    %1178 = vmatpush1.bf16.msra.mxu0 %v1070
    %1179 = vmatprep.subr.bf16.mxu0 0
    %1180 = vmatpush1.bf16.msra.mxu0 %v1071
    %1181 = vmatprep.subr.bf16.mxu0 0
    %1182 = vmatpush1.bf16.msra.mxu0 %v1072
    %1183 = vmatprep.subr.bf16.mxu0 0
    %1184 = vmatpush1.bf16.msra.mxu0 %v1073
    %1185 = vmatprep.subr.bf16.mxu0 0
    %1186 = vmatpush1.bf16.msra.mxu0 %v1074
    %1187 = vmatprep.mubr.bf16.mxu0 %v216
    %1188 = vmatmul.mubr.bf16.gmra.mrb[0].mxu0 %v215
    %v1189 = vpop.f32.mrb[0].mxu0
    %v1190 = vadd.f32 %v853, %v1189
    %v1191 = vpop.f32.mrb[0].mxu0
    %v1192 = vpop.f32.mrb[0].mxu0
    %v1193 = vadd.f32 %v856, %v1192
    %v1194 = vpop.f32.mrb[0].mxu0
    %1195 = vmatprep.mubr.bf16.mxu0 %v222
    %1196 = vmatmul.mubr.bf16.gmra.mrb[0].mxu0 %v221
    %v1197 = vpop.f32.mrb[0].mxu0
    %v1198 = vadd.f32 %v861, %v1197
    %v1199 = vpop.f32.mrb[0].mxu0
    %v1200 = vpop.f32.mrb[0].mxu0
    %v1201 = vadd.f32 %v864, %v1200
    %v1202 = vpop.f32.mrb[0].mxu0
    %1203 = vdwg.mxu0
    %1204 = vmatprep.subr.bf16.mxu0 0
    %1205 = vmatpush1.bf16.msra.mxu0 %v1075
    %1206 = vmatprep.subr.bf16.mxu0 0
    %1207 = vmatpush1.bf16.msra.mxu0 %v1076
    %1208 = vmatprep.subr.bf16.mxu0 0
    %1209 = vmatpush1.bf16.msra.mxu0 %v1077
    %1210 = vmatprep.subr.bf16.mxu0 0
    %1211 = vmatpush1.bf16.msra.mxu0 %v1078
    %1212 = vmatprep.subr.bf16.mxu0 0
    %1213 = vmatpush1.bf16.msra.mxu0 %v1079
    %1214 = vmatprep.subr.bf16.mxu0 0
    %1215 = vmatpush1.bf16.msra.mxu0 %v1080
    %1216 = vmatprep.subr.bf16.mxu0 0
    %1217 = vmatpush1.bf16.msra.mxu0 %v1081
    %1218 = vmatprep.subr.bf16.mxu0 0
    %1219 = vmatpush1.bf16.msra.mxu0 %v1082
    %1220 = vmatprep.subr.bf16.mxu0 0
    %1221 = vmatpush1.bf16.msra.mxu0 %v1083
    %1222 = vmatprep.subr.bf16.mxu0 0
    %1223 = vmatpush1.bf16.msra.mxu0 %v1084
    %1224 = vmatprep.subr.bf16.mxu0 0
    %1225 = vmatpush1.bf16.msra.mxu0 %v1085
    %1226 = vmatprep.subr.bf16.mxu0 0
    %1227 = vmatpush1.bf16.msra.mxu0 %v1086
    %1228 = vmatprep.subr.bf16.mxu0 0
    %1229 = vmatpush1.bf16.msra.mxu0 %v1087
    %1230 = vmatprep.subr.bf16.mxu0 0
    %1231 = vmatpush1.bf16.msra.mxu0 %v1088
    %1232 = vmatprep.subr.bf16.mxu0 0
    %1233 = vmatpush1.bf16.msra.mxu0 %v1089
    %1234 = vmatprep.subr.bf16.mxu0 0
    %1235 = vmatpush1.bf16.msra.mxu0 %v1090
    %1236 = vmatprep.mubr.bf16.mxu0 %v218
    %1237 = vmatmul.mubr.bf16.gmra.mrb[0].mxu0 %v217
    %v1238 = vpop.f32.mrb[0].mxu0
    %v1239 = vadd.f32 %v1190, %v1238
    %v1240 = vpop.f32.mrb[0].mxu0
    %v1241 = vpop.f32.mrb[0].mxu0
    %v1242 = vadd.f32 %v1193, %v1241
    %v1243 = vpop.f32.mrb[0].mxu0
    %1244 = vmatprep.mubr.bf16.mxu0 %v224
    %1245 = vmatmul.mubr.bf16.gmra.mrb[0].mxu0 %v223
    %v1246 = vpop.f32.mrb[0].mxu0
    %v1247 = vadd.f32 %v1198, %v1246
    %v1248 = vpop.f32.mrb[0].mxu0
    %v1249 = vpop.f32.mrb[0].mxu0
    %v1250 = vadd.f32 %v1201, %v1249
    %v1251 = vpop.f32.mrb[0].mxu0
    %1252 = vdwg.mxu0
    %1253 = vmatprep.subr.bf16.mxu0 0
    %1254 = vmatpush1.bf16.msra.mxu0 %v1091
    %1255 = vmatprep.subr.bf16.mxu0 0
    %1256 = vmatpush1.bf16.msra.mxu0 %v1092
    %1257 = vmatprep.subr.bf16.mxu0 0
    %1258 = vmatpush1.bf16.msra.mxu0 %v1093
    %1259 = vmatprep.subr.bf16.mxu0 0
    %1260 = vmatpush1.bf16.msra.mxu0 %v1094
    %1261 = vmatprep.subr.bf16.mxu0 0
    %1262 = vmatpush1.bf16.msra.mxu0 %v1095
    %1263 = vmatprep.subr.bf16.mxu0 0
    %1264 = vmatpush1.bf16.msra.mxu0 %v1096
    %1265 = vmatprep.subr.bf16.mxu0 0
    %1266 = vmatpush1.bf16.msra.mxu0 %v1097
    %1267 = vmatprep.subr.bf16.mxu0 0
    %1268 = vmatpush1.bf16.msra.mxu0 %v1098
    %1269 = vmatprep.subr.bf16.mxu0 0
    %1270 = vmatpush1.bf16.msra.mxu0 %v1099
    %1271 = vmatprep.subr.bf16.mxu0 0
    %1272 = vmatpush1.bf16.msra.mxu0 %v1100
    %1273 = vmatprep.subr.bf16.mxu0 0
    %1274 = vmatpush1.bf16.msra.mxu0 %v1101
    %1275 = vmatprep.subr.bf16.mxu0 0
    %1276 = vmatpush1.bf16.msra.mxu0 %v1102
    %1277 = vmatprep.subr.bf16.mxu0 0
    %1278 = vmatpush1.bf16.msra.mxu0 %v1103
    %1279 = vmatprep.subr.bf16.mxu0 0
    %1280 = vmatpush1.bf16.msra.mxu0 %v1104
    %1281 = vmatprep.subr.bf16.mxu0 0
    %1282 = vmatpush1.bf16.msra.mxu0 %v1105
    %1283 = vmatprep.subr.bf16.mxu0 0
    %1284 = vmatpush1.bf16.msra.mxu0 %v1106
    %1285 = vmatprep.mubr.bf16.mxu0 %v220
    %1286 = vmatmul.mubr.bf16.gmra.mrb[0].mxu0 %v219
    %v1287 = vpop.f32.mrb[0].mxu0
    %v1288 = vadd.f32 %v1239, %v1287
    %v1289 = vpop.f32.mrb[0].mxu0
    %v1290 = vpop.f32.mrb[0].mxu0
    %v1291 = vadd.f32 %v1242, %v1290
    %v1292 = vpop.f32.mrb[0].mxu0
    %1293 = vmatprep.mubr.bf16.mxu0 %v226
    %1294 = vmatmul.mubr.bf16.gmra.mrb[0].mxu0 %v225
    %v1295 = vpop.f32.mrb[0].mxu0
    %v1296 = vadd.f32 %v1247, %v1295
    %v1297 = vpop.f32.mrb[0].mxu0
    %v1298 = vpop.f32.mrb[0].mxu0
    %v1299 = vadd.f32 %v1250, %v1298
    %v1300 = vpop.f32.mrb[0].mxu0
    %1301 = vdwg.mxu0
    %vm1306 = vcmask 1046528
    %v1307 = vrot.slane %v1288, 1
    %v1308 = vrot.slane %v1291, 1
    %v1309 = vsel %vm1306, %v1307, %v1308
    %v1310 = vrot.slane %v1296, 1
    %v1311 = vrot.slane %v1299, 1
    %v1312 = vsel %vm1306, %v1310, %v1311
    %1313 = vrot.lane.b32.xlu0 %v1309, 126
    %v1314 = vpop.permute.xlu0 %1313
    %1315 = vrot.lane.b32.xlu0 %v1308, 126
    %v1316 = vpop.permute.xlu0 %1315
    %1317 = vrot.lane.b32.xlu0 %v1312, 126
    %v1318 = vpop.permute.xlu0 %1317
    %1319 = vrot.lane.b32.xlu0 %v1311, 126
    %v1320 = vpop.permute.xlu0 %1319
    %v1325 = vadd.f32 %v1288, %v1314
    %v1326 = vadd.f32 %v1291, %v1316
    %v1327 = vadd.f32 %v1296, %v1318
    %v1328 = vadd.f32 %v1299, %v1320
    %vm1329 = vcmask 1045504
    %v1330 = vrot.slane %v1288, 2
    %v1331 = vrot.slane %v1291, 2
    %v1332 = vsel %vm1329, %v1330, %v1331
    %v1333 = vrot.slane %v1296, 2
    %v1334 = vrot.slane %v1299, 2
    %v1335 = vsel %vm1329, %v1333, %v1334
    %1336 = vrot.lane.b32.xlu0 %v1332, 124
    %v1337 = vpop.permute.xlu0 %1336
    %1338 = vrot.lane.b32.xlu0 %v1331, 124
    %v1339 = vpop.permute.xlu0 %1338
    %1340 = vrot.lane.b32.xlu0 %v1335, 124
    %v1341 = vpop.permute.xlu0 %1340
    %1342 = vrot.lane.b32.xlu0 %v1334, 124
    %v1343 = vpop.permute.xlu0 %1342
    %v1348 = vadd.f32 %v1325, %v1337
    %v1349 = vadd.f32 %v1326, %v1339
    %v1350 = vadd.f32 %v1327, %v1341
    %v1351 = vadd.f32 %v1328, %v1343
    %v1352 = vlaneseq
    %v1353 = vshrl.u32 %v1352, 7
    %v1354 = vsub.s32 0, %v1353
    %v1355 = vrot.slane %v214, %v1354
    %v1356 = vadd.f32 %v1348, %v1355
    %v1357 = vadd.f32 %v1349, %v1355
    %v1358 = vadd.f32 %v1350, %v1355
    %v1359 = vadd.f32 %v1351, %v1355
    %v1360 = vmax.f32 %v1356, 0.0
    %v1361 = vmax.f32 %v1357, 0.0
    %v1362 = vmax.f32 %v1358, 0.0
    %v1363 = vmax.f32 %v1359, 0.0
    %vm1364 = vcmask 15360
    %v1365 = vsel %vm1364, %v1360, -inf
    %vm1366 = vcmask 13312
    %v1367 = vsel %vm1366, %v1361, -inf
    %v1368 = vmax.f32 %v1365, %v1367
    %v1369 = vrot.slane %v1368, 4
    %v1370 = vmax.f32 %v1368, %v1369
    %v1371 = vrot.slane %v1370, 2
    %v1372 = vmax.f32 %v1370, %v1371
    %v1373 = vrot.slane %v1372, 1
    %v1374 = vmax.f32 %v1372, %v1373
    %v1375 = vsel %vm1364, %v1362, -inf
    %v1376 = vsel %vm1366, %v1363, -inf
    %v1377 = vmax.f32 %v1375, %v1376
    %v1378 = vrot.slane %v1377, 4
    %v1379 = vmax.f32 %v1377, %v1378
    %v1380 = vrot.slane %v1379, 2
    %v1381 = vmax.f32 %v1379, %v1380
    %v1382 = vrot.slane %v1381, 1
    %v1383 = vmax.f32 %v1381, %v1382
    %vm1384 = vcmask 1044480
    %v1385 = vrot.slane %v1288, 3
    %v1386 = vrot.slane %v1291, 3
    %v1387 = vsel %vm1384, %v1385, %v1386
    %v1388 = vrot.slane %v1296, 3
    %v1389 = vrot.slane %v1299, 3
    %v1390 = vsel %vm1384, %v1388, %v1389
    %1391 = vrot.lane.b32.xlu0 %v1387, 122
    %v1392 = vpop.permute.xlu0 %1391
    %1393 = vrot.lane.b32.xlu0 %v1386, 122
    %v1394 = vpop.permute.xlu0 %1393
    %1395 = vrot.lane.b32.xlu0 %v1390, 122
    %v1396 = vpop.permute.xlu0 %1395
    %1397 = vrot.lane.b32.xlu0 %v1389, 122
    %v1398 = vpop.permute.xlu0 %1397
    %v1403 = vadd.f32 %v1348, %v1392
    %v1404 = vadd.f32 %v1349, %v1394
    %v1405 = vadd.f32 %v1350, %v1396
    %v1406 = vadd.f32 %v1351, %v1398
    %v1407 = vlaneseq
    %v1408 = vshrl.u32 %v1407, 7
    %v1409 = vsub.s32 1, %v1408
    %v1410 = vrot.slane %v214, %v1409
    %1412 = vrot.lane.b32.xlu0 %v1410, 6
    %v1413 = vpop.permute.xlu0 %1412
    %v1415 = vadd.f32 %v1403, %v1413
    %v1416 = vadd.f32 %v1404, %v1413
    %v1417 = vadd.f32 %v1405, %v1413
    %v1418 = vadd.f32 %v1406, %v1413
    %v1419 = vmax.f32 %v1415, 0.0
    %v1420 = vmax.f32 %v1416, 0.0
    %v1421 = vmax.f32 %v1417, 0.0
    %v1422 = vmax.f32 %v1418, 0.0
    %vm1423 = vcmask 64560
    %v1424 = vsel %vm1423, %v1419, -inf
    %vm1425 = vcmask 61488
    %v1426 = vsel %vm1425, %v1420, -inf
    %v1427 = vmax.f32 %v1424, %v1426
    %v1428 = vrot.slane %v1427, 4
    %v1429 = vmax.f32 %v1427, %v1428
    %v1430 = vrot.slane %v1429, 2
    %v1431 = vmax.f32 %v1429, %v1430
    %v1432 = vrot.slane %v1431, 1
    %v1433 = vmax.f32 %v1431, %v1432
    %v1434 = vsel %vm1423, %v1421, -inf
    %v1435 = vsel %vm1425, %v1422, -inf
    %v1436 = vmax.f32 %v1434, %v1435
    %v1437 = vrot.slane %v1436, 4
    %v1438 = vmax.f32 %v1436, %v1437
    %v1439 = vrot.slane %v1438, 2
    %v1440 = vmax.f32 %v1438, %v1439
    %v1441 = vrot.slane %v1440, 1
    %v1442 = vmax.f32 %v1440, %v1441
    %vm1443 = vcmask 1043456
    %v1444 = vrot.slane %v1288, 4
    %v1445 = vrot.slane %v1291, 4
    %v1446 = vsel %vm1443, %v1444, %v1445
    %v1447 = vrot.slane %v1296, 4
    %v1448 = vrot.slane %v1299, 4
    %v1449 = vsel %vm1443, %v1447, %v1448
    %1450 = vrot.lane.b32.xlu0 %v1446, 120
    %v1451 = vpop.permute.xlu0 %1450
    %1452 = vrot.lane.b32.xlu0 %v1445, 120
    %v1453 = vpop.permute.xlu0 %1452
    %1454 = vrot.lane.b32.xlu0 %v1449, 120
    %v1455 = vpop.permute.xlu0 %1454
    %1456 = vrot.lane.b32.xlu0 %v1448, 120
    %v1457 = vpop.permute.xlu0 %1456
    %v1462 = vadd.f32 %v1403, %v1451
    %v1463 = vadd.f32 %v1404, %v1453
    %v1464 = vadd.f32 %v1405, %v1455
    %v1465 = vadd.f32 %v1406, %v1457
    %v1466 = vlaneseq
    %v1467 = vshrl.u32 %v1466, 7
    %v1468 = vsub.s32 2, %v1467
    %v1469 = vrot.slane %v214, %v1468
    %1471 = vrot.lane.b32.xlu0 %v1469, 14
    %v1472 = vpop.permute.xlu0 %1471
    %v1474 = vadd.f32 %v1462, %v1472
    %v1475 = vadd.f32 %v1463, %v1472
    %v1476 = vadd.f32 %v1464, %v1472
    %v1477 = vadd.f32 %v1465, %v1472
    %v1478 = vmax.f32 %v1474, 0.0
    %v1479 = vmax.f32 %v1475, 0.0
    %v1480 = vmax.f32 %v1476, 0.0
    %v1481 = vmax.f32 %v1477, 0.0
    %vm1482 = vcmask 130160
    %v1483 = vsel %vm1482, %v1478, -inf
    %vm1484 = vcmask 126064
    %v1485 = vsel %vm1484, %v1479, -inf
    %v1486 = vmax.f32 %v1483, %v1485
    %v1487 = vrot.slane %v1486, 4
    %v1488 = vmax.f32 %v1486, %v1487
    %v1489 = vrot.slane %v1488, 2
    %v1490 = vmax.f32 %v1488, %v1489
    %v1491 = vrot.slane %v1490, 1
    %v1492 = vmax.f32 %v1490, %v1491
    %v1493 = vsel %vm1482, %v1480, -inf
    %v1494 = vsel %vm1484, %v1481, -inf
    %v1495 = vmax.f32 %v1493, %v1494
    %v1496 = vrot.slane %v1495, 4
    %v1497 = vmax.f32 %v1495, %v1496
    %v1498 = vrot.slane %v1497, 2
    %v1499 = vmax.f32 %v1497, %v1498
    %v1500 = vrot.slane %v1499, 1
    %v1501 = vmax.f32 %v1499, %v1500
    %v1502 = vpack.c.bf16 %v52, %v46
    %v1503 = vpack.c.bf16 %v53, %v47
    %v1504 = vpack.c.bf16 %v54, %v48
    %v1505 = vpack.c.bf16 %v55, %v49
    %v1506 = vpack.c.bf16 %v56, %v50
    %v1507 = vpack.c.bf16 %v57, %v51
    %v1508 = vpack.c.bf16 %v148, %v142
    %v1509 = vpack.c.bf16 %v149, %v143
    %v1510 = vpack.c.bf16 %v150, %v144
    %v1511 = vpack.c.bf16 %v151, %v145
    %v1512 = vpack.c.bf16 %v152, %v146
    %v1513 = vpack.c.bf16 %v153, %v147
    %s1514 = scalar_lea.vmem %s1, 768
    %v1515 = vld [vmem:[%s1514] sm:$0xf]
    %v1516 = vld [vmem:[%s1514 + $0x4] sm:$0xf]
    %v1517 = vld [vmem:[%s1514 + $0x8] sm:$0xf]
    %v1518 = vld [vmem:[%s1514 + $0xc] sm:$0xf]
    %v1519 = vld [vmem:[%s1514 + $0x10] sm:$0xf]
    %v1520 = vld [vmem:[%s1514 + $0x14] sm:$0xf]
    %v1521 = vld [vmem:[%s1514 + $0x18] sm:$0xf]
    %v1522 = vld [vmem:[%s1514 + $0x1c] sm:$0xf]
    %v1523 = vld [vmem:[%s1514 + $0x20] sm:$0xf]
    %v1524 = vld [vmem:[%s1514 + $0x24] sm:$0xf]
    %v1525 = vld [vmem:[%s1514 + $0x28] sm:$0xf]
    %v1526 = vld [vmem:[%s1514 + $0x2c] sm:$0xf]
    %v1527 = vld [vmem:[%s1514 + $0x30] sm:$0xf]
    %v1528 = vld [vmem:[%s1514 + $0x34] sm:$0xf]
    %v1529 = vld [vmem:[%s1514 + $0x38] sm:$0xf]
    %v1530 = vld [vmem:[%s1514 + $0x3c] sm:$0xf]
    %v1531 = vld [vmem:[%s1514 + $0x40] sm:$0xf]
    %v1532 = vld [vmem:[%s1514 + $0x44] sm:$0xf]
    %v1533 = vld [vmem:[%s1514 + $0x48] sm:$0xf]
    %v1534 = vld [vmem:[%s1514 + $0x4c] sm:$0xf]
    %v1535 = vld [vmem:[%s1514 + $0x50] sm:$0xf]
    %v1536 = vld [vmem:[%s1514 + $0x54] sm:$0xf]
    %v1537 = vld [vmem:[%s1514 + $0x58] sm:$0xf]
    %v1538 = vld [vmem:[%s1514 + $0x5c] sm:$0xf]
    %v1539 = vld [vmem:[%s1514 + $0x60] sm:$0xf]
    %v1540 = vld [vmem:[%s1514 + $0x64] sm:$0xf]
    %v1541 = vld [vmem:[%s1514 + $0x68] sm:$0xf]
    %v1542 = vld [vmem:[%s1514 + $0x6c] sm:$0xf]
    %v1543 = vld [vmem:[%s1514 + $0x70] sm:$0xf]
    %v1544 = vld [vmem:[%s1514 + $0x74] sm:$0xf]
    %v1545 = vld [vmem:[%s1514 + $0x78] sm:$0xf]
    %v1546 = vld [vmem:[%s1514 + $0x7c] sm:$0xf]
    %v1547 = vld [vmem:[%s1514 + $0x80] sm:$0xf]
    %v1548 = vld [vmem:[%s1514 + $0x84] sm:$0xf]
    %v1549 = vld [vmem:[%s1514 + $0x88] sm:$0xf]
    %v1550 = vld [vmem:[%s1514 + $0x8c] sm:$0xf]
    %v1551 = vld [vmem:[%s1514 + $0x90] sm:$0xf]
    %v1552 = vld [vmem:[%s1514 + $0x94] sm:$0xf]
    %v1553 = vld [vmem:[%s1514 + $0x98] sm:$0xf]
    %v1554 = vld [vmem:[%s1514 + $0x9c] sm:$0xf]
    %v1555 = vld [vmem:[%s1514 + $0xa0] sm:$0xf]
    %v1556 = vld [vmem:[%s1514 + $0xa4] sm:$0xf]
    %v1557 = vld [vmem:[%s1514 + $0xa8] sm:$0xf]
    %v1558 = vld [vmem:[%s1514 + $0xac] sm:$0xf]
    %v1559 = vld [vmem:[%s1514 + $0xb0] sm:$0xf]
    %v1560 = vld [vmem:[%s1514 + $0xb4] sm:$0xf]
    %v1561 = vld [vmem:[%s1514 + $0xb8] sm:$0xf]
    %v1562 = vld [vmem:[%s1514 + $0xbc] sm:$0xf]
    %v1563 = vld [vmem:[%s1514 + $0xc0] sm:$0xf]
    %v1564 = vld [vmem:[%s1514 + $0xc4] sm:$0xf]
    %v1565 = vld [vmem:[%s1514 + $0xc8] sm:$0xf]
    %v1566 = vld [vmem:[%s1514 + $0xcc] sm:$0xf]
    %v1567 = vld [vmem:[%s1514 + $0xd0] sm:$0xf]
    %v1568 = vld [vmem:[%s1514 + $0xd4] sm:$0xf]
    %v1569 = vld [vmem:[%s1514 + $0xd8] sm:$0xf]
    %v1570 = vld [vmem:[%s1514 + $0xdc] sm:$0xf]
    %v1571 = vld [vmem:[%s1514 + $0xe0] sm:$0xf]
    %v1572 = vld [vmem:[%s1514 + $0xe4] sm:$0xf]
    %v1573 = vld [vmem:[%s1514 + $0xe8] sm:$0xf]
    %v1574 = vld [vmem:[%s1514 + $0xec] sm:$0xf]
    %v1575 = vld [vmem:[%s1514 + $0xf0] sm:$0xf]
    %v1576 = vld [vmem:[%s1514 + $0xf4] sm:$0xf]
    %v1577 = vld [vmem:[%s1514 + $0xf8] sm:$0xf]
    %v1578 = vld [vmem:[%s1514 + $0xfc] sm:$0xf]
    %v1579 = vld [vmem:[%s1514 + $0x100] sm:$0xf]
    %v1580 = vld [vmem:[%s1514 + $0x104] sm:$0xf]
    %v1581 = vld [vmem:[%s1514 + $0x108] sm:$0xf]
    %v1582 = vld [vmem:[%s1514 + $0x10c] sm:$0xf]
    %v1583 = vld [vmem:[%s1514 + $0x110] sm:$0xf]
    %v1584 = vld [vmem:[%s1514 + $0x114] sm:$0xf]
    %v1585 = vld [vmem:[%s1514 + $0x118] sm:$0xf]
    %v1586 = vld [vmem:[%s1514 + $0x11c] sm:$0xf]
    %v1587 = vld [vmem:[%s1514 + $0x120] sm:$0xf]
    %v1588 = vld [vmem:[%s1514 + $0x124] sm:$0xf]
    %v1589 = vld [vmem:[%s1514 + $0x128] sm:$0xf]
    %v1590 = vld [vmem:[%s1514 + $0x12c] sm:$0xf]
    %v1591 = vld [vmem:[%s1514 + $0x130] sm:$0xf]
    %v1592 = vld [vmem:[%s1514 + $0x134] sm:$0xf]
    %v1593 = vld [vmem:[%s1514 + $0x138] sm:$0xf]
    %v1594 = vld [vmem:[%s1514 + $0x13c] sm:$0xf]
    %v1595 = vld [vmem:[%s1514 + $0x140] sm:$0xf]
    %v1596 = vld [vmem:[%s1514 + $0x144] sm:$0xf]
    %v1597 = vld [vmem:[%s1514 + $0x148] sm:$0xf]
    %v1598 = vld [vmem:[%s1514 + $0x14c] sm:$0xf]
    %v1599 = vld [vmem:[%s1514 + $0x150] sm:$0xf]
    %v1600 = vld [vmem:[%s1514 + $0x154] sm:$0xf]
    %v1601 = vld [vmem:[%s1514 + $0x158] sm:$0xf]
    %v1602 = vld [vmem:[%s1514 + $0x15c] sm:$0xf]
    %v1603 = vld [vmem:[%s1514 + $0x160] sm:$0xf]
    %v1604 = vld [vmem:[%s1514 + $0x164] sm:$0xf]
    %v1605 = vld [vmem:[%s1514 + $0x168] sm:$0xf]
    %v1606 = vld [vmem:[%s1514 + $0x16c] sm:$0xf]
    %v1607 = vld [vmem:[%s1514 + $0x170] sm:$0xf]
    %v1608 = vld [vmem:[%s1514 + $0x174] sm:$0xf]
    %v1609 = vld [vmem:[%s1514 + $0x178] sm:$0xf]
    %v1610 = vld [vmem:[%s1514 + $0x17c] sm:$0xf]
    %v1611 = vpack.c.bf16 %v64, %v58
    %v1612 = vpack.c.bf16 %v65, %v59
    %v1613 = vpack.c.bf16 %v66, %v60
    %v1614 = vpack.c.bf16 %v67, %v61
    %v1615 = vpack.c.bf16 %v68, %v62
    %v1616 = vpack.c.bf16 %v69, %v63
    %v1617 = vpack.c.bf16 %v160, %v154
    %v1618 = vpack.c.bf16 %v161, %v155
    %v1619 = vpack.c.bf16 %v162, %v156
    %v1620 = vpack.c.bf16 %v163, %v157
    %v1621 = vpack.c.bf16 %v164, %v158
    %v1622 = vpack.c.bf16 %v165, %v159
    %s1623 = scalar_lea.vmem %s1, 1152
    %v1624 = vld [vmem:[%s1623] sm:$0xf]
    %v1625 = vld [vmem:[%s1623 + $0x4] sm:$0xf]
    %v1626 = vld [vmem:[%s1623 + $0x8] sm:$0xf]
    %v1627 = vld [vmem:[%s1623 + $0xc] sm:$0xf]
    %v1628 = vld [vmem:[%s1623 + $0x10] sm:$0xf]
    %v1629 = vld [vmem:[%s1623 + $0x14] sm:$0xf]
    %v1630 = vld [vmem:[%s1623 + $0x18] sm:$0xf]
    %v1631 = vld [vmem:[%s1623 + $0x1c] sm:$0xf]
    %v1632 = vld [vmem:[%s1623 + $0x20] sm:$0xf]
    %v1633 = vld [vmem:[%s1623 + $0x24] sm:$0xf]
    %v1634 = vld [vmem:[%s1623 + $0x28] sm:$0xf]
    %v1635 = vld [vmem:[%s1623 + $0x2c] sm:$0xf]
    %v1636 = vld [vmem:[%s1623 + $0x30] sm:$0xf]
    %v1637 = vld [vmem:[%s1623 + $0x34] sm:$0xf]
    %v1638 = vld [vmem:[%s1623 + $0x38] sm:$0xf]
    %v1639 = vld [vmem:[%s1623 + $0x3c] sm:$0xf]
    %v1640 = vld [vmem:[%s1623 + $0x40] sm:$0xf]
    %v1641 = vld [vmem:[%s1623 + $0x44] sm:$0xf]
    %v1642 = vld [vmem:[%s1623 + $0x48] sm:$0xf]
    %v1643 = vld [vmem:[%s1623 + $0x4c] sm:$0xf]
    %v1644 = vld [vmem:[%s1623 + $0x50] sm:$0xf]
    %v1645 = vld [vmem:[%s1623 + $0x54] sm:$0xf]
    %v1646 = vld [vmem:[%s1623 + $0x58] sm:$0xf]
    %v1647 = vld [vmem:[%s1623 + $0x5c] sm:$0xf]
    %v1648 = vld [vmem:[%s1623 + $0x60] sm:$0xf]
    %v1649 = vld [vmem:[%s1623 + $0x64] sm:$0xf]
    %v1650 = vld [vmem:[%s1623 + $0x68] sm:$0xf]
    %v1651 = vld [vmem:[%s1623 + $0x6c] sm:$0xf]
    %v1652 = vld [vmem:[%s1623 + $0x70] sm:$0xf]
    %v1653 = vld [vmem:[%s1623 + $0x74] sm:$0xf]
    %v1654 = vld [vmem:[%s1623 + $0x78] sm:$0xf]
    %v1655 = vld [vmem:[%s1623 + $0x7c] sm:$0xf]
    %v1656 = vld [vmem:[%s1623 + $0x80] sm:$0xf]
    %v1657 = vld [vmem:[%s1623 + $0x84] sm:$0xf]
    %v1658 = vld [vmem:[%s1623 + $0x88] sm:$0xf]
    %v1659 = vld [vmem:[%s1623 + $0x8c] sm:$0xf]
    %v1660 = vld [vmem:[%s1623 + $0x90] sm:$0xf]
    %v1661 = vld [vmem:[%s1623 + $0x94] sm:$0xf]
    %v1662 = vld [vmem:[%s1623 + $0x98] sm:$0xf]
    %v1663 = vld [vmem:[%s1623 + $0x9c] sm:$0xf]
    %v1664 = vld [vmem:[%s1623 + $0xa0] sm:$0xf]
    %v1665 = vld [vmem:[%s1623 + $0xa4] sm:$0xf]
    %v1666 = vld [vmem:[%s1623 + $0xa8] sm:$0xf]
    %v1667 = vld [vmem:[%s1623 + $0xac] sm:$0xf]
    %v1668 = vld [vmem:[%s1623 + $0xb0] sm:$0xf]
    %v1669 = vld [vmem:[%s1623 + $0xb4] sm:$0xf]
    %v1670 = vld [vmem:[%s1623 + $0xb8] sm:$0xf]
    %v1671 = vld [vmem:[%s1623 + $0xbc] sm:$0xf]
    %v1672 = vld [vmem:[%s1623 + $0xc0] sm:$0xf]
    %v1673 = vld [vmem:[%s1623 + $0xc4] sm:$0xf]
    %v1674 = vld [vmem:[%s1623 + $0xc8] sm:$0xf]
    %v1675 = vld [vmem:[%s1623 + $0xcc] sm:$0xf]
    %v1676 = vld [vmem:[%s1623 + $0xd0] sm:$0xf]
    %v1677 = vld [vmem:[%s1623 + $0xd4] sm:$0xf]
    %v1678 = vld [vmem:[%s1623 + $0xd8] sm:$0xf]
    %v1679 = vld [vmem:[%s1623 + $0xdc] sm:$0xf]
    %v1680 = vld [vmem:[%s1623 + $0xe0] sm:$0xf]
    %v1681 = vld [vmem:[%s1623 + $0xe4] sm:$0xf]
    %v1682 = vld [vmem:[%s1623 + $0xe8] sm:$0xf]
    %v1683 = vld [vmem:[%s1623 + $0xec] sm:$0xf]
    %v1684 = vld [vmem:[%s1623 + $0xf0] sm:$0xf]
    %v1685 = vld [vmem:[%s1623 + $0xf4] sm:$0xf]
    %v1686 = vld [vmem:[%s1623 + $0xf8] sm:$0xf]
    %v1687 = vld [vmem:[%s1623 + $0xfc] sm:$0xf]
    %v1688 = vld [vmem:[%s1623 + $0x100] sm:$0xf]
    %v1689 = vld [vmem:[%s1623 + $0x104] sm:$0xf]
    %v1690 = vld [vmem:[%s1623 + $0x108] sm:$0xf]
    %v1691 = vld [vmem:[%s1623 + $0x10c] sm:$0xf]
    %v1692 = vld [vmem:[%s1623 + $0x110] sm:$0xf]
    %v1693 = vld [vmem:[%s1623 + $0x114] sm:$0xf]
    %v1694 = vld [vmem:[%s1623 + $0x118] sm:$0xf]
    %v1695 = vld [vmem:[%s1623 + $0x11c] sm:$0xf]
    %v1696 = vld [vmem:[%s1623 + $0x120] sm:$0xf]
    %v1697 = vld [vmem:[%s1623 + $0x124] sm:$0xf]
    %v1698 = vld [vmem:[%s1623 + $0x128] sm:$0xf]
    %v1699 = vld [vmem:[%s1623 + $0x12c] sm:$0xf]
    %v1700 = vld [vmem:[%s1623 + $0x130] sm:$0xf]
    %v1701 = vld [vmem:[%s1623 + $0x134] sm:$0xf]
    %v1702 = vld [vmem:[%s1623 + $0x138] sm:$0xf]
    %v1703 = vld [vmem:[%s1623 + $0x13c] sm:$0xf]
    %v1704 = vld [vmem:[%s1623 + $0x140] sm:$0xf]
    %v1705 = vld [vmem:[%s1623 + $0x144] sm:$0xf]
    %v1706 = vld [vmem:[%s1623 + $0x148] sm:$0xf]
    %v1707 = vld [vmem:[%s1623 + $0x14c] sm:$0xf]
    %v1708 = vld [vmem:[%s1623 + $0x150] sm:$0xf]
    %v1709 = vld [vmem:[%s1623 + $0x154] sm:$0xf]
    %v1710 = vld [vmem:[%s1623 + $0x158] sm:$0xf]
    %v1711 = vld [vmem:[%s1623 + $0x15c] sm:$0xf]
    %v1712 = vld [vmem:[%s1623 + $0x160] sm:$0xf]
    %v1713 = vld [vmem:[%s1623 + $0x164] sm:$0xf]
    %v1714 = vld [vmem:[%s1623 + $0x168] sm:$0xf]
    %v1715 = vld [vmem:[%s1623 + $0x16c] sm:$0xf]
    %v1716 = vld [vmem:[%s1623 + $0x170] sm:$0xf]
    %v1717 = vld [vmem:[%s1623 + $0x174] sm:$0xf]
    %v1718 = vld [vmem:[%s1623 + $0x178] sm:$0xf]
    %v1719 = vld [vmem:[%s1623 + $0x17c] sm:$0xf]
    %v1816 = vunpack.c.l.b16 %v1624
    %v1817 = vunpack.c.l.b16 %v1625
    %v1818 = vunpack.c.l.b16 %v1626
    %v1819 = vunpack.c.l.b16 %v1627
    %v1820 = vunpack.c.l.b16 %v1628
    %v1821 = vunpack.c.l.b16 %v1629
    %v1822 = vunpack.c.l.b16 %v1630
    %v1823 = vunpack.c.l.b16 %v1631
    %v1824 = vunpack.c.l.b16 %v1632
    %v1825 = vunpack.c.l.b16 %v1633
    %v1826 = vunpack.c.l.b16 %v1634
    %v1827 = vunpack.c.l.b16 %v1635
    %v1828 = vunpack.c.l.b16 %v1636
    %v1829 = vunpack.c.l.b16 %v1637
    %v1830 = vunpack.c.l.b16 %v1638
    %v1831 = vunpack.c.l.b16 %v1639
    %v1832 = vunpack.c.l.b16 %v1640
    %v1833 = vunpack.c.l.b16 %v1641
    %v1834 = vunpack.c.l.b16 %v1642
    %v1835 = vunpack.c.l.b16 %v1643
    %v1836 = vunpack.c.l.b16 %v1644
    %v1837 = vunpack.c.l.b16 %v1645
    %v1838 = vunpack.c.l.b16 %v1646
    %v1839 = vunpack.c.l.b16 %v1647
    %v1840 = vunpack.c.l.b16 %v1648
    %v1841 = vunpack.c.l.b16 %v1649
    %v1842 = vunpack.c.l.b16 %v1650
    %v1843 = vunpack.c.l.b16 %v1651
    %v1844 = vunpack.c.l.b16 %v1652
    %v1845 = vunpack.c.l.b16 %v1653
    %v1846 = vunpack.c.l.b16 %v1654
    %v1847 = vunpack.c.l.b16 %v1655
    %v1848 = vunpack.c.l.b16 %v1656
    %v1849 = vunpack.c.l.b16 %v1657
    %v1850 = vunpack.c.l.b16 %v1658
    %v1851 = vunpack.c.l.b16 %v1659
    %v1852 = vunpack.c.l.b16 %v1660
    %v1853 = vunpack.c.l.b16 %v1661
    %v1854 = vunpack.c.l.b16 %v1662
    %v1855 = vunpack.c.l.b16 %v1663
    %v1856 = vunpack.c.l.b16 %v1664
    %v1857 = vunpack.c.l.b16 %v1665
    %v1858 = vunpack.c.l.b16 %v1666
    %v1859 = vunpack.c.l.b16 %v1667
    %v1860 = vunpack.c.l.b16 %v1668
    %v1861 = vunpack.c.l.b16 %v1669
    %v1862 = vunpack.c.l.b16 %v1670
    %v1863 = vunpack.c.l.b16 %v1671
    %v1864 = vunpack.c.l.b16 %v1672
    %v1865 = vunpack.c.l.b16 %v1673
    %v1866 = vunpack.c.l.b16 %v1674
    %v1867 = vunpack.c.l.b16 %v1675
    %v1868 = vunpack.c.l.b16 %v1676
    %v1869 = vunpack.c.l.b16 %v1677
    %v1870 = vunpack.c.l.b16 %v1678
    %v1871 = vunpack.c.l.b16 %v1679
    %v1872 = vunpack.c.l.b16 %v1680
    %v1873 = vunpack.c.l.b16 %v1681
    %v1874 = vunpack.c.l.b16 %v1682
    %v1875 = vunpack.c.l.b16 %v1683
    %v1876 = vunpack.c.l.b16 %v1684
    %v1877 = vunpack.c.l.b16 %v1685
    %v1878 = vunpack.c.l.b16 %v1686
    %v1879 = vunpack.c.l.b16 %v1687
    %v1880 = vunpack.c.l.b16 %v1688
    %v1881 = vunpack.c.l.b16 %v1689
    %v1882 = vunpack.c.l.b16 %v1690
    %v1883 = vunpack.c.l.b16 %v1691
    %v1884 = vunpack.c.l.b16 %v1692
    %v1885 = vunpack.c.l.b16 %v1693
    %v1886 = vunpack.c.l.b16 %v1694
    %v1887 = vunpack.c.l.b16 %v1695
    %v1888 = vunpack.c.l.b16 %v1696
    %v1889 = vunpack.c.l.b16 %v1697
    %v1890 = vunpack.c.l.b16 %v1698
    %v1891 = vunpack.c.l.b16 %v1699
    %v1892 = vunpack.c.l.b16 %v1700
    %v1893 = vunpack.c.l.b16 %v1701
    %v1894 = vunpack.c.l.b16 %v1702
    %v1895 = vunpack.c.l.b16 %v1703
    %v1896 = vunpack.c.l.b16 %v1704
    %v1897 = vunpack.c.l.b16 %v1705
    %v1898 = vunpack.c.l.b16 %v1706
    %v1899 = vunpack.c.l.b16 %v1707
    %v1900 = vunpack.c.l.b16 %v1708
    %v1901 = vunpack.c.l.b16 %v1709
    %v1902 = vunpack.c.l.b16 %v1710
    %v1903 = vunpack.c.l.b16 %v1711
    %v1904 = vunpack.c.l.b16 %v1712
    %v1905 = vunpack.c.l.b16 %v1713
    %v1906 = vunpack.c.l.b16 %v1714
    %v1907 = vunpack.c.l.b16 %v1715
    %v1908 = vunpack.c.l.b16 %v1716
    %v1909 = vunpack.c.l.b16 %v1717
    %v1910 = vunpack.c.l.b16 %v1718
    %v1911 = vunpack.c.l.b16 %v1719
    %v1912 = vpack.c.b16 %v1817, %v1816
    %v1913 = vpack.c.b16 %v1819, %v1818
    %v1914 = vpack.c.b16 %v1821, %v1820
    %v1915 = vpack.c.b16 %v1823, %v1822
    %v1916 = vpack.c.b16 %v1825, %v1824
    %v1917 = vpack.c.b16 %v1827, %v1826
    %v1918 = vpack.c.b16 %v1829, %v1828
    %v1919 = vpack.c.b16 %v1831, %v1830
    %v1920 = vpack.c.b16 %v1833, %v1832
    %v1921 = vpack.c.b16 %v1835, %v1834
    %v1922 = vpack.c.b16 %v1837, %v1836
    %v1923 = vpack.c.b16 %v1839, %v1838
    %v1924 = vpack.c.b16 %v1841, %v1840
    %v1925 = vpack.c.b16 %v1843, %v1842
    %v1926 = vpack.c.b16 %v1845, %v1844
    %v1927 = vpack.c.b16 %v1847, %v1846
    %v1928 = vpack.c.b16 %v1849, %v1848
    %v1929 = vpack.c.b16 %v1851, %v1850
    %v1930 = vpack.c.b16 %v1853, %v1852
    %v1931 = vpack.c.b16 %v1855, %v1854
    %v1932 = vpack.c.b16 %v1857, %v1856
    %v1933 = vpack.c.b16 %v1859, %v1858
    %v1934 = vpack.c.b16 %v1861, %v1860
    %v1935 = vpack.c.b16 %v1863, %v1862
    %v1936 = vpack.c.b16 %v1865, %v1864
    %v1937 = vpack.c.b16 %v1867, %v1866
    %v1938 = vpack.c.b16 %v1869, %v1868
    %v1939 = vpack.c.b16 %v1871, %v1870
    %v1940 = vpack.c.b16 %v1873, %v1872
    %v1941 = vpack.c.b16 %v1875, %v1874
    %v1942 = vpack.c.b16 %v1877, %v1876
    %v1943 = vpack.c.b16 %v1879, %v1878
    %v1944 = vpack.c.b16 %v1881, %v1880
    %v1945 = vpack.c.b16 %v1883, %v1882
    %v1946 = vpack.c.b16 %v1885, %v1884
    %v1947 = vpack.c.b16 %v1887, %v1886
    %v1948 = vpack.c.b16 %v1889, %v1888
    %v1949 = vpack.c.b16 %v1891, %v1890
    %v1950 = vpack.c.b16 %v1893, %v1892
    %v1951 = vpack.c.b16 %v1895, %v1894
    %v1952 = vpack.c.b16 %v1897, %v1896
    %v1953 = vpack.c.b16 %v1899, %v1898
    %v1954 = vpack.c.b16 %v1901, %v1900
    %v1955 = vpack.c.b16 %v1903, %v1902
    %v1956 = vpack.c.b16 %v1905, %v1904
    %v1957 = vpack.c.b16 %v1907, %v1906
    %v1958 = vpack.c.b16 %v1909, %v1908
    %v1959 = vpack.c.b16 %v1911, %v1910
    %2008 = vmatprep.subr.bf16.mxu0 0
    %2009 = vmatpush1.bf16.msra.mxu0 %v1912
    %2010 = vmatprep.subr.bf16.mxu0 0
    %2011 = vmatpush1.bf16.msra.mxu0 %v1913
    %2012 = vmatprep.subr.bf16.mxu0 0
    %2013 = vmatpush1.bf16.msra.mxu0 %v1914
    %2014 = vmatprep.subr.bf16.mxu0 0
    %2015 = vmatpush1.bf16.msra.mxu0 %v1915
    %2016 = vmatprep.subr.bf16.mxu0 0
    %2017 = vmatpush1.bf16.msra.mxu0 %v1916
    %2018 = vmatprep.subr.bf16.mxu0 0
    %2019 = vmatpush1.bf16.msra.mxu0 %v1917
    %2020 = vmatprep.subr.bf16.mxu0 0
    %2021 = vmatpush1.bf16.msra.mxu0 %v1918
    %2022 = vmatprep.subr.bf16.mxu0 0
    %2023 = vmatpush1.bf16.msra.mxu0 %v1919
    %2024 = vmatprep.subr.bf16.mxu0 0
    %2025 = vmatpush1.bf16.msra.mxu0 %v1920
    %2026 = vmatprep.subr.bf16.mxu0 0
    %2027 = vmatpush1.bf16.msra.mxu0 %v1921
    %2028 = vmatprep.subr.bf16.mxu0 0
    %2029 = vmatpush1.bf16.msra.mxu0 %v1922
    %2030 = vmatprep.subr.bf16.mxu0 0
    %2031 = vmatpush1.bf16.msra.mxu0 %v1923
    %2032 = vmatprep.subr.bf16.mxu0 0
    %2033 = vmatpush1.bf16.msra.mxu0 %v1924
    %2034 = vmatprep.subr.bf16.mxu0 0
    %2035 = vmatpush1.bf16.msra.mxu0 %v1925
    %2036 = vmatprep.subr.bf16.mxu0 0
    %2037 = vmatpush1.bf16.msra.mxu0 %v1926
    %2038 = vmatprep.subr.bf16.mxu0 0
    %2039 = vmatpush1.bf16.msra.mxu0 %v1927
    %2040 = vmatprep.mubr.bf16.mxu0 %v1612
    %2041 = vmatmul.mubr.bf16.gmra.mrb[0].mxu0 %v1611
    %v2042 = vpop.f32.mrb[0].mxu0
    %v2043 = vadd.f32 0.0, %v2042
    %v2044 = vpop.f32.mrb[0].mxu0
    %v2045 = vpop.f32.mrb[0].mxu0
    %v2046 = vadd.f32 0.0, %v2045
    %v2047 = vpop.f32.mrb[0].mxu0
    %2048 = vmatprep.mubr.bf16.mxu0 %v1618
    %2049 = vmatmul.mubr.bf16.gmra.mrb[0].mxu0 %v1617
    %v2050 = vpop.f32.mrb[0].mxu0
    %v2051 = vadd.f32 0.0, %v2050
    %v2052 = vpop.f32.mrb[0].mxu0
    %v2053 = vpop.f32.mrb[0].mxu0
    %v2054 = vadd.f32 0.0, %v2053
    %v2055 = vpop.f32.mrb[0].mxu0
    %2056 = vdwg.mxu0
    %2057 = vmatprep.subr.bf16.mxu0 0
    %2058 = vmatpush1.bf16.msra.mxu0 %v1928
    %2059 = vmatprep.subr.bf16.mxu0 0
    %2060 = vmatpush1.bf16.msra.mxu0 %v1929
    %2061 = vmatprep.subr.bf16.mxu0 0
    %2062 = vmatpush1.bf16.msra.mxu0 %v1930
    %2063 = vmatprep.subr.bf16.mxu0 0
    %2064 = vmatpush1.bf16.msra.mxu0 %v1931
    %2065 = vmatprep.subr.bf16.mxu0 0
    %2066 = vmatpush1.bf16.msra.mxu0 %v1932
    %2067 = vmatprep.subr.bf16.mxu0 0
    %2068 = vmatpush1.bf16.msra.mxu0 %v1933
    %2069 = vmatprep.subr.bf16.mxu0 0
    %2070 = vmatpush1.bf16.msra.mxu0 %v1934
    %2071 = vmatprep.subr.bf16.mxu0 0
    %2072 = vmatpush1.bf16.msra.mxu0 %v1935
    %2073 = vmatprep.subr.bf16.mxu0 0
    %2074 = vmatpush1.bf16.msra.mxu0 %v1936
    %2075 = vmatprep.subr.bf16.mxu0 0
    %2076 = vmatpush1.bf16.msra.mxu0 %v1937
    %2077 = vmatprep.subr.bf16.mxu0 0
    %2078 = vmatpush1.bf16.msra.mxu0 %v1938
    %2079 = vmatprep.subr.bf16.mxu0 0
    %2080 = vmatpush1.bf16.msra.mxu0 %v1939
    %2081 = vmatprep.subr.bf16.mxu0 0
    %2082 = vmatpush1.bf16.msra.mxu0 %v1940
    %2083 = vmatprep.subr.bf16.mxu0 0
    %2084 = vmatpush1.bf16.msra.mxu0 %v1941
    %2085 = vmatprep.subr.bf16.mxu0 0
    %2086 = vmatpush1.bf16.msra.mxu0 %v1942
    %2087 = vmatprep.subr.bf16.mxu0 0
    %2088 = vmatpush1.bf16.msra.mxu0 %v1943
    %2089 = vmatprep.mubr.bf16.mxu0 %v1614
    %2090 = vmatmul.mubr.bf16.gmra.mrb[0].mxu0 %v1613
    %v2091 = vpop.f32.mrb[0].mxu0
    %v2092 = vadd.f32 %v2043, %v2091
    %v2093 = vpop.f32.mrb[0].mxu0
    %v2094 = vpop.f32.mrb[0].mxu0
    %v2095 = vadd.f32 %v2046, %v2094
    %v2096 = vpop.f32.mrb[0].mxu0
    %2097 = vmatprep.mubr.bf16.mxu0 %v1620
    %2098 = vmatmul.mubr.bf16.gmra.mrb[0].mxu0 %v1619
    %v2099 = vpop.f32.mrb[0].mxu0
    %v2100 = vadd.f32 %v2051, %v2099
    %v2101 = vpop.f32.mrb[0].mxu0
    %v2102 = vpop.f32.mrb[0].mxu0
    %v2103 = vadd.f32 %v2054, %v2102
    %v2104 = vpop.f32.mrb[0].mxu0
    %2105 = vdwg.mxu0
    %2106 = vmatprep.subr.bf16.mxu0 0
    %2107 = vmatpush1.bf16.msra.mxu0 %v1944
    %2108 = vmatprep.subr.bf16.mxu0 0
    %2109 = vmatpush1.bf16.msra.mxu0 %v1945
    %2110 = vmatprep.subr.bf16.mxu0 0
    %2111 = vmatpush1.bf16.msra.mxu0 %v1946
    %2112 = vmatprep.subr.bf16.mxu0 0
    %2113 = vmatpush1.bf16.msra.mxu0 %v1947
    %2114 = vmatprep.subr.bf16.mxu0 0
    %2115 = vmatpush1.bf16.msra.mxu0 %v1948
    %2116 = vmatprep.subr.bf16.mxu0 0
    %2117 = vmatpush1.bf16.msra.mxu0 %v1949
    %2118 = vmatprep.subr.bf16.mxu0 0
    %2119 = vmatpush1.bf16.msra.mxu0 %v1950
    %2120 = vmatprep.subr.bf16.mxu0 0
    %2121 = vmatpush1.bf16.msra.mxu0 %v1951
    %2122 = vmatprep.subr.bf16.mxu0 0
    %2123 = vmatpush1.bf16.msra.mxu0 %v1952
    %2124 = vmatprep.subr.bf16.mxu0 0
    %2125 = vmatpush1.bf16.msra.mxu0 %v1953
    %2126 = vmatprep.subr.bf16.mxu0 0
    %2127 = vmatpush1.bf16.msra.mxu0 %v1954
    %2128 = vmatprep.subr.bf16.mxu0 0
    %2129 = vmatpush1.bf16.msra.mxu0 %v1955
    %2130 = vmatprep.subr.bf16.mxu0 0
    %2131 = vmatpush1.bf16.msra.mxu0 %v1956
    %2132 = vmatprep.subr.bf16.mxu0 0
    %2133 = vmatpush1.bf16.msra.mxu0 %v1957
    %2134 = vmatprep.subr.bf16.mxu0 0
    %2135 = vmatpush1.bf16.msra.mxu0 %v1958
    %2136 = vmatprep.subr.bf16.mxu0 0
    %2137 = vmatpush1.bf16.msra.mxu0 %v1959
    %2138 = vmatprep.mubr.bf16.mxu0 %v1616
    %2139 = vmatmul.mubr.bf16.gmra.mrb[0].mxu0 %v1615
    %v2140 = vpop.f32.mrb[0].mxu0
    %v2141 = vadd.f32 %v2092, %v2140
    %v2142 = vpop.f32.mrb[0].mxu0
    %v2143 = vpop.f32.mrb[0].mxu0
    %v2144 = vadd.f32 %v2095, %v2143
    %v2145 = vpop.f32.mrb[0].mxu0
    %2146 = vmatprep.mubr.bf16.mxu0 %v1622
    %2147 = vmatmul.mubr.bf16.gmra.mrb[0].mxu0 %v1621
    %v2148 = vpop.f32.mrb[0].mxu0
    %v2149 = vadd.f32 %v2100, %v2148
    %v2150 = vpop.f32.mrb[0].mxu0
    %v2151 = vpop.f32.mrb[0].mxu0
    %v2152 = vadd.f32 %v2103, %v2151
    %v2153 = vpop.f32.mrb[0].mxu0
    %2154 = vdwg.mxu0
    %v2251 = vunpack.c.l.b16 %v1515
    %v2252 = vunpack.c.l.b16 %v1516
    %v2253 = vunpack.c.l.b16 %v1517
    %v2254 = vunpack.c.l.b16 %v1518
    %v2255 = vunpack.c.l.b16 %v1519
    %v2256 = vunpack.c.l.b16 %v1520
    %v2257 = vunpack.c.l.b16 %v1521
    %v2258 = vunpack.c.l.b16 %v1522
    %v2259 = vunpack.c.l.b16 %v1523
    %v2260 = vunpack.c.l.b16 %v1524
    %v2261 = vunpack.c.l.b16 %v1525
    %v2262 = vunpack.c.l.b16 %v1526
    %v2263 = vunpack.c.l.b16 %v1527
    %v2264 = vunpack.c.l.b16 %v1528
    %v2265 = vunpack.c.l.b16 %v1529
    %v2266 = vunpack.c.l.b16 %v1530
    %v2267 = vunpack.c.l.b16 %v1531
    %v2268 = vunpack.c.l.b16 %v1532
    %v2269 = vunpack.c.l.b16 %v1533
    %v2270 = vunpack.c.l.b16 %v1534
    %v2271 = vunpack.c.l.b16 %v1535
    %v2272 = vunpack.c.l.b16 %v1536
    %v2273 = vunpack.c.l.b16 %v1537
    %v2274 = vunpack.c.l.b16 %v1538
    %v2275 = vunpack.c.l.b16 %v1539
    %v2276 = vunpack.c.l.b16 %v1540
    %v2277 = vunpack.c.l.b16 %v1541
    %v2278 = vunpack.c.l.b16 %v1542
    %v2279 = vunpack.c.l.b16 %v1543
    %v2280 = vunpack.c.l.b16 %v1544
    %v2281 = vunpack.c.l.b16 %v1545
    %v2282 = vunpack.c.l.b16 %v1546
    %v2283 = vunpack.c.l.b16 %v1547
    %v2284 = vunpack.c.l.b16 %v1548
    %v2285 = vunpack.c.l.b16 %v1549
    %v2286 = vunpack.c.l.b16 %v1550
    %v2287 = vunpack.c.l.b16 %v1551
    %v2288 = vunpack.c.l.b16 %v1552
    %v2289 = vunpack.c.l.b16 %v1553
    %v2290 = vunpack.c.l.b16 %v1554
    %v2291 = vunpack.c.l.b16 %v1555
    %v2292 = vunpack.c.l.b16 %v1556
    %v2293 = vunpack.c.l.b16 %v1557
    %v2294 = vunpack.c.l.b16 %v1558
    %v2295 = vunpack.c.l.b16 %v1559
    %v2296 = vunpack.c.l.b16 %v1560
    %v2297 = vunpack.c.l.b16 %v1561
    %v2298 = vunpack.c.l.b16 %v1562
    %v2299 = vunpack.c.l.b16 %v1563
    %v2300 = vunpack.c.l.b16 %v1564
    %v2301 = vunpack.c.l.b16 %v1565
    %v2302 = vunpack.c.l.b16 %v1566
    %v2303 = vunpack.c.l.b16 %v1567
    %v2304 = vunpack.c.l.b16 %v1568
    %v2305 = vunpack.c.l.b16 %v1569
    %v2306 = vunpack.c.l.b16 %v1570
    %v2307 = vunpack.c.l.b16 %v1571
    %v2308 = vunpack.c.l.b16 %v1572
    %v2309 = vunpack.c.l.b16 %v1573
    %v2310 = vunpack.c.l.b16 %v1574
    %v2311 = vunpack.c.l.b16 %v1575
    %v2312 = vunpack.c.l.b16 %v1576
    %v2313 = vunpack.c.l.b16 %v1577
    %v2314 = vunpack.c.l.b16 %v1578
    %v2315 = vunpack.c.l.b16 %v1579
    %v2316 = vunpack.c.l.b16 %v1580
    %v2317 = vunpack.c.l.b16 %v1581
    %v2318 = vunpack.c.l.b16 %v1582
    %v2319 = vunpack.c.l.b16 %v1583
    %v2320 = vunpack.c.l.b16 %v1584
    %v2321 = vunpack.c.l.b16 %v1585
    %v2322 = vunpack.c.l.b16 %v1586
    %v2323 = vunpack.c.l.b16 %v1587
    %v2324 = vunpack.c.l.b16 %v1588
    %v2325 = vunpack.c.l.b16 %v1589
    %v2326 = vunpack.c.l.b16 %v1590
    %v2327 = vunpack.c.l.b16 %v1591
    %v2328 = vunpack.c.l.b16 %v1592
    %v2329 = vunpack.c.l.b16 %v1593
    %v2330 = vunpack.c.l.b16 %v1594
    %v2331 = vunpack.c.l.b16 %v1595
    %v2332 = vunpack.c.l.b16 %v1596
    %v2333 = vunpack.c.l.b16 %v1597
    %v2334 = vunpack.c.l.b16 %v1598
    %v2335 = vunpack.c.l.b16 %v1599
    %v2336 = vunpack.c.l.b16 %v1600
    %v2337 = vunpack.c.l.b16 %v1601
    %v2338 = vunpack.c.l.b16 %v1602
    %v2339 = vunpack.c.l.b16 %v1603
    %v2340 = vunpack.c.l.b16 %v1604
    %v2341 = vunpack.c.l.b16 %v1605
    %v2342 = vunpack.c.l.b16 %v1606
    %v2343 = vunpack.c.l.b16 %v1607
    %v2344 = vunpack.c.l.b16 %v1608
    %v2345 = vunpack.c.l.b16 %v1609
    %v2346 = vunpack.c.l.b16 %v1610
    %v2347 = vpack.c.b16 %v2252, %v2251
    %v2348 = vpack.c.b16 %v2254, %v2253
    %v2349 = vpack.c.b16 %v2256, %v2255
    %v2350 = vpack.c.b16 %v2258, %v2257
    %v2351 = vpack.c.b16 %v2260, %v2259
    %v2352 = vpack.c.b16 %v2262, %v2261
    %v2353 = vpack.c.b16 %v2264, %v2263
    %v2354 = vpack.c.b16 %v2266, %v2265
    %v2355 = vpack.c.b16 %v2268, %v2267
    %v2356 = vpack.c.b16 %v2270, %v2269
    %v2357 = vpack.c.b16 %v2272, %v2271
    %v2358 = vpack.c.b16 %v2274, %v2273
    %v2359 = vpack.c.b16 %v2276, %v2275
    %v2360 = vpack.c.b16 %v2278, %v2277
    %v2361 = vpack.c.b16 %v2280, %v2279
    %v2362 = vpack.c.b16 %v2282, %v2281
    %v2363 = vpack.c.b16 %v2284, %v2283
    %v2364 = vpack.c.b16 %v2286, %v2285
    %v2365 = vpack.c.b16 %v2288, %v2287
    %v2366 = vpack.c.b16 %v2290, %v2289
    %v2367 = vpack.c.b16 %v2292, %v2291
    %v2368 = vpack.c.b16 %v2294, %v2293
    %v2369 = vpack.c.b16 %v2296, %v2295
    %v2370 = vpack.c.b16 %v2298, %v2297
    %v2371 = vpack.c.b16 %v2300, %v2299
    %v2372 = vpack.c.b16 %v2302, %v2301
    %v2373 = vpack.c.b16 %v2304, %v2303
    %v2374 = vpack.c.b16 %v2306, %v2305
    %v2375 = vpack.c.b16 %v2308, %v2307
    %v2376 = vpack.c.b16 %v2310, %v2309
    %v2377 = vpack.c.b16 %v2312, %v2311
    %v2378 = vpack.c.b16 %v2314, %v2313
    %v2379 = vpack.c.b16 %v2316, %v2315
    %v2380 = vpack.c.b16 %v2318, %v2317
    %v2381 = vpack.c.b16 %v2320, %v2319
    %v2382 = vpack.c.b16 %v2322, %v2321
    %v2383 = vpack.c.b16 %v2324, %v2323
    %v2384 = vpack.c.b16 %v2326, %v2325
    %v2385 = vpack.c.b16 %v2328, %v2327
    %v2386 = vpack.c.b16 %v2330, %v2329
    %v2387 = vpack.c.b16 %v2332, %v2331
    %v2388 = vpack.c.b16 %v2334, %v2333
    %v2389 = vpack.c.b16 %v2336, %v2335
    %v2390 = vpack.c.b16 %v2338, %v2337
    %v2391 = vpack.c.b16 %v2340, %v2339
    %v2392 = vpack.c.b16 %v2342, %v2341
    %v2393 = vpack.c.b16 %v2344, %v2343
    %v2394 = vpack.c.b16 %v2346, %v2345
    %2443 = vmatprep.subr.bf16.mxu0 0
    %2444 = vmatpush1.bf16.msra.mxu0 %v2347
    %2445 = vmatprep.subr.bf16.mxu0 0
    %2446 = vmatpush1.bf16.msra.mxu0 %v2348
    %2447 = vmatprep.subr.bf16.mxu0 0
    %2448 = vmatpush1.bf16.msra.mxu0 %v2349
    %2449 = vmatprep.subr.bf16.mxu0 0
    %2450 = vmatpush1.bf16.msra.mxu0 %v2350
    %2451 = vmatprep.subr.bf16.mxu0 0
    %2452 = vmatpush1.bf16.msra.mxu0 %v2351
    %2453 = vmatprep.subr.bf16.mxu0 0
    %2454 = vmatpush1.bf16.msra.mxu0 %v2352
    %2455 = vmatprep.subr.bf16.mxu0 0
    %2456 = vmatpush1.bf16.msra.mxu0 %v2353
    %2457 = vmatprep.subr.bf16.mxu0 0
    %2458 = vmatpush1.bf16.msra.mxu0 %v2354
    %2459 = vmatprep.subr.bf16.mxu0 0
    %2460 = vmatpush1.bf16.msra.mxu0 %v2355
    %2461 = vmatprep.subr.bf16.mxu0 0
    %2462 = vmatpush1.bf16.msra.mxu0 %v2356
    %2463 = vmatprep.subr.bf16.mxu0 0
    %2464 = vmatpush1.bf16.msra.mxu0 %v2357
    %2465 = vmatprep.subr.bf16.mxu0 0
    %2466 = vmatpush1.bf16.msra.mxu0 %v2358
    %2467 = vmatprep.subr.bf16.mxu0 0
    %2468 = vmatpush1.bf16.msra.mxu0 %v2359
    %2469 = vmatprep.subr.bf16.mxu0 0
    %2470 = vmatpush1.bf16.msra.mxu0 %v2360
    %2471 = vmatprep.subr.bf16.mxu0 0
    %2472 = vmatpush1.bf16.msra.mxu0 %v2361
    %2473 = vmatprep.subr.bf16.mxu0 0
    %2474 = vmatpush1.bf16.msra.mxu0 %v2362
    %2475 = vmatprep.mubr.bf16.mxu0 %v1503
    %2476 = vmatmul.mubr.bf16.gmra.mrb[0].mxu0 %v1502
    %v2477 = vpop.f32.mrb[0].mxu0
    %v2478 = vadd.f32 %v2141, %v2477
    %v2479 = vpop.f32.mrb[0].mxu0
    %v2480 = vpop.f32.mrb[0].mxu0
    %v2481 = vadd.f32 %v2144, %v2480
    %v2482 = vpop.f32.mrb[0].mxu0
    %2483 = vmatprep.mubr.bf16.mxu0 %v1509
    %2484 = vmatmul.mubr.bf16.gmra.mrb[0].mxu0 %v1508
    %v2485 = vpop.f32.mrb[0].mxu0
    %v2486 = vadd.f32 %v2149, %v2485
    %v2487 = vpop.f32.mrb[0].mxu0
    %v2488 = vpop.f32.mrb[0].mxu0
    %v2489 = vadd.f32 %v2152, %v2488
    %v2490 = vpop.f32.mrb[0].mxu0
    %2491 = vdwg.mxu0
    %2492 = vmatprep.subr.bf16.mxu0 0
    %2493 = vmatpush1.bf16.msra.mxu0 %v2363
    %2494 = vmatprep.subr.bf16.mxu0 0
    %2495 = vmatpush1.bf16.msra.mxu0 %v2364
    %2496 = vmatprep.subr.bf16.mxu0 0
    %2497 = vmatpush1.bf16.msra.mxu0 %v2365
    %2498 = vmatprep.subr.bf16.mxu0 0
    %2499 = vmatpush1.bf16.msra.mxu0 %v2366
    %2500 = vmatprep.subr.bf16.mxu0 0
    %2501 = vmatpush1.bf16.msra.mxu0 %v2367
    %2502 = vmatprep.subr.bf16.mxu0 0
    %2503 = vmatpush1.bf16.msra.mxu0 %v2368
    %2504 = vmatprep.subr.bf16.mxu0 0
    %2505 = vmatpush1.bf16.msra.mxu0 %v2369
    %2506 = vmatprep.subr.bf16.mxu0 0
    %2507 = vmatpush1.bf16.msra.mxu0 %v2370
    %2508 = vmatprep.subr.bf16.mxu0 0
    %2509 = vmatpush1.bf16.msra.mxu0 %v2371
    %2510 = vmatprep.subr.bf16.mxu0 0
    %2511 = vmatpush1.bf16.msra.mxu0 %v2372
    %2512 = vmatprep.subr.bf16.mxu0 0
    %2513 = vmatpush1.bf16.msra.mxu0 %v2373
    %2514 = vmatprep.subr.bf16.mxu0 0
    %2515 = vmatpush1.bf16.msra.mxu0 %v2374
    %2516 = vmatprep.subr.bf16.mxu0 0
    %2517 = vmatpush1.bf16.msra.mxu0 %v2375
    %2518 = vmatprep.subr.bf16.mxu0 0
    %2519 = vmatpush1.bf16.msra.mxu0 %v2376
    %2520 = vmatprep.subr.bf16.mxu0 0
    %2521 = vmatpush1.bf16.msra.mxu0 %v2377
    %2522 = vmatprep.subr.bf16.mxu0 0
    %2523 = vmatpush1.bf16.msra.mxu0 %v2378
    %2524 = vmatprep.mubr.bf16.mxu0 %v1505
    %2525 = vmatmul.mubr.bf16.gmra.mrb[0].mxu0 %v1504
    %v2526 = vpop.f32.mrb[0].mxu0
    %v2527 = vadd.f32 %v2478, %v2526
    %v2528 = vpop.f32.mrb[0].mxu0
    %v2529 = vpop.f32.mrb[0].mxu0
    %v2530 = vadd.f32 %v2481, %v2529
    %v2531 = vpop.f32.mrb[0].mxu0
    %2532 = vmatprep.mubr.bf16.mxu0 %v1511
    %2533 = vmatmul.mubr.bf16.gmra.mrb[0].mxu0 %v1510
    %v2534 = vpop.f32.mrb[0].mxu0
    %v2535 = vadd.f32 %v2486, %v2534
    %v2536 = vpop.f32.mrb[0].mxu0
    %v2537 = vpop.f32.mrb[0].mxu0
    %v2538 = vadd.f32 %v2489, %v2537
    %v2539 = vpop.f32.mrb[0].mxu0
    %2540 = vdwg.mxu0
    %2541 = vmatprep.subr.bf16.mxu0 0
    %2542 = vmatpush1.bf16.msra.mxu0 %v2379
    %2543 = vmatprep.subr.bf16.mxu0 0
    %2544 = vmatpush1.bf16.msra.mxu0 %v2380
    %2545 = vmatprep.subr.bf16.mxu0 0
    %2546 = vmatpush1.bf16.msra.mxu0 %v2381
    %2547 = vmatprep.subr.bf16.mxu0 0
    %2548 = vmatpush1.bf16.msra.mxu0 %v2382
    %2549 = vmatprep.subr.bf16.mxu0 0
    %2550 = vmatpush1.bf16.msra.mxu0 %v2383
    %2551 = vmatprep.subr.bf16.mxu0 0
    %2552 = vmatpush1.bf16.msra.mxu0 %v2384
    %2553 = vmatprep.subr.bf16.mxu0 0
    %2554 = vmatpush1.bf16.msra.mxu0 %v2385
    %2555 = vmatprep.subr.bf16.mxu0 0
    %2556 = vmatpush1.bf16.msra.mxu0 %v2386
    %2557 = vmatprep.subr.bf16.mxu0 0
    %2558 = vmatpush1.bf16.msra.mxu0 %v2387
    %2559 = vmatprep.subr.bf16.mxu0 0
    %2560 = vmatpush1.bf16.msra.mxu0 %v2388
    %2561 = vmatprep.subr.bf16.mxu0 0
    %2562 = vmatpush1.bf16.msra.mxu0 %v2389
    %2563 = vmatprep.subr.bf16.mxu0 0
    %2564 = vmatpush1.bf16.msra.mxu0 %v2390
    %2565 = vmatprep.subr.bf16.mxu0 0
    %2566 = vmatpush1.bf16.msra.mxu0 %v2391
    %2567 = vmatprep.subr.bf16.mxu0 0
    %2568 = vmatpush1.bf16.msra.mxu0 %v2392
    %2569 = vmatprep.subr.bf16.mxu0 0
    %2570 = vmatpush1.bf16.msra.mxu0 %v2393
    %2571 = vmatprep.subr.bf16.mxu0 0
    %2572 = vmatpush1.bf16.msra.mxu0 %v2394
    %2573 = vmatprep.mubr.bf16.mxu0 %v1507
    %2574 = vmatmul.mubr.bf16.gmra.mrb[0].mxu0 %v1506
    %v2575 = vpop.f32.mrb[0].mxu0
    %v2576 = vadd.f32 %v2527, %v2575
    %v2577 = vpop.f32.mrb[0].mxu0
    %v2578 = vpop.f32.mrb[0].mxu0
    %v2579 = vadd.f32 %v2530, %v2578
    %v2580 = vpop.f32.mrb[0].mxu0
    %2581 = vmatprep.mubr.bf16.mxu0 %v1513
    %2582 = vmatmul.mubr.bf16.gmra.mrb[0].mxu0 %v1512
    %v2583 = vpop.f32.mrb[0].mxu0
    %v2584 = vadd.f32 %v2535, %v2583
    %v2585 = vpop.f32.mrb[0].mxu0
    %v2586 = vpop.f32.mrb[0].mxu0
    %v2587 = vadd.f32 %v2538, %v2586
    %v2588 = vpop.f32.mrb[0].mxu0
    %2589 = vdwg.mxu0
    %v2594 = vrot.slane %v2576, 1
    %v2595 = vrot.slane %v2579, 1
    %v2596 = vsel %vm1306, %v2594, %v2595
    %v2597 = vrot.slane %v2584, 1
    %v2598 = vrot.slane %v2587, 1
    %v2599 = vsel %vm1306, %v2597, %v2598
    %2600 = vrot.lane.b32.xlu0 %v2596, 126
    %v2601 = vpop.permute.xlu0 %2600
    %2602 = vrot.lane.b32.xlu0 %v2595, 126
    %v2603 = vpop.permute.xlu0 %2602
    %2604 = vrot.lane.b32.xlu0 %v2599, 126
    %v2605 = vpop.permute.xlu0 %2604
    %2606 = vrot.lane.b32.xlu0 %v2598, 126
    %v2607 = vpop.permute.xlu0 %2606
    %v2612 = vadd.f32 %v2576, %v2601
    %v2613 = vadd.f32 %v2579, %v2603
    %v2614 = vadd.f32 %v2584, %v2605
    %v2615 = vadd.f32 %v2587, %v2607
    %v2616 = vrot.slane %v2576, 2
    %v2617 = vrot.slane %v2579, 2
    %v2618 = vsel %vm1329, %v2616, %v2617
    %v2619 = vrot.slane %v2584, 2
    %v2620 = vrot.slane %v2587, 2
    %v2621 = vsel %vm1329, %v2619, %v2620
    %2622 = vrot.lane.b32.xlu0 %v2618, 124
    %v2623 = vpop.permute.xlu0 %2622
    %2624 = vrot.lane.b32.xlu0 %v2617, 124
    %v2625 = vpop.permute.xlu0 %2624
    %2626 = vrot.lane.b32.xlu0 %v2621, 124
    %v2627 = vpop.permute.xlu0 %2626
    %2628 = vrot.lane.b32.xlu0 %v2620, 124
    %v2629 = vpop.permute.xlu0 %2628
    %v2634 = vadd.f32 %v2612, %v2623
    %v2635 = vadd.f32 %v2613, %v2625
    %v2636 = vadd.f32 %v2614, %v2627
    %v2637 = vadd.f32 %v2615, %v2629
    %2639 = vrot.lane.b32.xlu0 %v1355, 126
    %v2640 = vpop.permute.xlu0 %2639
    %v2642 = vadd.f32 %v2634, %v2640
    %v2643 = vadd.f32 %v2635, %v2640
    %v2644 = vadd.f32 %v2636, %v2640
    %v2645 = vadd.f32 %v2637, %v2640
    %v2646 = vmax.f32 %v2642, 0.0
    %v2647 = vmax.f32 %v2643, 0.0
    %v2648 = vmax.f32 %v2644, 0.0
    %v2649 = vmax.f32 %v2645, 0.0
    %v2650 = vsel %vm1364, %v2646, -inf
    %v2651 = vsel %vm1366, %v2647, -inf
    %v2652 = vmax.f32 %v2650, %v2651
    %v2653 = vrot.slane %v2652, 4
    %v2654 = vmax.f32 %v2652, %v2653
    %v2655 = vrot.slane %v2654, 2
    %v2656 = vmax.f32 %v2654, %v2655
    %v2657 = vrot.slane %v2656, 1
    %v2658 = vmax.f32 %v2656, %v2657
    %v2659 = vsel %vm1364, %v2648, -inf
    %v2660 = vsel %vm1366, %v2649, -inf
    %v2661 = vmax.f32 %v2659, %v2660
    %v2662 = vrot.slane %v2661, 4
    %v2663 = vmax.f32 %v2661, %v2662
    %v2664 = vrot.slane %v2663, 2
    %v2665 = vmax.f32 %v2663, %v2664
    %v2666 = vrot.slane %v2665, 1
    %v2667 = vmax.f32 %v2665, %v2666
    %v2668 = vrot.slane %v2576, 3
    %v2669 = vrot.slane %v2579, 3
    %v2670 = vsel %vm1384, %v2668, %v2669
    %v2671 = vrot.slane %v2584, 3
    %v2672 = vrot.slane %v2587, 3
    %v2673 = vsel %vm1384, %v2671, %v2672
    %2674 = vrot.lane.b32.xlu0 %v2670, 122
    %v2675 = vpop.permute.xlu0 %2674
    %2676 = vrot.lane.b32.xlu0 %v2669, 122
    %v2677 = vpop.permute.xlu0 %2676
    %2678 = vrot.lane.b32.xlu0 %v2673, 122
    %v2679 = vpop.permute.xlu0 %2678
    %2680 = vrot.lane.b32.xlu0 %v2672, 122
    %v2681 = vpop.permute.xlu0 %2680
    %v2686 = vadd.f32 %v2634, %v2675
    %v2687 = vadd.f32 %v2635, %v2677
    %v2688 = vadd.f32 %v2636, %v2679
    %v2689 = vadd.f32 %v2637, %v2681
    %2690 = vrot.lane.b32.xlu0 %v1410, 4
    %v2691 = vpop.permute.xlu0 %2690
    %v2693 = vadd.f32 %v2686, %v2691
    %v2694 = vadd.f32 %v2687, %v2691
    %v2695 = vadd.f32 %v2688, %v2691
    %v2696 = vadd.f32 %v2689, %v2691
    %v2697 = vmax.f32 %v2693, 0.0
    %v2698 = vmax.f32 %v2694, 0.0
    %v2699 = vmax.f32 %v2695, 0.0
    %v2700 = vmax.f32 %v2696, 0.0
    %v2701 = vsel %vm1423, %v2697, -inf
    %v2702 = vsel %vm1425, %v2698, -inf
    %v2703 = vmax.f32 %v2701, %v2702
    %v2704 = vrot.slane %v2703, 4
    %v2705 = vmax.f32 %v2703, %v2704
    %v2706 = vrot.slane %v2705, 2
    %v2707 = vmax.f32 %v2705, %v2706
    %v2708 = vrot.slane %v2707, 1
    %v2709 = vmax.f32 %v2707, %v2708
    %v2710 = vsel %vm1423, %v2699, -inf
    %v2711 = vsel %vm1425, %v2700, -inf
    %v2712 = vmax.f32 %v2710, %v2711
    %v2713 = vrot.slane %v2712, 4
    %v2714 = vmax.f32 %v2712, %v2713
    %v2715 = vrot.slane %v2714, 2
    %v2716 = vmax.f32 %v2714, %v2715
    %v2717 = vrot.slane %v2716, 1
    %v2718 = vmax.f32 %v2716, %v2717
    %v2719 = vrot.slane %v2576, 4
    %v2720 = vrot.slane %v2579, 4
    %v2721 = vsel %vm1443, %v2719, %v2720
    %v2722 = vrot.slane %v2584, 4
    %v2723 = vrot.slane %v2587, 4
    %v2724 = vsel %vm1443, %v2722, %v2723
    %2725 = vrot.lane.b32.xlu0 %v2721, 120
    %v2726 = vpop.permute.xlu0 %2725
    %2727 = vrot.lane.b32.xlu0 %v2720, 120
    %v2728 = vpop.permute.xlu0 %2727
    %2729 = vrot.lane.b32.xlu0 %v2724, 120
    %v2730 = vpop.permute.xlu0 %2729
    %2731 = vrot.lane.b32.xlu0 %v2723, 120
    %v2732 = vpop.permute.xlu0 %2731
    %v2737 = vadd.f32 %v2686, %v2726
    %v2738 = vadd.f32 %v2687, %v2728
    %v2739 = vadd.f32 %v2688, %v2730
    %v2740 = vadd.f32 %v2689, %v2732
    %2741 = vrot.lane.b32.xlu0 %v1469, 12
    %v2742 = vpop.permute.xlu0 %2741
    %v2744 = vadd.f32 %v2737, %v2742
    %v2745 = vadd.f32 %v2738, %v2742
    %v2746 = vadd.f32 %v2739, %v2742
    %v2747 = vadd.f32 %v2740, %v2742
    %v2748 = vmax.f32 %v2744, 0.0
    %v2749 = vmax.f32 %v2745, 0.0
    %v2750 = vmax.f32 %v2746, 0.0
    %v2751 = vmax.f32 %v2747, 0.0
    %v2752 = vsel %vm1482, %v2748, -inf
    %v2753 = vsel %vm1484, %v2749, -inf
    %v2754 = vmax.f32 %v2752, %v2753
    %v2755 = vrot.slane %v2754, 4
    %v2756 = vmax.f32 %v2754, %v2755
    %v2757 = vrot.slane %v2756, 2
    %v2758 = vmax.f32 %v2756, %v2757
    %v2759 = vrot.slane %v2758, 1
    %v2760 = vmax.f32 %v2758, %v2759
    %v2761 = vsel %vm1482, %v2750, -inf
    %v2762 = vsel %vm1484, %v2751, -inf
    %v2763 = vmax.f32 %v2761, %v2762
    %v2764 = vrot.slane %v2763, 4
    %v2765 = vmax.f32 %v2763, %v2764
    %v2766 = vrot.slane %v2765, 2
    %v2767 = vmax.f32 %v2765, %v2766
    %v2768 = vrot.slane %v2767, 1
    %v2769 = vmax.f32 %v2767, %v2768
    %v2770 = vpack.c.bf16 %v76, %v70
    %v2771 = vpack.c.bf16 %v77, %v71
    %v2772 = vpack.c.bf16 %v78, %v72
    %v2773 = vpack.c.bf16 %v79, %v73
    %v2774 = vpack.c.bf16 %v80, %v74
    %v2775 = vpack.c.bf16 %v81, %v75
    %v2776 = vpack.c.bf16 %v172, %v166
    %v2777 = vpack.c.bf16 %v173, %v167
    %v2778 = vpack.c.bf16 %v174, %v168
    %v2779 = vpack.c.bf16 %v175, %v169
    %v2780 = vpack.c.bf16 %v176, %v170
    %v2781 = vpack.c.bf16 %v177, %v171
    %s2782 = scalar_lea.vmem %s1, 1536
    %v2783 = vld [vmem:[%s2782] sm:$0xf]
    %v2784 = vld [vmem:[%s2782 + $0x4] sm:$0xf]
    %v2785 = vld [vmem:[%s2782 + $0x8] sm:$0xf]
    %v2786 = vld [vmem:[%s2782 + $0xc] sm:$0xf]
    %v2787 = vld [vmem:[%s2782 + $0x10] sm:$0xf]
    %v2788 = vld [vmem:[%s2782 + $0x14] sm:$0xf]
    %v2789 = vld [vmem:[%s2782 + $0x18] sm:$0xf]
    %v2790 = vld [vmem:[%s2782 + $0x1c] sm:$0xf]
    %v2791 = vld [vmem:[%s2782 + $0x20] sm:$0xf]
    %v2792 = vld [vmem:[%s2782 + $0x24] sm:$0xf]
    %v2793 = vld [vmem:[%s2782 + $0x28] sm:$0xf]
    %v2794 = vld [vmem:[%s2782 + $0x2c] sm:$0xf]
    %v2795 = vld [vmem:[%s2782 + $0x30] sm:$0xf]
    %v2796 = vld [vmem:[%s2782 + $0x34] sm:$0xf]
    %v2797 = vld [vmem:[%s2782 + $0x38] sm:$0xf]
    %v2798 = vld [vmem:[%s2782 + $0x3c] sm:$0xf]
    %v2799 = vld [vmem:[%s2782 + $0x40] sm:$0xf]
    %v2800 = vld [vmem:[%s2782 + $0x44] sm:$0xf]
    %v2801 = vld [vmem:[%s2782 + $0x48] sm:$0xf]
    %v2802 = vld [vmem:[%s2782 + $0x4c] sm:$0xf]
    %v2803 = vld [vmem:[%s2782 + $0x50] sm:$0xf]
    %v2804 = vld [vmem:[%s2782 + $0x54] sm:$0xf]
    %v2805 = vld [vmem:[%s2782 + $0x58] sm:$0xf]
    %v2806 = vld [vmem:[%s2782 + $0x5c] sm:$0xf]
    %v2807 = vld [vmem:[%s2782 + $0x60] sm:$0xf]
    %v2808 = vld [vmem:[%s2782 + $0x64] sm:$0xf]
    %v2809 = vld [vmem:[%s2782 + $0x68] sm:$0xf]
    %v2810 = vld [vmem:[%s2782 + $0x6c] sm:$0xf]
    %v2811 = vld [vmem:[%s2782 + $0x70] sm:$0xf]
    %v2812 = vld [vmem:[%s2782 + $0x74] sm:$0xf]
    %v2813 = vld [vmem:[%s2782 + $0x78] sm:$0xf]
    %v2814 = vld [vmem:[%s2782 + $0x7c] sm:$0xf]
    %v2815 = vld [vmem:[%s2782 + $0x80] sm:$0xf]
    %v2816 = vld [vmem:[%s2782 + $0x84] sm:$0xf]
    %v2817 = vld [vmem:[%s2782 + $0x88] sm:$0xf]
    %v2818 = vld [vmem:[%s2782 + $0x8c] sm:$0xf]
    %v2819 = vld [vmem:[%s2782 + $0x90] sm:$0xf]
    %v2820 = vld [vmem:[%s2782 + $0x94] sm:$0xf]
    %v2821 = vld [vmem:[%s2782 + $0x98] sm:$0xf]
    %v2822 = vld [vmem:[%s2782 + $0x9c] sm:$0xf]
    %v2823 = vld [vmem:[%s2782 + $0xa0] sm:$0xf]
    %v2824 = vld [vmem:[%s2782 + $0xa4] sm:$0xf]
    %v2825 = vld [vmem:[%s2782 + $0xa8] sm:$0xf]
    %v2826 = vld [vmem:[%s2782 + $0xac] sm:$0xf]
    %v2827 = vld [vmem:[%s2782 + $0xb0] sm:$0xf]
    %v2828 = vld [vmem:[%s2782 + $0xb4] sm:$0xf]
    %v2829 = vld [vmem:[%s2782 + $0xb8] sm:$0xf]
    %v2830 = vld [vmem:[%s2782 + $0xbc] sm:$0xf]
    %v2831 = vld [vmem:[%s2782 + $0xc0] sm:$0xf]
    %v2832 = vld [vmem:[%s2782 + $0xc4] sm:$0xf]
    %v2833 = vld [vmem:[%s2782 + $0xc8] sm:$0xf]
    %v2834 = vld [vmem:[%s2782 + $0xcc] sm:$0xf]
    %v2835 = vld [vmem:[%s2782 + $0xd0] sm:$0xf]
    %v2836 = vld [vmem:[%s2782 + $0xd4] sm:$0xf]
    %v2837 = vld [vmem:[%s2782 + $0xd8] sm:$0xf]
    %v2838 = vld [vmem:[%s2782 + $0xdc] sm:$0xf]
    %v2839 = vld [vmem:[%s2782 + $0xe0] sm:$0xf]
    %v2840 = vld [vmem:[%s2782 + $0xe4] sm:$0xf]
    %v2841 = vld [vmem:[%s2782 + $0xe8] sm:$0xf]
    %v2842 = vld [vmem:[%s2782 + $0xec] sm:$0xf]
    %v2843 = vld [vmem:[%s2782 + $0xf0] sm:$0xf]
    %v2844 = vld [vmem:[%s2782 + $0xf4] sm:$0xf]
    %v2845 = vld [vmem:[%s2782 + $0xf8] sm:$0xf]
    %v2846 = vld [vmem:[%s2782 + $0xfc] sm:$0xf]
    %v2847 = vld [vmem:[%s2782 + $0x100] sm:$0xf]
    %v2848 = vld [vmem:[%s2782 + $0x104] sm:$0xf]
    %v2849 = vld [vmem:[%s2782 + $0x108] sm:$0xf]
    %v2850 = vld [vmem:[%s2782 + $0x10c] sm:$0xf]
    %v2851 = vld [vmem:[%s2782 + $0x110] sm:$0xf]
    %v2852 = vld [vmem:[%s2782 + $0x114] sm:$0xf]
    %v2853 = vld [vmem:[%s2782 + $0x118] sm:$0xf]
    %v2854 = vld [vmem:[%s2782 + $0x11c] sm:$0xf]
    %v2855 = vld [vmem:[%s2782 + $0x120] sm:$0xf]
    %v2856 = vld [vmem:[%s2782 + $0x124] sm:$0xf]
    %v2857 = vld [vmem:[%s2782 + $0x128] sm:$0xf]
    %v2858 = vld [vmem:[%s2782 + $0x12c] sm:$0xf]
    %v2859 = vld [vmem:[%s2782 + $0x130] sm:$0xf]
    %v2860 = vld [vmem:[%s2782 + $0x134] sm:$0xf]
    %v2861 = vld [vmem:[%s2782 + $0x138] sm:$0xf]
    %v2862 = vld [vmem:[%s2782 + $0x13c] sm:$0xf]
    %v2863 = vld [vmem:[%s2782 + $0x140] sm:$0xf]
    %v2864 = vld [vmem:[%s2782 + $0x144] sm:$0xf]
    %v2865 = vld [vmem:[%s2782 + $0x148] sm:$0xf]
    %v2866 = vld [vmem:[%s2782 + $0x14c] sm:$0xf]
    %v2867 = vld [vmem:[%s2782 + $0x150] sm:$0xf]
    %v2868 = vld [vmem:[%s2782 + $0x154] sm:$0xf]
    %v2869 = vld [vmem:[%s2782 + $0x158] sm:$0xf]
    %v2870 = vld [vmem:[%s2782 + $0x15c] sm:$0xf]
    %v2871 = vld [vmem:[%s2782 + $0x160] sm:$0xf]
    %v2872 = vld [vmem:[%s2782 + $0x164] sm:$0xf]
    %v2873 = vld [vmem:[%s2782 + $0x168] sm:$0xf]
    %v2874 = vld [vmem:[%s2782 + $0x16c] sm:$0xf]
    %v2875 = vld [vmem:[%s2782 + $0x170] sm:$0xf]
    %v2876 = vld [vmem:[%s2782 + $0x174] sm:$0xf]
    %v2877 = vld [vmem:[%s2782 + $0x178] sm:$0xf]
    %v2878 = vld [vmem:[%s2782 + $0x17c] sm:$0xf]
    %v2879 = vpack.c.bf16 %v88, %v82
    %v2880 = vpack.c.bf16 %v89, %v83
    %v2881 = vpack.c.bf16 %v90, %v84
    %v2882 = vpack.c.bf16 %v91, %v85
    %v2883 = vpack.c.bf16 %v92, %v86
    %v2884 = vpack.c.bf16 %v93, %v87
    %v2885 = vpack.c.bf16 %v184, %v178
    %v2886 = vpack.c.bf16 %v185, %v179
    %v2887 = vpack.c.bf16 %v186, %v180
    %v2888 = vpack.c.bf16 %v187, %v181
    %v2889 = vpack.c.bf16 %v188, %v182
    %v2890 = vpack.c.bf16 %v189, %v183
    %s2891 = scalar_lea.vmem %s1, 1920
    %v2892 = vld [vmem:[%s2891] sm:$0xf]
    %v2893 = vld [vmem:[%s2891 + $0x4] sm:$0xf]
    %v2894 = vld [vmem:[%s2891 + $0x8] sm:$0xf]
    %v2895 = vld [vmem:[%s2891 + $0xc] sm:$0xf]
    %v2896 = vld [vmem:[%s2891 + $0x10] sm:$0xf]
    %v2897 = vld [vmem:[%s2891 + $0x14] sm:$0xf]
    %v2898 = vld [vmem:[%s2891 + $0x18] sm:$0xf]
    %v2899 = vld [vmem:[%s2891 + $0x1c] sm:$0xf]
    %v2900 = vld [vmem:[%s2891 + $0x20] sm:$0xf]
    %v2901 = vld [vmem:[%s2891 + $0x24] sm:$0xf]
    %v2902 = vld [vmem:[%s2891 + $0x28] sm:$0xf]
    %v2903 = vld [vmem:[%s2891 + $0x2c] sm:$0xf]
    %v2904 = vld [vmem:[%s2891 + $0x30] sm:$0xf]
    %v2905 = vld [vmem:[%s2891 + $0x34] sm:$0xf]
    %v2906 = vld [vmem:[%s2891 + $0x38] sm:$0xf]
    %v2907 = vld [vmem:[%s2891 + $0x3c] sm:$0xf]
    %v2908 = vld [vmem:[%s2891 + $0x40] sm:$0xf]
    %v2909 = vld [vmem:[%s2891 + $0x44] sm:$0xf]
    %v2910 = vld [vmem:[%s2891 + $0x48] sm:$0xf]
    %v2911 = vld [vmem:[%s2891 + $0x4c] sm:$0xf]
    %v2912 = vld [vmem:[%s2891 + $0x50] sm:$0xf]
    %v2913 = vld [vmem:[%s2891 + $0x54] sm:$0xf]
    %v2914 = vld [vmem:[%s2891 + $0x58] sm:$0xf]
    %v2915 = vld [vmem:[%s2891 + $0x5c] sm:$0xf]
    %v2916 = vld [vmem:[%s2891 + $0x60] sm:$0xf]
    %v2917 = vld [vmem:[%s2891 + $0x64] sm:$0xf]
    %v2918 = vld [vmem:[%s2891 + $0x68] sm:$0xf]
    %v2919 = vld [vmem:[%s2891 + $0x6c] sm:$0xf]
    %v2920 = vld [vmem:[%s2891 + $0x70] sm:$0xf]
    %v2921 = vld [vmem:[%s2891 + $0x74] sm:$0xf]
    %v2922 = vld [vmem:[%s2891 + $0x78] sm:$0xf]
    %v2923 = vld [vmem:[%s2891 + $0x7c] sm:$0xf]
    %v2924 = vld [vmem:[%s2891 + $0x80] sm:$0xf]
    %v2925 = vld [vmem:[%s2891 + $0x84] sm:$0xf]
    %v2926 = vld [vmem:[%s2891 + $0x88] sm:$0xf]
    %v2927 = vld [vmem:[%s2891 + $0x8c] sm:$0xf]
    %v2928 = vld [vmem:[%s2891 + $0x90] sm:$0xf]
    %v2929 = vld [vmem:[%s2891 + $0x94] sm:$0xf]
    %v2930 = vld [vmem:[%s2891 + $0x98] sm:$0xf]
    %v2931 = vld [vmem:[%s2891 + $0x9c] sm:$0xf]
    %v2932 = vld [vmem:[%s2891 + $0xa0] sm:$0xf]
    %v2933 = vld [vmem:[%s2891 + $0xa4] sm:$0xf]
    %v2934 = vld [vmem:[%s2891 + $0xa8] sm:$0xf]
    %v2935 = vld [vmem:[%s2891 + $0xac] sm:$0xf]
    %v2936 = vld [vmem:[%s2891 + $0xb0] sm:$0xf]
    %v2937 = vld [vmem:[%s2891 + $0xb4] sm:$0xf]
    %v2938 = vld [vmem:[%s2891 + $0xb8] sm:$0xf]
    %v2939 = vld [vmem:[%s2891 + $0xbc] sm:$0xf]
    %v2940 = vld [vmem:[%s2891 + $0xc0] sm:$0xf]
    %v2941 = vld [vmem:[%s2891 + $0xc4] sm:$0xf]
    %v2942 = vld [vmem:[%s2891 + $0xc8] sm:$0xf]
    %v2943 = vld [vmem:[%s2891 + $0xcc] sm:$0xf]
    %v2944 = vld [vmem:[%s2891 + $0xd0] sm:$0xf]
    %v2945 = vld [vmem:[%s2891 + $0xd4] sm:$0xf]
    %v2946 = vld [vmem:[%s2891 + $0xd8] sm:$0xf]
    %v2947 = vld [vmem:[%s2891 + $0xdc] sm:$0xf]
    %v2948 = vld [vmem:[%s2891 + $0xe0] sm:$0xf]
    %v2949 = vld [vmem:[%s2891 + $0xe4] sm:$0xf]
    %v2950 = vld [vmem:[%s2891 + $0xe8] sm:$0xf]
    %v2951 = vld [vmem:[%s2891 + $0xec] sm:$0xf]
    %v2952 = vld [vmem:[%s2891 + $0xf0] sm:$0xf]
    %v2953 = vld [vmem:[%s2891 + $0xf4] sm:$0xf]
    %v2954 = vld [vmem:[%s2891 + $0xf8] sm:$0xf]
    %v2955 = vld [vmem:[%s2891 + $0xfc] sm:$0xf]
    %v2956 = vld [vmem:[%s2891 + $0x100] sm:$0xf]
    %v2957 = vld [vmem:[%s2891 + $0x104] sm:$0xf]
    %v2958 = vld [vmem:[%s2891 + $0x108] sm:$0xf]
    %v2959 = vld [vmem:[%s2891 + $0x10c] sm:$0xf]
    %v2960 = vld [vmem:[%s2891 + $0x110] sm:$0xf]
    %v2961 = vld [vmem:[%s2891 + $0x114] sm:$0xf]
    %v2962 = vld [vmem:[%s2891 + $0x118] sm:$0xf]
    %v2963 = vld [vmem:[%s2891 + $0x11c] sm:$0xf]
    %v2964 = vld [vmem:[%s2891 + $0x120] sm:$0xf]
    %v2965 = vld [vmem:[%s2891 + $0x124] sm:$0xf]
    %v2966 = vld [vmem:[%s2891 + $0x128] sm:$0xf]
    %v2967 = vld [vmem:[%s2891 + $0x12c] sm:$0xf]
    %v2968 = vld [vmem:[%s2891 + $0x130] sm:$0xf]
    %v2969 = vld [vmem:[%s2891 + $0x134] sm:$0xf]
    %v2970 = vld [vmem:[%s2891 + $0x138] sm:$0xf]
    %v2971 = vld [vmem:[%s2891 + $0x13c] sm:$0xf]
    %v2972 = vld [vmem:[%s2891 + $0x140] sm:$0xf]
    %v2973 = vld [vmem:[%s2891 + $0x144] sm:$0xf]
    %v2974 = vld [vmem:[%s2891 + $0x148] sm:$0xf]
    %v2975 = vld [vmem:[%s2891 + $0x14c] sm:$0xf]
    %v2976 = vld [vmem:[%s2891 + $0x150] sm:$0xf]
    %v2977 = vld [vmem:[%s2891 + $0x154] sm:$0xf]
    %v2978 = vld [vmem:[%s2891 + $0x158] sm:$0xf]
    %v2979 = vld [vmem:[%s2891 + $0x15c] sm:$0xf]
    %v2980 = vld [vmem:[%s2891 + $0x160] sm:$0xf]
    %v2981 = vld [vmem:[%s2891 + $0x164] sm:$0xf]
    %v2982 = vld [vmem:[%s2891 + $0x168] sm:$0xf]
    %v2983 = vld [vmem:[%s2891 + $0x16c] sm:$0xf]
    %v2984 = vld [vmem:[%s2891 + $0x170] sm:$0xf]
    %v2985 = vld [vmem:[%s2891 + $0x174] sm:$0xf]
    %v2986 = vld [vmem:[%s2891 + $0x178] sm:$0xf]
    %v2987 = vld [vmem:[%s2891 + $0x17c] sm:$0xf]
    %v3084 = vunpack.c.l.b16 %v2892
    %v3085 = vunpack.c.l.b16 %v2893
    %v3086 = vunpack.c.l.b16 %v2894
    %v3087 = vunpack.c.l.b16 %v2895
    %v3088 = vunpack.c.l.b16 %v2896
    %v3089 = vunpack.c.l.b16 %v2897
    %v3090 = vunpack.c.l.b16 %v2898
    %v3091 = vunpack.c.l.b16 %v2899
    %v3092 = vunpack.c.l.b16 %v2900
    %v3093 = vunpack.c.l.b16 %v2901
    %v3094 = vunpack.c.l.b16 %v2902
    %v3095 = vunpack.c.l.b16 %v2903
    %v3096 = vunpack.c.l.b16 %v2904
    %v3097 = vunpack.c.l.b16 %v2905
    %v3098 = vunpack.c.l.b16 %v2906
    %v3099 = vunpack.c.l.b16 %v2907
    %v3100 = vunpack.c.l.b16 %v2908
    %v3101 = vunpack.c.l.b16 %v2909
    %v3102 = vunpack.c.l.b16 %v2910
    %v3103 = vunpack.c.l.b16 %v2911
    %v3104 = vunpack.c.l.b16 %v2912
    %v3105 = vunpack.c.l.b16 %v2913
    %v3106 = vunpack.c.l.b16 %v2914
    %v3107 = vunpack.c.l.b16 %v2915
    %v3108 = vunpack.c.l.b16 %v2916
    %v3109 = vunpack.c.l.b16 %v2917
    %v3110 = vunpack.c.l.b16 %v2918
    %v3111 = vunpack.c.l.b16 %v2919
    %v3112 = vunpack.c.l.b16 %v2920
    %v3113 = vunpack.c.l.b16 %v2921
    %v3114 = vunpack.c.l.b16 %v2922
    %v3115 = vunpack.c.l.b16 %v2923
    %v3116 = vunpack.c.l.b16 %v2924
    %v3117 = vunpack.c.l.b16 %v2925
    %v3118 = vunpack.c.l.b16 %v2926
    %v3119 = vunpack.c.l.b16 %v2927
    %v3120 = vunpack.c.l.b16 %v2928
    %v3121 = vunpack.c.l.b16 %v2929
    %v3122 = vunpack.c.l.b16 %v2930
    %v3123 = vunpack.c.l.b16 %v2931
    %v3124 = vunpack.c.l.b16 %v2932
    %v3125 = vunpack.c.l.b16 %v2933
    %v3126 = vunpack.c.l.b16 %v2934
    %v3127 = vunpack.c.l.b16 %v2935
    %v3128 = vunpack.c.l.b16 %v2936
    %v3129 = vunpack.c.l.b16 %v2937
    %v3130 = vunpack.c.l.b16 %v2938
    %v3131 = vunpack.c.l.b16 %v2939
    %v3132 = vunpack.c.l.b16 %v2940
    %v3133 = vunpack.c.l.b16 %v2941
    %v3134 = vunpack.c.l.b16 %v2942
    %v3135 = vunpack.c.l.b16 %v2943
    %v3136 = vunpack.c.l.b16 %v2944
    %v3137 = vunpack.c.l.b16 %v2945
    %v3138 = vunpack.c.l.b16 %v2946
    %v3139 = vunpack.c.l.b16 %v2947
    %v3140 = vunpack.c.l.b16 %v2948
    %v3141 = vunpack.c.l.b16 %v2949
    %v3142 = vunpack.c.l.b16 %v2950
    %v3143 = vunpack.c.l.b16 %v2951
    %v3144 = vunpack.c.l.b16 %v2952
    %v3145 = vunpack.c.l.b16 %v2953
    %v3146 = vunpack.c.l.b16 %v2954
    %v3147 = vunpack.c.l.b16 %v2955
    %v3148 = vunpack.c.l.b16 %v2956
    %v3149 = vunpack.c.l.b16 %v2957
    %v3150 = vunpack.c.l.b16 %v2958
    %v3151 = vunpack.c.l.b16 %v2959
    %v3152 = vunpack.c.l.b16 %v2960
    %v3153 = vunpack.c.l.b16 %v2961
    %v3154 = vunpack.c.l.b16 %v2962
    %v3155 = vunpack.c.l.b16 %v2963
    %v3156 = vunpack.c.l.b16 %v2964
    %v3157 = vunpack.c.l.b16 %v2965
    %v3158 = vunpack.c.l.b16 %v2966
    %v3159 = vunpack.c.l.b16 %v2967
    %v3160 = vunpack.c.l.b16 %v2968
    %v3161 = vunpack.c.l.b16 %v2969
    %v3162 = vunpack.c.l.b16 %v2970
    %v3163 = vunpack.c.l.b16 %v2971
    %v3164 = vunpack.c.l.b16 %v2972
    %v3165 = vunpack.c.l.b16 %v2973
    %v3166 = vunpack.c.l.b16 %v2974
    %v3167 = vunpack.c.l.b16 %v2975
    %v3168 = vunpack.c.l.b16 %v2976
    %v3169 = vunpack.c.l.b16 %v2977
    %v3170 = vunpack.c.l.b16 %v2978
    %v3171 = vunpack.c.l.b16 %v2979
    %v3172 = vunpack.c.l.b16 %v2980
    %v3173 = vunpack.c.l.b16 %v2981
    %v3174 = vunpack.c.l.b16 %v2982
    %v3175 = vunpack.c.l.b16 %v2983
    %v3176 = vunpack.c.l.b16 %v2984
    %v3177 = vunpack.c.l.b16 %v2985
    %v3178 = vunpack.c.l.b16 %v2986
    %v3179 = vunpack.c.l.b16 %v2987
    %v3180 = vpack.c.b16 %v3085, %v3084
    %v3181 = vpack.c.b16 %v3087, %v3086
    %v3182 = vpack.c.b16 %v3089, %v3088
    %v3183 = vpack.c.b16 %v3091, %v3090
    %v3184 = vpack.c.b16 %v3093, %v3092
    %v3185 = vpack.c.b16 %v3095, %v3094
    %v3186 = vpack.c.b16 %v3097, %v3096
    %v3187 = vpack.c.b16 %v3099, %v3098
    %v3188 = vpack.c.b16 %v3101, %v3100
    %v3189 = vpack.c.b16 %v3103, %v3102
    %v3190 = vpack.c.b16 %v3105, %v3104
    %v3191 = vpack.c.b16 %v3107, %v3106
    %v3192 = vpack.c.b16 %v3109, %v3108
    %v3193 = vpack.c.b16 %v3111, %v3110
    %v3194 = vpack.c.b16 %v3113, %v3112
    %v3195 = vpack.c.b16 %v3115, %v3114
    %v3196 = vpack.c.b16 %v3117, %v3116
    %v3197 = vpack.c.b16 %v3119, %v3118
    %v3198 = vpack.c.b16 %v3121, %v3120
    %v3199 = vpack.c.b16 %v3123, %v3122
    %v3200 = vpack.c.b16 %v3125, %v3124
    %v3201 = vpack.c.b16 %v3127, %v3126
    %v3202 = vpack.c.b16 %v3129, %v3128
    %v3203 = vpack.c.b16 %v3131, %v3130
    %v3204 = vpack.c.b16 %v3133, %v3132
    %v3205 = vpack.c.b16 %v3135, %v3134
    %v3206 = vpack.c.b16 %v3137, %v3136
    %v3207 = vpack.c.b16 %v3139, %v3138
    %v3208 = vpack.c.b16 %v3141, %v3140
    %v3209 = vpack.c.b16 %v3143, %v3142
    %v3210 = vpack.c.b16 %v3145, %v3144
    %v3211 = vpack.c.b16 %v3147, %v3146
    %v3212 = vpack.c.b16 %v3149, %v3148
    %v3213 = vpack.c.b16 %v3151, %v3150
    %v3214 = vpack.c.b16 %v3153, %v3152
    %v3215 = vpack.c.b16 %v3155, %v3154
    %v3216 = vpack.c.b16 %v3157, %v3156
    %v3217 = vpack.c.b16 %v3159, %v3158
    %v3218 = vpack.c.b16 %v3161, %v3160
    %v3219 = vpack.c.b16 %v3163, %v3162
    %v3220 = vpack.c.b16 %v3165, %v3164
    %v3221 = vpack.c.b16 %v3167, %v3166
    %v3222 = vpack.c.b16 %v3169, %v3168
    %v3223 = vpack.c.b16 %v3171, %v3170
    %v3224 = vpack.c.b16 %v3173, %v3172
    %v3225 = vpack.c.b16 %v3175, %v3174
    %v3226 = vpack.c.b16 %v3177, %v3176
    %v3227 = vpack.c.b16 %v3179, %v3178
    %3276 = vmatprep.subr.bf16.mxu0 0
    %3277 = vmatpush1.bf16.msra.mxu0 %v3180
    %3278 = vmatprep.subr.bf16.mxu0 0
    %3279 = vmatpush1.bf16.msra.mxu0 %v3181
    %3280 = vmatprep.subr.bf16.mxu0 0
    %3281 = vmatpush1.bf16.msra.mxu0 %v3182
    %3282 = vmatprep.subr.bf16.mxu0 0
    %3283 = vmatpush1.bf16.msra.mxu0 %v3183
    %3284 = vmatprep.subr.bf16.mxu0 0
    %3285 = vmatpush1.bf16.msra.mxu0 %v3184
    %3286 = vmatprep.subr.bf16.mxu0 0
    %3287 = vmatpush1.bf16.msra.mxu0 %v3185
    %3288 = vmatprep.subr.bf16.mxu0 0
    %3289 = vmatpush1.bf16.msra.mxu0 %v3186
    %3290 = vmatprep.subr.bf16.mxu0 0
    %3291 = vmatpush1.bf16.msra.mxu0 %v3187
    %3292 = vmatprep.subr.bf16.mxu0 0
    %3293 = vmatpush1.bf16.msra.mxu0 %v3188
    %3294 = vmatprep.subr.bf16.mxu0 0
    %3295 = vmatpush1.bf16.msra.mxu0 %v3189
    %3296 = vmatprep.subr.bf16.mxu0 0
    %3297 = vmatpush1.bf16.msra.mxu0 %v3190
    %3298 = vmatprep.subr.bf16.mxu0 0
    %3299 = vmatpush1.bf16.msra.mxu0 %v3191
    %3300 = vmatprep.subr.bf16.mxu0 0
    %3301 = vmatpush1.bf16.msra.mxu0 %v3192
    %3302 = vmatprep.subr.bf16.mxu0 0
    %3303 = vmatpush1.bf16.msra.mxu0 %v3193
    %3304 = vmatprep.subr.bf16.mxu0 0
    %3305 = vmatpush1.bf16.msra.mxu0 %v3194
    %3306 = vmatprep.subr.bf16.mxu0 0
    %3307 = vmatpush1.bf16.msra.mxu0 %v3195
    %3308 = vmatprep.mubr.bf16.mxu0 %v2880
    %3309 = vmatmul.mubr.bf16.gmra.mrb[0].mxu0 %v2879
    %v3310 = vpop.f32.mrb[0].mxu0
    %v3311 = vadd.f32 0.0, %v3310
    %v3312 = vpop.f32.mrb[0].mxu0
    %v3313 = vpop.f32.mrb[0].mxu0
    %v3314 = vadd.f32 0.0, %v3313
    %v3315 = vpop.f32.mrb[0].mxu0
    %3316 = vmatprep.mubr.bf16.mxu0 %v2886
    %3317 = vmatmul.mubr.bf16.gmra.mrb[0].mxu0 %v2885
    %v3318 = vpop.f32.mrb[0].mxu0
    %v3319 = vadd.f32 0.0, %v3318
    %v3320 = vpop.f32.mrb[0].mxu0
    %v3321 = vpop.f32.mrb[0].mxu0
    %v3322 = vadd.f32 0.0, %v3321
    %v3323 = vpop.f32.mrb[0].mxu0
    %3324 = vdwg.mxu0
    %3325 = vmatprep.subr.bf16.mxu0 0
    %3326 = vmatpush1.bf16.msra.mxu0 %v3196
    %3327 = vmatprep.subr.bf16.mxu0 0
    %3328 = vmatpush1.bf16.msra.mxu0 %v3197
    %3329 = vmatprep.subr.bf16.mxu0 0
    %3330 = vmatpush1.bf16.msra.mxu0 %v3198
    %3331 = vmatprep.subr.bf16.mxu0 0
    %3332 = vmatpush1.bf16.msra.mxu0 %v3199
    %3333 = vmatprep.subr.bf16.mxu0 0
    %3334 = vmatpush1.bf16.msra.mxu0 %v3200
    %3335 = vmatprep.subr.bf16.mxu0 0
    %3336 = vmatpush1.bf16.msra.mxu0 %v3201
    %3337 = vmatprep.subr.bf16.mxu0 0
    %3338 = vmatpush1.bf16.msra.mxu0 %v3202
    %3339 = vmatprep.subr.bf16.mxu0 0
    %3340 = vmatpush1.bf16.msra.mxu0 %v3203
    %3341 = vmatprep.subr.bf16.mxu0 0
    %3342 = vmatpush1.bf16.msra.mxu0 %v3204
    %3343 = vmatprep.subr.bf16.mxu0 0
    %3344 = vmatpush1.bf16.msra.mxu0 %v3205
    %3345 = vmatprep.subr.bf16.mxu0 0
    %3346 = vmatpush1.bf16.msra.mxu0 %v3206
    %3347 = vmatprep.subr.bf16.mxu0 0
    %3348 = vmatpush1.bf16.msra.mxu0 %v3207
    %3349 = vmatprep.subr.bf16.mxu0 0
    %3350 = vmatpush1.bf16.msra.mxu0 %v3208
    %3351 = vmatprep.subr.bf16.mxu0 0
    %3352 = vmatpush1.bf16.msra.mxu0 %v3209
    %3353 = vmatprep.subr.bf16.mxu0 0
    %3354 = vmatpush1.bf16.msra.mxu0 %v3210
    %3355 = vmatprep.subr.bf16.mxu0 0
    %3356 = vmatpush1.bf16.msra.mxu0 %v3211
    %3357 = vmatprep.mubr.bf16.mxu0 %v2882
    %3358 = vmatmul.mubr.bf16.gmra.mrb[0].mxu0 %v2881
    %v3359 = vpop.f32.mrb[0].mxu0
    %v3360 = vadd.f32 %v3311, %v3359
    %v3361 = vpop.f32.mrb[0].mxu0
    %v3362 = vpop.f32.mrb[0].mxu0
    %v3363 = vadd.f32 %v3314, %v3362
    %v3364 = vpop.f32.mrb[0].mxu0
    %3365 = vmatprep.mubr.bf16.mxu0 %v2888
    %3366 = vmatmul.mubr.bf16.gmra.mrb[0].mxu0 %v2887
    %v3367 = vpop.f32.mrb[0].mxu0
    %v3368 = vadd.f32 %v3319, %v3367
    %v3369 = vpop.f32.mrb[0].mxu0
    %v3370 = vpop.f32.mrb[0].mxu0
    %v3371 = vadd.f32 %v3322, %v3370
    %v3372 = vpop.f32.mrb[0].mxu0
    %3373 = vdwg.mxu0
    %3374 = vmatprep.subr.bf16.mxu0 0
    %3375 = vmatpush1.bf16.msra.mxu0 %v3212
    %3376 = vmatprep.subr.bf16.mxu0 0
    %3377 = vmatpush1.bf16.msra.mxu0 %v3213
    %3378 = vmatprep.subr.bf16.mxu0 0
    %3379 = vmatpush1.bf16.msra.mxu0 %v3214
    %3380 = vmatprep.subr.bf16.mxu0 0
    %3381 = vmatpush1.bf16.msra.mxu0 %v3215
    %3382 = vmatprep.subr.bf16.mxu0 0
    %3383 = vmatpush1.bf16.msra.mxu0 %v3216
    %3384 = vmatprep.subr.bf16.mxu0 0
    %3385 = vmatpush1.bf16.msra.mxu0 %v3217
    %3386 = vmatprep.subr.bf16.mxu0 0
    %3387 = vmatpush1.bf16.msra.mxu0 %v3218
    %3388 = vmatprep.subr.bf16.mxu0 0
    %3389 = vmatpush1.bf16.msra.mxu0 %v3219
    %3390 = vmatprep.subr.bf16.mxu0 0
    %3391 = vmatpush1.bf16.msra.mxu0 %v3220
    %3392 = vmatprep.subr.bf16.mxu0 0
    %3393 = vmatpush1.bf16.msra.mxu0 %v3221
    %3394 = vmatprep.subr.bf16.mxu0 0
    %3395 = vmatpush1.bf16.msra.mxu0 %v3222
    %3396 = vmatprep.subr.bf16.mxu0 0
    %3397 = vmatpush1.bf16.msra.mxu0 %v3223
    %3398 = vmatprep.subr.bf16.mxu0 0
    %3399 = vmatpush1.bf16.msra.mxu0 %v3224
    %3400 = vmatprep.subr.bf16.mxu0 0
    %3401 = vmatpush1.bf16.msra.mxu0 %v3225
    %3402 = vmatprep.subr.bf16.mxu0 0
    %3403 = vmatpush1.bf16.msra.mxu0 %v3226
    %3404 = vmatprep.subr.bf16.mxu0 0
    %3405 = vmatpush1.bf16.msra.mxu0 %v3227
    %3406 = vmatprep.mubr.bf16.mxu0 %v2884
    %3407 = vmatmul.mubr.bf16.gmra.mrb[0].mxu0 %v2883
    %v3408 = vpop.f32.mrb[0].mxu0
    %v3409 = vadd.f32 %v3360, %v3408
    %v3410 = vpop.f32.mrb[0].mxu0
    %v3411 = vpop.f32.mrb[0].mxu0
    %v3412 = vadd.f32 %v3363, %v3411
    %v3413 = vpop.f32.mrb[0].mxu0
    %3414 = vmatprep.mubr.bf16.mxu0 %v2890
    %3415 = vmatmul.mubr.bf16.gmra.mrb[0].mxu0 %v2889
    %v3416 = vpop.f32.mrb[0].mxu0
    %v3417 = vadd.f32 %v3368, %v3416
    %v3418 = vpop.f32.mrb[0].mxu0
    %v3419 = vpop.f32.mrb[0].mxu0
    %v3420 = vadd.f32 %v3371, %v3419
    %v3421 = vpop.f32.mrb[0].mxu0
    %3422 = vdwg.mxu0
    %v3519 = vunpack.c.l.b16 %v2783
    %v3520 = vunpack.c.l.b16 %v2784
    %v3521 = vunpack.c.l.b16 %v2785
    %v3522 = vunpack.c.l.b16 %v2786
    %v3523 = vunpack.c.l.b16 %v2787
    %v3524 = vunpack.c.l.b16 %v2788
    %v3525 = vunpack.c.l.b16 %v2789
    %v3526 = vunpack.c.l.b16 %v2790
    %v3527 = vunpack.c.l.b16 %v2791
    %v3528 = vunpack.c.l.b16 %v2792
    %v3529 = vunpack.c.l.b16 %v2793
    %v3530 = vunpack.c.l.b16 %v2794
    %v3531 = vunpack.c.l.b16 %v2795
    %v3532 = vunpack.c.l.b16 %v2796
    %v3533 = vunpack.c.l.b16 %v2797
    %v3534 = vunpack.c.l.b16 %v2798
    %v3535 = vunpack.c.l.b16 %v2799
    %v3536 = vunpack.c.l.b16 %v2800
    %v3537 = vunpack.c.l.b16 %v2801
    %v3538 = vunpack.c.l.b16 %v2802
    %v3539 = vunpack.c.l.b16 %v2803
    %v3540 = vunpack.c.l.b16 %v2804
    %v3541 = vunpack.c.l.b16 %v2805
    %v3542 = vunpack.c.l.b16 %v2806
    %v3543 = vunpack.c.l.b16 %v2807
    %v3544 = vunpack.c.l.b16 %v2808
    %v3545 = vunpack.c.l.b16 %v2809
    %v3546 = vunpack.c.l.b16 %v2810
    %v3547 = vunpack.c.l.b16 %v2811
    %v3548 = vunpack.c.l.b16 %v2812
    %v3549 = vunpack.c.l.b16 %v2813
    %v3550 = vunpack.c.l.b16 %v2814
    %v3551 = vunpack.c.l.b16 %v2815
    %v3552 = vunpack.c.l.b16 %v2816
    %v3553 = vunpack.c.l.b16 %v2817
    %v3554 = vunpack.c.l.b16 %v2818
    %v3555 = vunpack.c.l.b16 %v2819
    %v3556 = vunpack.c.l.b16 %v2820
    %v3557 = vunpack.c.l.b16 %v2821
    %v3558 = vunpack.c.l.b16 %v2822
    %v3559 = vunpack.c.l.b16 %v2823
    %v3560 = vunpack.c.l.b16 %v2824
    %v3561 = vunpack.c.l.b16 %v2825
    %v3562 = vunpack.c.l.b16 %v2826
    %v3563 = vunpack.c.l.b16 %v2827
    %v3564 = vunpack.c.l.b16 %v2828
    %v3565 = vunpack.c.l.b16 %v2829
    %v3566 = vunpack.c.l.b16 %v2830
    %v3567 = vunpack.c.l.b16 %v2831
    %v3568 = vunpack.c.l.b16 %v2832
    %v3569 = vunpack.c.l.b16 %v2833
    %v3570 = vunpack.c.l.b16 %v2834
    %v3571 = vunpack.c.l.b16 %v2835
    %v3572 = vunpack.c.l.b16 %v2836
    %v3573 = vunpack.c.l.b16 %v2837
    %v3574 = vunpack.c.l.b16 %v2838
    %v3575 = vunpack.c.l.b16 %v2839
    %v3576 = vunpack.c.l.b16 %v2840
    %v3577 = vunpack.c.l.b16 %v2841
    %v3578 = vunpack.c.l.b16 %v2842
    %v3579 = vunpack.c.l.b16 %v2843
    %v3580 = vunpack.c.l.b16 %v2844
    %v3581 = vunpack.c.l.b16 %v2845
    %v3582 = vunpack.c.l.b16 %v2846
    %v3583 = vunpack.c.l.b16 %v2847
    %v3584 = vunpack.c.l.b16 %v2848
    %v3585 = vunpack.c.l.b16 %v2849
    %v3586 = vunpack.c.l.b16 %v2850
    %v3587 = vunpack.c.l.b16 %v2851
    %v3588 = vunpack.c.l.b16 %v2852
    %v3589 = vunpack.c.l.b16 %v2853
    %v3590 = vunpack.c.l.b16 %v2854
    %v3591 = vunpack.c.l.b16 %v2855
    %v3592 = vunpack.c.l.b16 %v2856
    %v3593 = vunpack.c.l.b16 %v2857
    %v3594 = vunpack.c.l.b16 %v2858
    %v3595 = vunpack.c.l.b16 %v2859
    %v3596 = vunpack.c.l.b16 %v2860
    %v3597 = vunpack.c.l.b16 %v2861
    %v3598 = vunpack.c.l.b16 %v2862
    %v3599 = vunpack.c.l.b16 %v2863
    %v3600 = vunpack.c.l.b16 %v2864
    %v3601 = vunpack.c.l.b16 %v2865
    %v3602 = vunpack.c.l.b16 %v2866
    %v3603 = vunpack.c.l.b16 %v2867
    %v3604 = vunpack.c.l.b16 %v2868
    %v3605 = vunpack.c.l.b16 %v2869
    %v3606 = vunpack.c.l.b16 %v2870
    %v3607 = vunpack.c.l.b16 %v2871
    %v3608 = vunpack.c.l.b16 %v2872
    %v3609 = vunpack.c.l.b16 %v2873
    %v3610 = vunpack.c.l.b16 %v2874
    %v3611 = vunpack.c.l.b16 %v2875
    %v3612 = vunpack.c.l.b16 %v2876
    %v3613 = vunpack.c.l.b16 %v2877
    %v3614 = vunpack.c.l.b16 %v2878
    %v3615 = vpack.c.b16 %v3520, %v3519
    %v3616 = vpack.c.b16 %v3522, %v3521
    %v3617 = vpack.c.b16 %v3524, %v3523
    %v3618 = vpack.c.b16 %v3526, %v3525
    %v3619 = vpack.c.b16 %v3528, %v3527
    %v3620 = vpack.c.b16 %v3530, %v3529
    %v3621 = vpack.c.b16 %v3532, %v3531
    %v3622 = vpack.c.b16 %v3534, %v3533
    %v3623 = vpack.c.b16 %v3536, %v3535
    %v3624 = vpack.c.b16 %v3538, %v3537
    %v3625 = vpack.c.b16 %v3540, %v3539
    %v3626 = vpack.c.b16 %v3542, %v3541
    %v3627 = vpack.c.b16 %v3544, %v3543
    %v3628 = vpack.c.b16 %v3546, %v3545
    %v3629 = vpack.c.b16 %v3548, %v3547
    %v3630 = vpack.c.b16 %v3550, %v3549
    %v3631 = vpack.c.b16 %v3552, %v3551
    %v3632 = vpack.c.b16 %v3554, %v3553
    %v3633 = vpack.c.b16 %v3556, %v3555
    %v3634 = vpack.c.b16 %v3558, %v3557
    %v3635 = vpack.c.b16 %v3560, %v3559
    %v3636 = vpack.c.b16 %v3562, %v3561
    %v3637 = vpack.c.b16 %v3564, %v3563
    %v3638 = vpack.c.b16 %v3566, %v3565
    %v3639 = vpack.c.b16 %v3568, %v3567
    %v3640 = vpack.c.b16 %v3570, %v3569
    %v3641 = vpack.c.b16 %v3572, %v3571
    %v3642 = vpack.c.b16 %v3574, %v3573
    %v3643 = vpack.c.b16 %v3576, %v3575
    %v3644 = vpack.c.b16 %v3578, %v3577
    %v3645 = vpack.c.b16 %v3580, %v3579
    %v3646 = vpack.c.b16 %v3582, %v3581
    %v3647 = vpack.c.b16 %v3584, %v3583
    %v3648 = vpack.c.b16 %v3586, %v3585
    %v3649 = vpack.c.b16 %v3588, %v3587
    %v3650 = vpack.c.b16 %v3590, %v3589
    %v3651 = vpack.c.b16 %v3592, %v3591
    %v3652 = vpack.c.b16 %v3594, %v3593
    %v3653 = vpack.c.b16 %v3596, %v3595
    %v3654 = vpack.c.b16 %v3598, %v3597
    %v3655 = vpack.c.b16 %v3600, %v3599
    %v3656 = vpack.c.b16 %v3602, %v3601
    %v3657 = vpack.c.b16 %v3604, %v3603
    %v3658 = vpack.c.b16 %v3606, %v3605
    %v3659 = vpack.c.b16 %v3608, %v3607
    %v3660 = vpack.c.b16 %v3610, %v3609
    %v3661 = vpack.c.b16 %v3612, %v3611
    %v3662 = vpack.c.b16 %v3614, %v3613
    %3711 = vmatprep.subr.bf16.mxu0 0
    %3712 = vmatpush1.bf16.msra.mxu0 %v3615
    %3713 = vmatprep.subr.bf16.mxu0 0
    %3714 = vmatpush1.bf16.msra.mxu0 %v3616
    %3715 = vmatprep.subr.bf16.mxu0 0
    %3716 = vmatpush1.bf16.msra.mxu0 %v3617
    %3717 = vmatprep.subr.bf16.mxu0 0
    %3718 = vmatpush1.bf16.msra.mxu0 %v3618
    %3719 = vmatprep.subr.bf16.mxu0 0
    %3720 = vmatpush1.bf16.msra.mxu0 %v3619
    %3721 = vmatprep.subr.bf16.mxu0 0
    %3722 = vmatpush1.bf16.msra.mxu0 %v3620
    %3723 = vmatprep.subr.bf16.mxu0 0
    %3724 = vmatpush1.bf16.msra.mxu0 %v3621
    %3725 = vmatprep.subr.bf16.mxu0 0
    %3726 = vmatpush1.bf16.msra.mxu0 %v3622
    %3727 = vmatprep.subr.bf16.mxu0 0
    %3728 = vmatpush1.bf16.msra.mxu0 %v3623
    %3729 = vmatprep.subr.bf16.mxu0 0
    %3730 = vmatpush1.bf16.msra.mxu0 %v3624
    %3731 = vmatprep.subr.bf16.mxu0 0
    %3732 = vmatpush1.bf16.msra.mxu0 %v3625
    %3733 = vmatprep.subr.bf16.mxu0 0
    %3734 = vmatpush1.bf16.msra.mxu0 %v3626
    %3735 = vmatprep.subr.bf16.mxu0 0
    %3736 = vmatpush1.bf16.msra.mxu0 %v3627
    %3737 = vmatprep.subr.bf16.mxu0 0
    %3738 = vmatpush1.bf16.msra.mxu0 %v3628
    %3739 = vmatprep.subr.bf16.mxu0 0
    %3740 = vmatpush1.bf16.msra.mxu0 %v3629
    %3741 = vmatprep.subr.bf16.mxu0 0
    %3742 = vmatpush1.bf16.msra.mxu0 %v3630
    %3743 = vmatprep.mubr.bf16.mxu0 %v2771
    %3744 = vmatmul.mubr.bf16.gmra.mrb[0].mxu0 %v2770
    %v3745 = vpop.f32.mrb[0].mxu0
    %v3746 = vadd.f32 %v3409, %v3745
    %v3747 = vpop.f32.mrb[0].mxu0
    %v3748 = vpop.f32.mrb[0].mxu0
    %v3749 = vadd.f32 %v3412, %v3748
    %v3750 = vpop.f32.mrb[0].mxu0
    %3751 = vmatprep.mubr.bf16.mxu0 %v2777
    %3752 = vmatmul.mubr.bf16.gmra.mrb[0].mxu0 %v2776
    %v3753 = vpop.f32.mrb[0].mxu0
    %v3754 = vadd.f32 %v3417, %v3753
    %v3755 = vpop.f32.mrb[0].mxu0
    %v3756 = vpop.f32.mrb[0].mxu0
    %v3757 = vadd.f32 %v3420, %v3756
    %v3758 = vpop.f32.mrb[0].mxu0
    %3759 = vdwg.mxu0
    %3760 = vmatprep.subr.bf16.mxu0 0
    %3761 = vmatpush1.bf16.msra.mxu0 %v3631
    %3762 = vmatprep.subr.bf16.mxu0 0
    %3763 = vmatpush1.bf16.msra.mxu0 %v3632
    %3764 = vmatprep.subr.bf16.mxu0 0
    %3765 = vmatpush1.bf16.msra.mxu0 %v3633
    %3766 = vmatprep.subr.bf16.mxu0 0
    %3767 = vmatpush1.bf16.msra.mxu0 %v3634
    %3768 = vmatprep.subr.bf16.mxu0 0
    %3769 = vmatpush1.bf16.msra.mxu0 %v3635
    %3770 = vmatprep.subr.bf16.mxu0 0
    %3771 = vmatpush1.bf16.msra.mxu0 %v3636
    %3772 = vmatprep.subr.bf16.mxu0 0
    %3773 = vmatpush1.bf16.msra.mxu0 %v3637
    %3774 = vmatprep.subr.bf16.mxu0 0
    %3775 = vmatpush1.bf16.msra.mxu0 %v3638
    %3776 = vmatprep.subr.bf16.mxu0 0
    %3777 = vmatpush1.bf16.msra.mxu0 %v3639
    %3778 = vmatprep.subr.bf16.mxu0 0
    %3779 = vmatpush1.bf16.msra.mxu0 %v3640
    %3780 = vmatprep.subr.bf16.mxu0 0
    %3781 = vmatpush1.bf16.msra.mxu0 %v3641
    %3782 = vmatprep.subr.bf16.mxu0 0
    %3783 = vmatpush1.bf16.msra.mxu0 %v3642
    %3784 = vmatprep.subr.bf16.mxu0 0
    %3785 = vmatpush1.bf16.msra.mxu0 %v3643
    %3786 = vmatprep.subr.bf16.mxu0 0
    %3787 = vmatpush1.bf16.msra.mxu0 %v3644
    %3788 = vmatprep.subr.bf16.mxu0 0
    %3789 = vmatpush1.bf16.msra.mxu0 %v3645
    %3790 = vmatprep.subr.bf16.mxu0 0
    %3791 = vmatpush1.bf16.msra.mxu0 %v3646
    %3792 = vmatprep.mubr.bf16.mxu0 %v2773
    %3793 = vmatmul.mubr.bf16.gmra.mrb[0].mxu0 %v2772
    %v3794 = vpop.f32.mrb[0].mxu0
    %v3795 = vadd.f32 %v3746, %v3794
    %v3796 = vpop.f32.mrb[0].mxu0
    %v3797 = vpop.f32.mrb[0].mxu0
    %v3798 = vadd.f32 %v3749, %v3797
    %v3799 = vpop.f32.mrb[0].mxu0
    %3800 = vmatprep.mubr.bf16.mxu0 %v2779
    %3801 = vmatmul.mubr.bf16.gmra.mrb[0].mxu0 %v2778
    %v3802 = vpop.f32.mrb[0].mxu0
    %v3803 = vadd.f32 %v3754, %v3802
    %v3804 = vpop.f32.mrb[0].mxu0
    %v3805 = vpop.f32.mrb[0].mxu0
    %v3806 = vadd.f32 %v3757, %v3805
    %v3807 = vpop.f32.mrb[0].mxu0
    %3808 = vdwg.mxu0
    %3809 = vmatprep.subr.bf16.mxu0 0
    %3810 = vmatpush1.bf16.msra.mxu0 %v3647
    %3811 = vmatprep.subr.bf16.mxu0 0
    %3812 = vmatpush1.bf16.msra.mxu0 %v3648
    %3813 = vmatprep.subr.bf16.mxu0 0
    %3814 = vmatpush1.bf16.msra.mxu0 %v3649
    %3815 = vmatprep.subr.bf16.mxu0 0
    %3816 = vmatpush1.bf16.msra.mxu0 %v3650
    %3817 = vmatprep.subr.bf16.mxu0 0
    %3818 = vmatpush1.bf16.msra.mxu0 %v3651
    %3819 = vmatprep.subr.bf16.mxu0 0
    %3820 = vmatpush1.bf16.msra.mxu0 %v3652
    %3821 = vmatprep.subr.bf16.mxu0 0
    %3822 = vmatpush1.bf16.msra.mxu0 %v3653
    %3823 = vmatprep.subr.bf16.mxu0 0
    %3824 = vmatpush1.bf16.msra.mxu0 %v3654
    %3825 = vmatprep.subr.bf16.mxu0 0
    %3826 = vmatpush1.bf16.msra.mxu0 %v3655
    %3827 = vmatprep.subr.bf16.mxu0 0
    %3828 = vmatpush1.bf16.msra.mxu0 %v3656
    %3829 = vmatprep.subr.bf16.mxu0 0
    %3830 = vmatpush1.bf16.msra.mxu0 %v3657
    %3831 = vmatprep.subr.bf16.mxu0 0
    %3832 = vmatpush1.bf16.msra.mxu0 %v3658
    %3833 = vmatprep.subr.bf16.mxu0 0
    %3834 = vmatpush1.bf16.msra.mxu0 %v3659
    %3835 = vmatprep.subr.bf16.mxu0 0
    %3836 = vmatpush1.bf16.msra.mxu0 %v3660
    %3837 = vmatprep.subr.bf16.mxu0 0
    %3838 = vmatpush1.bf16.msra.mxu0 %v3661
    %3839 = vmatprep.subr.bf16.mxu0 0
    %3840 = vmatpush1.bf16.msra.mxu0 %v3662
    %3841 = vmatprep.mubr.bf16.mxu0 %v2775
    %3842 = vmatmul.mubr.bf16.gmra.mrb[0].mxu0 %v2774
    %v3843 = vpop.f32.mrb[0].mxu0
    %v3844 = vadd.f32 %v3795, %v3843
    %v3845 = vpop.f32.mrb[0].mxu0
    %v3846 = vpop.f32.mrb[0].mxu0
    %v3847 = vadd.f32 %v3798, %v3846
    %v3848 = vpop.f32.mrb[0].mxu0
    %3849 = vmatprep.mubr.bf16.mxu0 %v2781
    %3850 = vmatmul.mubr.bf16.gmra.mrb[0].mxu0 %v2780
    %v3851 = vpop.f32.mrb[0].mxu0
    %v3852 = vadd.f32 %v3803, %v3851
    %v3853 = vpop.f32.mrb[0].mxu0
    %v3854 = vpop.f32.mrb[0].mxu0
    %v3855 = vadd.f32 %v3806, %v3854
    %v3856 = vpop.f32.mrb[0].mxu0
    %3857 = vdwg.mxu0
    %v3862 = vrot.slane %v3844, 1
    %v3863 = vrot.slane %v3847, 1
    %v3864 = vsel %vm1306, %v3862, %v3863
    %v3865 = vrot.slane %v3852, 1
    %v3866 = vrot.slane %v3855, 1
    %v3867 = vsel %vm1306, %v3865, %v3866
    %3868 = vrot.lane.b32.xlu0 %v3864, 126
    %v3869 = vpop.permute.xlu0 %3868
    %3870 = vrot.lane.b32.xlu0 %v3863, 126
    %v3871 = vpop.permute.xlu0 %3870
    %3872 = vrot.lane.b32.xlu0 %v3867, 126
    %v3873 = vpop.permute.xlu0 %3872
    %3874 = vrot.lane.b32.xlu0 %v3866, 126
    %v3875 = vpop.permute.xlu0 %3874
    %v3880 = vadd.f32 %v3844, %v3869
    %v3881 = vadd.f32 %v3847, %v3871
    %v3882 = vadd.f32 %v3852, %v3873
    %v3883 = vadd.f32 %v3855, %v3875
    %v3884 = vrot.slane %v3844, 2
    %v3885 = vrot.slane %v3847, 2
    %v3886 = vsel %vm1329, %v3884, %v3885
    %v3887 = vrot.slane %v3852, 2
    %v3888 = vrot.slane %v3855, 2
    %v3889 = vsel %vm1329, %v3887, %v3888
    %3890 = vrot.lane.b32.xlu0 %v3886, 124
    %v3891 = vpop.permute.xlu0 %3890
    %3892 = vrot.lane.b32.xlu0 %v3885, 124
    %v3893 = vpop.permute.xlu0 %3892
    %3894 = vrot.lane.b32.xlu0 %v3889, 124
    %v3895 = vpop.permute.xlu0 %3894
    %3896 = vrot.lane.b32.xlu0 %v3888, 124
    %v3897 = vpop.permute.xlu0 %3896
    %v3902 = vadd.f32 %v3880, %v3891
    %v3903 = vadd.f32 %v3881, %v3893
    %v3904 = vadd.f32 %v3882, %v3895
    %v3905 = vadd.f32 %v3883, %v3897
    %3906 = vrot.lane.b32.xlu0 %v1355, 124
    %v3907 = vpop.permute.xlu0 %3906
    %v3909 = vadd.f32 %v3902, %v3907
    %v3910 = vadd.f32 %v3903, %v3907
    %v3911 = vadd.f32 %v3904, %v3907
    %v3912 = vadd.f32 %v3905, %v3907
    %v3913 = vmax.f32 %v3909, 0.0
    %v3914 = vmax.f32 %v3910, 0.0
    %v3915 = vmax.f32 %v3911, 0.0
    %v3916 = vmax.f32 %v3912, 0.0
    %v3917 = vsel %vm1364, %v3913, -inf
    %v3918 = vsel %vm1366, %v3914, -inf
    %v3919 = vmax.f32 %v3917, %v3918
    %v3920 = vrot.slane %v3919, 4
    %v3921 = vmax.f32 %v3919, %v3920
    %v3922 = vrot.slane %v3921, 2
    %v3923 = vmax.f32 %v3921, %v3922
    %v3924 = vrot.slane %v3923, 1
    %v3925 = vmax.f32 %v3923, %v3924
    %v3926 = vsel %vm1364, %v3915, -inf
    %v3927 = vsel %vm1366, %v3916, -inf
    %v3928 = vmax.f32 %v3926, %v3927
    %v3929 = vrot.slane %v3928, 4
    %v3930 = vmax.f32 %v3928, %v3929
    %v3931 = vrot.slane %v3930, 2
    %v3932 = vmax.f32 %v3930, %v3931
    %v3933 = vrot.slane %v3932, 1
    %v3934 = vmax.f32 %v3932, %v3933
    %v3935 = vrot.slane %v3844, 3
    %v3936 = vrot.slane %v3847, 3
    %v3937 = vsel %vm1384, %v3935, %v3936
    %v3938 = vrot.slane %v3852, 3
    %v3939 = vrot.slane %v3855, 3
    %v3940 = vsel %vm1384, %v3938, %v3939
    %3941 = vrot.lane.b32.xlu0 %v3937, 122
    %v3942 = vpop.permute.xlu0 %3941
    %3943 = vrot.lane.b32.xlu0 %v3936, 122
    %v3944 = vpop.permute.xlu0 %3943
    %3945 = vrot.lane.b32.xlu0 %v3940, 122
    %v3946 = vpop.permute.xlu0 %3945
    %3947 = vrot.lane.b32.xlu0 %v3939, 122
    %v3948 = vpop.permute.xlu0 %3947
    %v3953 = vadd.f32 %v3902, %v3942
    %v3954 = vadd.f32 %v3903, %v3944
    %v3955 = vadd.f32 %v3904, %v3946
    %v3956 = vadd.f32 %v3905, %v3948
    %3957 = vrot.lane.b32.xlu0 %v1410, 2
    %v3958 = vpop.permute.xlu0 %3957
    %v3960 = vadd.f32 %v3953, %v3958
    %v3961 = vadd.f32 %v3954, %v3958
    %v3962 = vadd.f32 %v3955, %v3958
    %v3963 = vadd.f32 %v3956, %v3958
    %v3964 = vmax.f32 %v3960, 0.0
    %v3965 = vmax.f32 %v3961, 0.0
    %v3966 = vmax.f32 %v3962, 0.0
    %v3967 = vmax.f32 %v3963, 0.0
    %v3968 = vsel %vm1423, %v3964, -inf
    %v3969 = vsel %vm1425, %v3965, -inf
    %v3970 = vmax.f32 %v3968, %v3969
    %v3971 = vrot.slane %v3970, 4
    %v3972 = vmax.f32 %v3970, %v3971
    %v3973 = vrot.slane %v3972, 2
    %v3974 = vmax.f32 %v3972, %v3973
    %v3975 = vrot.slane %v3974, 1
    %v3976 = vmax.f32 %v3974, %v3975
    %v3977 = vsel %vm1423, %v3966, -inf
    %v3978 = vsel %vm1425, %v3967, -inf
    %v3979 = vmax.f32 %v3977, %v3978
    %v3980 = vrot.slane %v3979, 4
    %v3981 = vmax.f32 %v3979, %v3980
    %v3982 = vrot.slane %v3981, 2
    %v3983 = vmax.f32 %v3981, %v3982
    %v3984 = vrot.slane %v3983, 1
    %v3985 = vmax.f32 %v3983, %v3984
    %v3986 = vrot.slane %v3844, 4
    %v3987 = vrot.slane %v3847, 4
    %v3988 = vsel %vm1443, %v3986, %v3987
    %v3989 = vrot.slane %v3852, 4
    %v3990 = vrot.slane %v3855, 4
    %v3991 = vsel %vm1443, %v3989, %v3990
    %3992 = vrot.lane.b32.xlu0 %v3988, 120
    %v3993 = vpop.permute.xlu0 %3992
    %3994 = vrot.lane.b32.xlu0 %v3987, 120
    %v3995 = vpop.permute.xlu0 %3994
    %3996 = vrot.lane.b32.xlu0 %v3991, 120
    %v3997 = vpop.permute.xlu0 %3996
    %3998 = vrot.lane.b32.xlu0 %v3990, 120
    %v3999 = vpop.permute.xlu0 %3998
    %v4004 = vadd.f32 %v3953, %v3993
    %v4005 = vadd.f32 %v3954, %v3995
    %v4006 = vadd.f32 %v3955, %v3997
    %v4007 = vadd.f32 %v3956, %v3999
    %4008 = vrot.lane.b32.xlu0 %v1469, 10
    %v4009 = vpop.permute.xlu0 %4008
    %v4011 = vadd.f32 %v4004, %v4009
    %v4012 = vadd.f32 %v4005, %v4009
    %v4013 = vadd.f32 %v4006, %v4009
    %v4014 = vadd.f32 %v4007, %v4009
    %v4015 = vmax.f32 %v4011, 0.0
    %v4016 = vmax.f32 %v4012, 0.0
    %v4017 = vmax.f32 %v4013, 0.0
    %v4018 = vmax.f32 %v4014, 0.0
    %v4019 = vsel %vm1482, %v4015, -inf
    %v4020 = vsel %vm1484, %v4016, -inf
    %v4021 = vmax.f32 %v4019, %v4020
    %v4022 = vrot.slane %v4021, 4
    %v4023 = vmax.f32 %v4021, %v4022
    %v4024 = vrot.slane %v4023, 2
    %v4025 = vmax.f32 %v4023, %v4024
    %v4026 = vrot.slane %v4025, 1
    %v4027 = vmax.f32 %v4025, %v4026
    %v4028 = vsel %vm1482, %v4017, -inf
    %v4029 = vsel %vm1484, %v4018, -inf
    %v4030 = vmax.f32 %v4028, %v4029
    %v4031 = vrot.slane %v4030, 4
    %v4032 = vmax.f32 %v4030, %v4031
    %v4033 = vrot.slane %v4032, 2
    %v4034 = vmax.f32 %v4032, %v4033
    %v4035 = vrot.slane %v4034, 1
    %v4036 = vmax.f32 %v4034, %v4035
    %v4037 = vpack.c.bf16 %v100, %v94
    %v4038 = vpack.c.bf16 %v101, %v95
    %v4039 = vpack.c.bf16 %v102, %v96
    %v4040 = vpack.c.bf16 %v103, %v97
    %v4041 = vpack.c.bf16 %v104, %v98
    %v4042 = vpack.c.bf16 %v105, %v99
    %v4043 = vpack.c.bf16 %v196, %v190
    %v4044 = vpack.c.bf16 %v197, %v191
    %v4045 = vpack.c.bf16 %v198, %v192
    %v4046 = vpack.c.bf16 %v199, %v193
    %v4047 = vpack.c.bf16 %v200, %v194
    %v4048 = vpack.c.bf16 %v201, %v195
    %s4049 = scalar_lea.vmem %s1, 2304
    %v4050 = vld [vmem:[%s4049] sm:$0xf]
    %v4051 = vld [vmem:[%s4049 + $0x4] sm:$0xf]
    %v4052 = vld [vmem:[%s4049 + $0x8] sm:$0xf]
    %v4053 = vld [vmem:[%s4049 + $0xc] sm:$0xf]
    %v4054 = vld [vmem:[%s4049 + $0x10] sm:$0xf]
    %v4055 = vld [vmem:[%s4049 + $0x14] sm:$0xf]
    %v4056 = vld [vmem:[%s4049 + $0x18] sm:$0xf]
    %v4057 = vld [vmem:[%s4049 + $0x1c] sm:$0xf]
    %v4058 = vld [vmem:[%s4049 + $0x20] sm:$0xf]
    %v4059 = vld [vmem:[%s4049 + $0x24] sm:$0xf]
    %v4060 = vld [vmem:[%s4049 + $0x28] sm:$0xf]
    %v4061 = vld [vmem:[%s4049 + $0x2c] sm:$0xf]
    %v4062 = vld [vmem:[%s4049 + $0x30] sm:$0xf]
    %v4063 = vld [vmem:[%s4049 + $0x34] sm:$0xf]
    %v4064 = vld [vmem:[%s4049 + $0x38] sm:$0xf]
    %v4065 = vld [vmem:[%s4049 + $0x3c] sm:$0xf]
    %v4066 = vld [vmem:[%s4049 + $0x40] sm:$0xf]
    %v4067 = vld [vmem:[%s4049 + $0x44] sm:$0xf]
    %v4068 = vld [vmem:[%s4049 + $0x48] sm:$0xf]
    %v4069 = vld [vmem:[%s4049 + $0x4c] sm:$0xf]
    %v4070 = vld [vmem:[%s4049 + $0x50] sm:$0xf]
    %v4071 = vld [vmem:[%s4049 + $0x54] sm:$0xf]
    %v4072 = vld [vmem:[%s4049 + $0x58] sm:$0xf]
    %v4073 = vld [vmem:[%s4049 + $0x5c] sm:$0xf]
    %v4074 = vld [vmem:[%s4049 + $0x60] sm:$0xf]
    %v4075 = vld [vmem:[%s4049 + $0x64] sm:$0xf]
    %v4076 = vld [vmem:[%s4049 + $0x68] sm:$0xf]
    %v4077 = vld [vmem:[%s4049 + $0x6c] sm:$0xf]
    %v4078 = vld [vmem:[%s4049 + $0x70] sm:$0xf]
    %v4079 = vld [vmem:[%s4049 + $0x74] sm:$0xf]
    %v4080 = vld [vmem:[%s4049 + $0x78] sm:$0xf]
    %v4081 = vld [vmem:[%s4049 + $0x7c] sm:$0xf]
    %v4082 = vld [vmem:[%s4049 + $0x80] sm:$0xf]
    %v4083 = vld [vmem:[%s4049 + $0x84] sm:$0xf]
    %v4084 = vld [vmem:[%s4049 + $0x88] sm:$0xf]
    %v4085 = vld [vmem:[%s4049 + $0x8c] sm:$0xf]
    %v4086 = vld [vmem:[%s4049 + $0x90] sm:$0xf]
    %v4087 = vld [vmem:[%s4049 + $0x94] sm:$0xf]
    %v4088 = vld [vmem:[%s4049 + $0x98] sm:$0xf]
    %v4089 = vld [vmem:[%s4049 + $0x9c] sm:$0xf]
    %v4090 = vld [vmem:[%s4049 + $0xa0] sm:$0xf]
    %v4091 = vld [vmem:[%s4049 + $0xa4] sm:$0xf]
    %v4092 = vld [vmem:[%s4049 + $0xa8] sm:$0xf]
    %v4093 = vld [vmem:[%s4049 + $0xac] sm:$0xf]
    %v4094 = vld [vmem:[%s4049 + $0xb0] sm:$0xf]
    %v4095 = vld [vmem:[%s4049 + $0xb4] sm:$0xf]
    %v4096 = vld [vmem:[%s4049 + $0xb8] sm:$0xf]
    %v4097 = vld [vmem:[%s4049 + $0xbc] sm:$0xf]
    %v4098 = vld [vmem:[%s4049 + $0xc0] sm:$0xf]
    %v4099 = vld [vmem:[%s4049 + $0xc4] sm:$0xf]
    %v4100 = vld [vmem:[%s4049 + $0xc8] sm:$0xf]
    %v4101 = vld [vmem:[%s4049 + $0xcc] sm:$0xf]
    %v4102 = vld [vmem:[%s4049 + $0xd0] sm:$0xf]
    %v4103 = vld [vmem:[%s4049 + $0xd4] sm:$0xf]
    %v4104 = vld [vmem:[%s4049 + $0xd8] sm:$0xf]
    %v4105 = vld [vmem:[%s4049 + $0xdc] sm:$0xf]
    %v4106 = vld [vmem:[%s4049 + $0xe0] sm:$0xf]
    %v4107 = vld [vmem:[%s4049 + $0xe4] sm:$0xf]
    %v4108 = vld [vmem:[%s4049 + $0xe8] sm:$0xf]
    %v4109 = vld [vmem:[%s4049 + $0xec] sm:$0xf]
    %v4110 = vld [vmem:[%s4049 + $0xf0] sm:$0xf]
    %v4111 = vld [vmem:[%s4049 + $0xf4] sm:$0xf]
    %v4112 = vld [vmem:[%s4049 + $0xf8] sm:$0xf]
    %v4113 = vld [vmem:[%s4049 + $0xfc] sm:$0xf]
    %v4114 = vld [vmem:[%s4049 + $0x100] sm:$0xf]
    %v4115 = vld [vmem:[%s4049 + $0x104] sm:$0xf]
    %v4116 = vld [vmem:[%s4049 + $0x108] sm:$0xf]
    %v4117 = vld [vmem:[%s4049 + $0x10c] sm:$0xf]
    %v4118 = vld [vmem:[%s4049 + $0x110] sm:$0xf]
    %v4119 = vld [vmem:[%s4049 + $0x114] sm:$0xf]
    %v4120 = vld [vmem:[%s4049 + $0x118] sm:$0xf]
    %v4121 = vld [vmem:[%s4049 + $0x11c] sm:$0xf]
    %v4122 = vld [vmem:[%s4049 + $0x120] sm:$0xf]
    %v4123 = vld [vmem:[%s4049 + $0x124] sm:$0xf]
    %v4124 = vld [vmem:[%s4049 + $0x128] sm:$0xf]
    %v4125 = vld [vmem:[%s4049 + $0x12c] sm:$0xf]
    %v4126 = vld [vmem:[%s4049 + $0x130] sm:$0xf]
    %v4127 = vld [vmem:[%s4049 + $0x134] sm:$0xf]
    %v4128 = vld [vmem:[%s4049 + $0x138] sm:$0xf]
    %v4129 = vld [vmem:[%s4049 + $0x13c] sm:$0xf]
    %v4130 = vld [vmem:[%s4049 + $0x140] sm:$0xf]
    %v4131 = vld [vmem:[%s4049 + $0x144] sm:$0xf]
    %v4132 = vld [vmem:[%s4049 + $0x148] sm:$0xf]
    %v4133 = vld [vmem:[%s4049 + $0x14c] sm:$0xf]
    %v4134 = vld [vmem:[%s4049 + $0x150] sm:$0xf]
    %v4135 = vld [vmem:[%s4049 + $0x154] sm:$0xf]
    %v4136 = vld [vmem:[%s4049 + $0x158] sm:$0xf]
    %v4137 = vld [vmem:[%s4049 + $0x15c] sm:$0xf]
    %v4138 = vld [vmem:[%s4049 + $0x160] sm:$0xf]
    %v4139 = vld [vmem:[%s4049 + $0x164] sm:$0xf]
    %v4140 = vld [vmem:[%s4049 + $0x168] sm:$0xf]
    %v4141 = vld [vmem:[%s4049 + $0x16c] sm:$0xf]
    %v4142 = vld [vmem:[%s4049 + $0x170] sm:$0xf]
    %v4143 = vld [vmem:[%s4049 + $0x174] sm:$0xf]
    %v4144 = vld [vmem:[%s4049 + $0x178] sm:$0xf]
    %v4145 = vld [vmem:[%s4049 + $0x17c] sm:$0xf]
    %v4146 = vpack.c.bf16 %v112, %v106
    %v4147 = vpack.c.bf16 %v113, %v107
    %v4148 = vpack.c.bf16 %v114, %v108
    %v4149 = vpack.c.bf16 %v115, %v109
    %v4150 = vpack.c.bf16 %v116, %v110
    %v4151 = vpack.c.bf16 %v117, %v111
    %v4152 = vpack.c.bf16 %v208, %v202
    %v4153 = vpack.c.bf16 %v209, %v203
    %v4154 = vpack.c.bf16 %v210, %v204
    %v4155 = vpack.c.bf16 %v211, %v205
    %v4156 = vpack.c.bf16 %v212, %v206
    %v4157 = vpack.c.bf16 %v213, %v207
    %s4158 = scalar_lea.vmem %s1, 2688
    %v4159 = vld [vmem:[%s4158] sm:$0xf]
    %v4160 = vld [vmem:[%s4158 + $0x4] sm:$0xf]
    %v4161 = vld [vmem:[%s4158 + $0x8] sm:$0xf]
    %v4162 = vld [vmem:[%s4158 + $0xc] sm:$0xf]
    %v4163 = vld [vmem:[%s4158 + $0x10] sm:$0xf]
    %v4164 = vld [vmem:[%s4158 + $0x14] sm:$0xf]
    %v4165 = vld [vmem:[%s4158 + $0x18] sm:$0xf]
    %v4166 = vld [vmem:[%s4158 + $0x1c] sm:$0xf]
    %v4167 = vld [vmem:[%s4158 + $0x20] sm:$0xf]
    %v4168 = vld [vmem:[%s4158 + $0x24] sm:$0xf]
    %v4169 = vld [vmem:[%s4158 + $0x28] sm:$0xf]
    %v4170 = vld [vmem:[%s4158 + $0x2c] sm:$0xf]
    %v4171 = vld [vmem:[%s4158 + $0x30] sm:$0xf]
    %v4172 = vld [vmem:[%s4158 + $0x34] sm:$0xf]
    %v4173 = vld [vmem:[%s4158 + $0x38] sm:$0xf]
    %v4174 = vld [vmem:[%s4158 + $0x3c] sm:$0xf]
    %v4175 = vld [vmem:[%s4158 + $0x40] sm:$0xf]
    %v4176 = vld [vmem:[%s4158 + $0x44] sm:$0xf]
    %v4177 = vld [vmem:[%s4158 + $0x48] sm:$0xf]
    %v4178 = vld [vmem:[%s4158 + $0x4c] sm:$0xf]
    %v4179 = vld [vmem:[%s4158 + $0x50] sm:$0xf]
    %v4180 = vld [vmem:[%s4158 + $0x54] sm:$0xf]
    %v4181 = vld [vmem:[%s4158 + $0x58] sm:$0xf]
    %v4182 = vld [vmem:[%s4158 + $0x5c] sm:$0xf]
    %v4183 = vld [vmem:[%s4158 + $0x60] sm:$0xf]
    %v4184 = vld [vmem:[%s4158 + $0x64] sm:$0xf]
    %v4185 = vld [vmem:[%s4158 + $0x68] sm:$0xf]
    %v4186 = vld [vmem:[%s4158 + $0x6c] sm:$0xf]
    %v4187 = vld [vmem:[%s4158 + $0x70] sm:$0xf]
    %v4188 = vld [vmem:[%s4158 + $0x74] sm:$0xf]
    %v4189 = vld [vmem:[%s4158 + $0x78] sm:$0xf]
    %v4190 = vld [vmem:[%s4158 + $0x7c] sm:$0xf]
    %v4191 = vld [vmem:[%s4158 + $0x80] sm:$0xf]
    %v4192 = vld [vmem:[%s4158 + $0x84] sm:$0xf]
    %v4193 = vld [vmem:[%s4158 + $0x88] sm:$0xf]
    %v4194 = vld [vmem:[%s4158 + $0x8c] sm:$0xf]
    %v4195 = vld [vmem:[%s4158 + $0x90] sm:$0xf]
    %v4196 = vld [vmem:[%s4158 + $0x94] sm:$0xf]
    %v4197 = vld [vmem:[%s4158 + $0x98] sm:$0xf]
    %v4198 = vld [vmem:[%s4158 + $0x9c] sm:$0xf]
    %v4199 = vld [vmem:[%s4158 + $0xa0] sm:$0xf]
    %v4200 = vld [vmem:[%s4158 + $0xa4] sm:$0xf]
    %v4201 = vld [vmem:[%s4158 + $0xa8] sm:$0xf]
    %v4202 = vld [vmem:[%s4158 + $0xac] sm:$0xf]
    %v4203 = vld [vmem:[%s4158 + $0xb0] sm:$0xf]
    %v4204 = vld [vmem:[%s4158 + $0xb4] sm:$0xf]
    %v4205 = vld [vmem:[%s4158 + $0xb8] sm:$0xf]
    %v4206 = vld [vmem:[%s4158 + $0xbc] sm:$0xf]
    %v4207 = vld [vmem:[%s4158 + $0xc0] sm:$0xf]
    %v4208 = vld [vmem:[%s4158 + $0xc4] sm:$0xf]
    %v4209 = vld [vmem:[%s4158 + $0xc8] sm:$0xf]
    %v4210 = vld [vmem:[%s4158 + $0xcc] sm:$0xf]
    %v4211 = vld [vmem:[%s4158 + $0xd0] sm:$0xf]
    %v4212 = vld [vmem:[%s4158 + $0xd4] sm:$0xf]
    %v4213 = vld [vmem:[%s4158 + $0xd8] sm:$0xf]
    %v4214 = vld [vmem:[%s4158 + $0xdc] sm:$0xf]
    %v4215 = vld [vmem:[%s4158 + $0xe0] sm:$0xf]
    %v4216 = vld [vmem:[%s4158 + $0xe4] sm:$0xf]
    %v4217 = vld [vmem:[%s4158 + $0xe8] sm:$0xf]
    %v4218 = vld [vmem:[%s4158 + $0xec] sm:$0xf]
    %v4219 = vld [vmem:[%s4158 + $0xf0] sm:$0xf]
    %v4220 = vld [vmem:[%s4158 + $0xf4] sm:$0xf]
    %v4221 = vld [vmem:[%s4158 + $0xf8] sm:$0xf]
    %v4222 = vld [vmem:[%s4158 + $0xfc] sm:$0xf]
    %v4223 = vld [vmem:[%s4158 + $0x100] sm:$0xf]
    %v4224 = vld [vmem:[%s4158 + $0x104] sm:$0xf]
    %v4225 = vld [vmem:[%s4158 + $0x108] sm:$0xf]
    %v4226 = vld [vmem:[%s4158 + $0x10c] sm:$0xf]
    %v4227 = vld [vmem:[%s4158 + $0x110] sm:$0xf]
    %v4228 = vld [vmem:[%s4158 + $0x114] sm:$0xf]
    %v4229 = vld [vmem:[%s4158 + $0x118] sm:$0xf]
    %v4230 = vld [vmem:[%s4158 + $0x11c] sm:$0xf]
    %v4231 = vld [vmem:[%s4158 + $0x120] sm:$0xf]
    %v4232 = vld [vmem:[%s4158 + $0x124] sm:$0xf]
    %v4233 = vld [vmem:[%s4158 + $0x128] sm:$0xf]
    %v4234 = vld [vmem:[%s4158 + $0x12c] sm:$0xf]
    %v4235 = vld [vmem:[%s4158 + $0x130] sm:$0xf]
    %v4236 = vld [vmem:[%s4158 + $0x134] sm:$0xf]
    %v4237 = vld [vmem:[%s4158 + $0x138] sm:$0xf]
    %v4238 = vld [vmem:[%s4158 + $0x13c] sm:$0xf]
    %v4239 = vld [vmem:[%s4158 + $0x140] sm:$0xf]
    %v4240 = vld [vmem:[%s4158 + $0x144] sm:$0xf]
    %v4241 = vld [vmem:[%s4158 + $0x148] sm:$0xf]
    %v4242 = vld [vmem:[%s4158 + $0x14c] sm:$0xf]
    %v4243 = vld [vmem:[%s4158 + $0x150] sm:$0xf]
    %v4244 = vld [vmem:[%s4158 + $0x154] sm:$0xf]
    %v4245 = vld [vmem:[%s4158 + $0x158] sm:$0xf]
    %v4246 = vld [vmem:[%s4158 + $0x15c] sm:$0xf]
    %v4247 = vld [vmem:[%s4158 + $0x160] sm:$0xf]
    %v4248 = vld [vmem:[%s4158 + $0x164] sm:$0xf]
    %v4249 = vld [vmem:[%s4158 + $0x168] sm:$0xf]
    %v4250 = vld [vmem:[%s4158 + $0x16c] sm:$0xf]
    %v4251 = vld [vmem:[%s4158 + $0x170] sm:$0xf]
    %v4252 = vld [vmem:[%s4158 + $0x174] sm:$0xf]
    %v4253 = vld [vmem:[%s4158 + $0x178] sm:$0xf]
    %v4254 = vld [vmem:[%s4158 + $0x17c] sm:$0xf]
    %v4351 = vunpack.c.l.b16 %v4159
    %v4352 = vunpack.c.l.b16 %v4160
    %v4353 = vunpack.c.l.b16 %v4161
    %v4354 = vunpack.c.l.b16 %v4162
    %v4355 = vunpack.c.l.b16 %v4163
    %v4356 = vunpack.c.l.b16 %v4164
    %v4357 = vunpack.c.l.b16 %v4165
    %v4358 = vunpack.c.l.b16 %v4166
    %v4359 = vunpack.c.l.b16 %v4167
    %v4360 = vunpack.c.l.b16 %v4168
    %v4361 = vunpack.c.l.b16 %v4169
    %v4362 = vunpack.c.l.b16 %v4170
    %v4363 = vunpack.c.l.b16 %v4171
    %v4364 = vunpack.c.l.b16 %v4172
    %v4365 = vunpack.c.l.b16 %v4173
    %v4366 = vunpack.c.l.b16 %v4174
    %v4367 = vunpack.c.l.b16 %v4175
    %v4368 = vunpack.c.l.b16 %v4176
    %v4369 = vunpack.c.l.b16 %v4177
    %v4370 = vunpack.c.l.b16 %v4178
    %v4371 = vunpack.c.l.b16 %v4179
    %v4372 = vunpack.c.l.b16 %v4180
    %v4373 = vunpack.c.l.b16 %v4181
    %v4374 = vunpack.c.l.b16 %v4182
    %v4375 = vunpack.c.l.b16 %v4183
    %v4376 = vunpack.c.l.b16 %v4184
    %v4377 = vunpack.c.l.b16 %v4185
    %v4378 = vunpack.c.l.b16 %v4186
    %v4379 = vunpack.c.l.b16 %v4187
    %v4380 = vunpack.c.l.b16 %v4188
    %v4381 = vunpack.c.l.b16 %v4189
    %v4382 = vunpack.c.l.b16 %v4190
    %v4383 = vunpack.c.l.b16 %v4191
    %v4384 = vunpack.c.l.b16 %v4192
    %v4385 = vunpack.c.l.b16 %v4193
    %v4386 = vunpack.c.l.b16 %v4194
    %v4387 = vunpack.c.l.b16 %v4195
    %v4388 = vunpack.c.l.b16 %v4196
    %v4389 = vunpack.c.l.b16 %v4197
    %v4390 = vunpack.c.l.b16 %v4198
    %v4391 = vunpack.c.l.b16 %v4199
    %v4392 = vunpack.c.l.b16 %v4200
    %v4393 = vunpack.c.l.b16 %v4201
    %v4394 = vunpack.c.l.b16 %v4202
    %v4395 = vunpack.c.l.b16 %v4203
    %v4396 = vunpack.c.l.b16 %v4204
    %v4397 = vunpack.c.l.b16 %v4205
    %v4398 = vunpack.c.l.b16 %v4206
    %v4399 = vunpack.c.l.b16 %v4207
    %v4400 = vunpack.c.l.b16 %v4208
    %v4401 = vunpack.c.l.b16 %v4209
    %v4402 = vunpack.c.l.b16 %v4210
    %v4403 = vunpack.c.l.b16 %v4211
    %v4404 = vunpack.c.l.b16 %v4212
    %v4405 = vunpack.c.l.b16 %v4213
    %v4406 = vunpack.c.l.b16 %v4214
    %v4407 = vunpack.c.l.b16 %v4215
    %v4408 = vunpack.c.l.b16 %v4216
    %v4409 = vunpack.c.l.b16 %v4217
    %v4410 = vunpack.c.l.b16 %v4218
    %v4411 = vunpack.c.l.b16 %v4219
    %v4412 = vunpack.c.l.b16 %v4220
    %v4413 = vunpack.c.l.b16 %v4221
    %v4414 = vunpack.c.l.b16 %v4222
    %v4415 = vunpack.c.l.b16 %v4223
    %v4416 = vunpack.c.l.b16 %v4224
    %v4417 = vunpack.c.l.b16 %v4225
    %v4418 = vunpack.c.l.b16 %v4226
    %v4419 = vunpack.c.l.b16 %v4227
    %v4420 = vunpack.c.l.b16 %v4228
    %v4421 = vunpack.c.l.b16 %v4229
    %v4422 = vunpack.c.l.b16 %v4230
    %v4423 = vunpack.c.l.b16 %v4231
    %v4424 = vunpack.c.l.b16 %v4232
    %v4425 = vunpack.c.l.b16 %v4233
    %v4426 = vunpack.c.l.b16 %v4234
    %v4427 = vunpack.c.l.b16 %v4235
    %v4428 = vunpack.c.l.b16 %v4236
    %v4429 = vunpack.c.l.b16 %v4237
    %v4430 = vunpack.c.l.b16 %v4238
    %v4431 = vunpack.c.l.b16 %v4239
    %v4432 = vunpack.c.l.b16 %v4240
    %v4433 = vunpack.c.l.b16 %v4241
    %v4434 = vunpack.c.l.b16 %v4242
    %v4435 = vunpack.c.l.b16 %v4243
    %v4436 = vunpack.c.l.b16 %v4244
    %v4437 = vunpack.c.l.b16 %v4245
    %v4438 = vunpack.c.l.b16 %v4246
    %v4439 = vunpack.c.l.b16 %v4247
    %v4440 = vunpack.c.l.b16 %v4248
    %v4441 = vunpack.c.l.b16 %v4249
    %v4442 = vunpack.c.l.b16 %v4250
    %v4443 = vunpack.c.l.b16 %v4251
    %v4444 = vunpack.c.l.b16 %v4252
    %v4445 = vunpack.c.l.b16 %v4253
    %v4446 = vunpack.c.l.b16 %v4254
    %v4447 = vpack.c.b16 %v4352, %v4351
    %v4448 = vpack.c.b16 %v4354, %v4353
    %v4449 = vpack.c.b16 %v4356, %v4355
    %v4450 = vpack.c.b16 %v4358, %v4357
    %v4451 = vpack.c.b16 %v4360, %v4359
    %v4452 = vpack.c.b16 %v4362, %v4361
    %v4453 = vpack.c.b16 %v4364, %v4363
    %v4454 = vpack.c.b16 %v4366, %v4365
    %v4455 = vpack.c.b16 %v4368, %v4367
    %v4456 = vpack.c.b16 %v4370, %v4369
    %v4457 = vpack.c.b16 %v4372, %v4371
    %v4458 = vpack.c.b16 %v4374, %v4373
    %v4459 = vpack.c.b16 %v4376, %v4375
    %v4460 = vpack.c.b16 %v4378, %v4377
    %v4461 = vpack.c.b16 %v4380, %v4379
    %v4462 = vpack.c.b16 %v4382, %v4381
    %v4463 = vpack.c.b16 %v4384, %v4383
    %v4464 = vpack.c.b16 %v4386, %v4385
    %v4465 = vpack.c.b16 %v4388, %v4387
    %v4466 = vpack.c.b16 %v4390, %v4389
    %v4467 = vpack.c.b16 %v4392, %v4391
    %v4468 = vpack.c.b16 %v4394, %v4393
    %v4469 = vpack.c.b16 %v4396, %v4395
    %v4470 = vpack.c.b16 %v4398, %v4397
    %v4471 = vpack.c.b16 %v4400, %v4399
    %v4472 = vpack.c.b16 %v4402, %v4401
    %v4473 = vpack.c.b16 %v4404, %v4403
    %v4474 = vpack.c.b16 %v4406, %v4405
    %v4475 = vpack.c.b16 %v4408, %v4407
    %v4476 = vpack.c.b16 %v4410, %v4409
    %v4477 = vpack.c.b16 %v4412, %v4411
    %v4478 = vpack.c.b16 %v4414, %v4413
    %v4479 = vpack.c.b16 %v4416, %v4415
    %v4480 = vpack.c.b16 %v4418, %v4417
    %v4481 = vpack.c.b16 %v4420, %v4419
    %v4482 = vpack.c.b16 %v4422, %v4421
    %v4483 = vpack.c.b16 %v4424, %v4423
    %v4484 = vpack.c.b16 %v4426, %v4425
    %v4485 = vpack.c.b16 %v4428, %v4427
    %v4486 = vpack.c.b16 %v4430, %v4429
    %v4487 = vpack.c.b16 %v4432, %v4431
    %v4488 = vpack.c.b16 %v4434, %v4433
    %v4489 = vpack.c.b16 %v4436, %v4435
    %v4490 = vpack.c.b16 %v4438, %v4437
    %v4491 = vpack.c.b16 %v4440, %v4439
    %v4492 = vpack.c.b16 %v4442, %v4441
    %v4493 = vpack.c.b16 %v4444, %v4443
    %v4494 = vpack.c.b16 %v4446, %v4445
    %4543 = vmatprep.subr.bf16.mxu0 0
    %4544 = vmatpush1.bf16.msra.mxu0 %v4447
    %4545 = vmatprep.subr.bf16.mxu0 0
    %4546 = vmatpush1.bf16.msra.mxu0 %v4448
    %4547 = vmatprep.subr.bf16.mxu0 0
    %4548 = vmatpush1.bf16.msra.mxu0 %v4449
    %4549 = vmatprep.subr.bf16.mxu0 0
    %4550 = vmatpush1.bf16.msra.mxu0 %v4450
    %4551 = vmatprep.subr.bf16.mxu0 0
    %4552 = vmatpush1.bf16.msra.mxu0 %v4451
    %4553 = vmatprep.subr.bf16.mxu0 0
    %4554 = vmatpush1.bf16.msra.mxu0 %v4452
    %4555 = vmatprep.subr.bf16.mxu0 0
    %4556 = vmatpush1.bf16.msra.mxu0 %v4453
    %4557 = vmatprep.subr.bf16.mxu0 0
    %4558 = vmatpush1.bf16.msra.mxu0 %v4454
    %4559 = vmatprep.subr.bf16.mxu0 0
    %4560 = vmatpush1.bf16.msra.mxu0 %v4455
    %4561 = vmatprep.subr.bf16.mxu0 0
    %4562 = vmatpush1.bf16.msra.mxu0 %v4456
    %4563 = vmatprep.subr.bf16.mxu0 0
    %4564 = vmatpush1.bf16.msra.mxu0 %v4457
    %4565 = vmatprep.subr.bf16.mxu0 0
    %4566 = vmatpush1.bf16.msra.mxu0 %v4458
    %4567 = vmatprep.subr.bf16.mxu0 0
    %4568 = vmatpush1.bf16.msra.mxu0 %v4459
    %4569 = vmatprep.subr.bf16.mxu0 0
    %4570 = vmatpush1.bf16.msra.mxu0 %v4460
    %4571 = vmatprep.subr.bf16.mxu0 0
    %4572 = vmatpush1.bf16.msra.mxu0 %v4461
    %4573 = vmatprep.subr.bf16.mxu0 0
    %4574 = vmatpush1.bf16.msra.mxu0 %v4462
    %4575 = vmatprep.mubr.bf16.mxu0 %v4147
    %4576 = vmatmul.mubr.bf16.gmra.mrb[0].mxu0 %v4146
    %v4577 = vpop.f32.mrb[0].mxu0
    %v4578 = vadd.f32 0.0, %v4577
    %v4579 = vpop.f32.mrb[0].mxu0
    %v4580 = vpop.f32.mrb[0].mxu0
    %v4581 = vadd.f32 0.0, %v4580
    %v4582 = vpop.f32.mrb[0].mxu0
    %4583 = vmatprep.mubr.bf16.mxu0 %v4153
    %4584 = vmatmul.mubr.bf16.gmra.mrb[0].mxu0 %v4152
    %v4585 = vpop.f32.mrb[0].mxu0
    %v4586 = vadd.f32 0.0, %v4585
    %v4587 = vpop.f32.mrb[0].mxu0
    %v4588 = vpop.f32.mrb[0].mxu0
    %v4589 = vadd.f32 0.0, %v4588
    %v4590 = vpop.f32.mrb[0].mxu0
    %4591 = vdwg.mxu0
    %4592 = vmatprep.subr.bf16.mxu0 0
    %4593 = vmatpush1.bf16.msra.mxu0 %v4463
    %4594 = vmatprep.subr.bf16.mxu0 0
    %4595 = vmatpush1.bf16.msra.mxu0 %v4464
    %4596 = vmatprep.subr.bf16.mxu0 0
    %4597 = vmatpush1.bf16.msra.mxu0 %v4465
    %4598 = vmatprep.subr.bf16.mxu0 0
    %4599 = vmatpush1.bf16.msra.mxu0 %v4466
    %4600 = vmatprep.subr.bf16.mxu0 0
    %4601 = vmatpush1.bf16.msra.mxu0 %v4467
    %4602 = vmatprep.subr.bf16.mxu0 0
    %4603 = vmatpush1.bf16.msra.mxu0 %v4468
    %4604 = vmatprep.subr.bf16.mxu0 0
    %4605 = vmatpush1.bf16.msra.mxu0 %v4469
    %4606 = vmatprep.subr.bf16.mxu0 0
    %4607 = vmatpush1.bf16.msra.mxu0 %v4470
    %4608 = vmatprep.subr.bf16.mxu0 0
    %4609 = vmatpush1.bf16.msra.mxu0 %v4471
    %4610 = vmatprep.subr.bf16.mxu0 0
    %4611 = vmatpush1.bf16.msra.mxu0 %v4472
    %4612 = vmatprep.subr.bf16.mxu0 0
    %4613 = vmatpush1.bf16.msra.mxu0 %v4473
    %4614 = vmatprep.subr.bf16.mxu0 0
    %4615 = vmatpush1.bf16.msra.mxu0 %v4474
    %4616 = vmatprep.subr.bf16.mxu0 0
    %4617 = vmatpush1.bf16.msra.mxu0 %v4475
    %4618 = vmatprep.subr.bf16.mxu0 0
    %4619 = vmatpush1.bf16.msra.mxu0 %v4476
    %4620 = vmatprep.subr.bf16.mxu0 0
    %4621 = vmatpush1.bf16.msra.mxu0 %v4477
    %4622 = vmatprep.subr.bf16.mxu0 0
    %4623 = vmatpush1.bf16.msra.mxu0 %v4478
    %4624 = vmatprep.mubr.bf16.mxu0 %v4149
    %4625 = vmatmul.mubr.bf16.gmra.mrb[0].mxu0 %v4148
    %v4626 = vpop.f32.mrb[0].mxu0
    %v4627 = vadd.f32 %v4578, %v4626
    %v4628 = vpop.f32.mrb[0].mxu0
    %v4629 = vpop.f32.mrb[0].mxu0
    %v4630 = vadd.f32 %v4581, %v4629
    %v4631 = vpop.f32.mrb[0].mxu0
    %4632 = vmatprep.mubr.bf16.mxu0 %v4155
    %4633 = vmatmul.mubr.bf16.gmra.mrb[0].mxu0 %v4154
    %v4634 = vpop.f32.mrb[0].mxu0
    %v4635 = vadd.f32 %v4586, %v4634
    %v4636 = vpop.f32.mrb[0].mxu0
    %v4637 = vpop.f32.mrb[0].mxu0
    %v4638 = vadd.f32 %v4589, %v4637
    %v4639 = vpop.f32.mrb[0].mxu0
    %4640 = vdwg.mxu0
    %4641 = vmatprep.subr.bf16.mxu0 0
    %4642 = vmatpush1.bf16.msra.mxu0 %v4479
    %4643 = vmatprep.subr.bf16.mxu0 0
    %4644 = vmatpush1.bf16.msra.mxu0 %v4480
    %4645 = vmatprep.subr.bf16.mxu0 0
    %4646 = vmatpush1.bf16.msra.mxu0 %v4481
    %4647 = vmatprep.subr.bf16.mxu0 0
    %4648 = vmatpush1.bf16.msra.mxu0 %v4482
    %4649 = vmatprep.subr.bf16.mxu0 0
    %4650 = vmatpush1.bf16.msra.mxu0 %v4483
    %4651 = vmatprep.subr.bf16.mxu0 0
    %4652 = vmatpush1.bf16.msra.mxu0 %v4484
    %4653 = vmatprep.subr.bf16.mxu0 0
    %4654 = vmatpush1.bf16.msra.mxu0 %v4485
    %4655 = vmatprep.subr.bf16.mxu0 0
    %4656 = vmatpush1.bf16.msra.mxu0 %v4486
    %4657 = vmatprep.subr.bf16.mxu0 0
    %4658 = vmatpush1.bf16.msra.mxu0 %v4487
    %4659 = vmatprep.subr.bf16.mxu0 0
    %4660 = vmatpush1.bf16.msra.mxu0 %v4488
    %4661 = vmatprep.subr.bf16.mxu0 0
    %4662 = vmatpush1.bf16.msra.mxu0 %v4489
    %4663 = vmatprep.subr.bf16.mxu0 0
    %4664 = vmatpush1.bf16.msra.mxu0 %v4490
    %4665 = vmatprep.subr.bf16.mxu0 0
    %4666 = vmatpush1.bf16.msra.mxu0 %v4491
    %4667 = vmatprep.subr.bf16.mxu0 0
    %4668 = vmatpush1.bf16.msra.mxu0 %v4492
    %4669 = vmatprep.subr.bf16.mxu0 0
    %4670 = vmatpush1.bf16.msra.mxu0 %v4493
    %4671 = vmatprep.subr.bf16.mxu0 0
    %4672 = vmatpush1.bf16.msra.mxu0 %v4494
    %4673 = vmatprep.mubr.bf16.mxu0 %v4151
    %4674 = vmatmul.mubr.bf16.gmra.mrb[0].mxu0 %v4150
    %v4675 = vpop.f32.mrb[0].mxu0
    %v4676 = vadd.f32 %v4627, %v4675
    %v4677 = vpop.f32.mrb[0].mxu0
    %v4678 = vpop.f32.mrb[0].mxu0
    %v4679 = vadd.f32 %v4630, %v4678
    %v4680 = vpop.f32.mrb[0].mxu0
    %4681 = vmatprep.mubr.bf16.mxu0 %v4157
    %4682 = vmatmul.mubr.bf16.gmra.mrb[0].mxu0 %v4156
    %v4683 = vpop.f32.mrb[0].mxu0
    %v4684 = vadd.f32 %v4635, %v4683
    %v4685 = vpop.f32.mrb[0].mxu0
    %v4686 = vpop.f32.mrb[0].mxu0
    %v4687 = vadd.f32 %v4638, %v4686
    %v4688 = vpop.f32.mrb[0].mxu0
    %4689 = vdwg.mxu0
    %v4786 = vunpack.c.l.b16 %v4050
    %v4787 = vunpack.c.l.b16 %v4051
    %v4788 = vunpack.c.l.b16 %v4052
    %v4789 = vunpack.c.l.b16 %v4053
    %v4790 = vunpack.c.l.b16 %v4054
    %v4791 = vunpack.c.l.b16 %v4055
    %v4792 = vunpack.c.l.b16 %v4056
    %v4793 = vunpack.c.l.b16 %v4057
    %v4794 = vunpack.c.l.b16 %v4058
    %v4795 = vunpack.c.l.b16 %v4059
    %v4796 = vunpack.c.l.b16 %v4060
    %v4797 = vunpack.c.l.b16 %v4061
    %v4798 = vunpack.c.l.b16 %v4062
    %v4799 = vunpack.c.l.b16 %v4063
    %v4800 = vunpack.c.l.b16 %v4064
    %v4801 = vunpack.c.l.b16 %v4065
    %v4802 = vunpack.c.l.b16 %v4066
    %v4803 = vunpack.c.l.b16 %v4067
    %v4804 = vunpack.c.l.b16 %v4068
    %v4805 = vunpack.c.l.b16 %v4069
    %v4806 = vunpack.c.l.b16 %v4070
    %v4807 = vunpack.c.l.b16 %v4071
    %v4808 = vunpack.c.l.b16 %v4072
    %v4809 = vunpack.c.l.b16 %v4073
    %v4810 = vunpack.c.l.b16 %v4074
    %v4811 = vunpack.c.l.b16 %v4075
    %v4812 = vunpack.c.l.b16 %v4076
    %v4813 = vunpack.c.l.b16 %v4077
    %v4814 = vunpack.c.l.b16 %v4078
    %v4815 = vunpack.c.l.b16 %v4079
    %v4816 = vunpack.c.l.b16 %v4080
    %v4817 = vunpack.c.l.b16 %v4081
    %v4818 = vunpack.c.l.b16 %v4082
    %v4819 = vunpack.c.l.b16 %v4083
    %v4820 = vunpack.c.l.b16 %v4084
    %v4821 = vunpack.c.l.b16 %v4085
    %v4822 = vunpack.c.l.b16 %v4086
    %v4823 = vunpack.c.l.b16 %v4087
    %v4824 = vunpack.c.l.b16 %v4088
    %v4825 = vunpack.c.l.b16 %v4089
    %v4826 = vunpack.c.l.b16 %v4090
    %v4827 = vunpack.c.l.b16 %v4091
    %v4828 = vunpack.c.l.b16 %v4092
    %v4829 = vunpack.c.l.b16 %v4093
    %v4830 = vunpack.c.l.b16 %v4094
    %v4831 = vunpack.c.l.b16 %v4095
    %v4832 = vunpack.c.l.b16 %v4096
    %v4833 = vunpack.c.l.b16 %v4097
    %v4834 = vunpack.c.l.b16 %v4098
    %v4835 = vunpack.c.l.b16 %v4099
    %v4836 = vunpack.c.l.b16 %v4100
    %v4837 = vunpack.c.l.b16 %v4101
    %v4838 = vunpack.c.l.b16 %v4102
    %v4839 = vunpack.c.l.b16 %v4103
    %v4840 = vunpack.c.l.b16 %v4104
    %v4841 = vunpack.c.l.b16 %v4105
    %v4842 = vunpack.c.l.b16 %v4106
    %v4843 = vunpack.c.l.b16 %v4107
    %v4844 = vunpack.c.l.b16 %v4108
    %v4845 = vunpack.c.l.b16 %v4109
    %v4846 = vunpack.c.l.b16 %v4110
    %v4847 = vunpack.c.l.b16 %v4111
    %v4848 = vunpack.c.l.b16 %v4112
    %v4849 = vunpack.c.l.b16 %v4113
    %v4850 = vunpack.c.l.b16 %v4114
    %v4851 = vunpack.c.l.b16 %v4115
    %v4852 = vunpack.c.l.b16 %v4116
    %v4853 = vunpack.c.l.b16 %v4117
    %v4854 = vunpack.c.l.b16 %v4118
    %v4855 = vunpack.c.l.b16 %v4119
    %v4856 = vunpack.c.l.b16 %v4120
    %v4857 = vunpack.c.l.b16 %v4121
    %v4858 = vunpack.c.l.b16 %v4122
    %v4859 = vunpack.c.l.b16 %v4123
    %v4860 = vunpack.c.l.b16 %v4124
    %v4861 = vunpack.c.l.b16 %v4125
    %v4862 = vunpack.c.l.b16 %v4126
    %v4863 = vunpack.c.l.b16 %v4127
    %v4864 = vunpack.c.l.b16 %v4128
    %v4865 = vunpack.c.l.b16 %v4129
    %v4866 = vunpack.c.l.b16 %v4130
    %v4867 = vunpack.c.l.b16 %v4131
    %v4868 = vunpack.c.l.b16 %v4132
    %v4869 = vunpack.c.l.b16 %v4133
    %v4870 = vunpack.c.l.b16 %v4134
    %v4871 = vunpack.c.l.b16 %v4135
    %v4872 = vunpack.c.l.b16 %v4136
    %v4873 = vunpack.c.l.b16 %v4137
    %v4874 = vunpack.c.l.b16 %v4138
    %v4875 = vunpack.c.l.b16 %v4139
    %v4876 = vunpack.c.l.b16 %v4140
    %v4877 = vunpack.c.l.b16 %v4141
    %v4878 = vunpack.c.l.b16 %v4142
    %v4879 = vunpack.c.l.b16 %v4143
    %v4880 = vunpack.c.l.b16 %v4144
    %v4881 = vunpack.c.l.b16 %v4145
    %v4882 = vpack.c.b16 %v4787, %v4786
    %v4883 = vpack.c.b16 %v4789, %v4788
    %v4884 = vpack.c.b16 %v4791, %v4790
    %v4885 = vpack.c.b16 %v4793, %v4792
    %v4886 = vpack.c.b16 %v4795, %v4794
    %v4887 = vpack.c.b16 %v4797, %v4796
    %v4888 = vpack.c.b16 %v4799, %v4798
    %v4889 = vpack.c.b16 %v4801, %v4800
    %v4890 = vpack.c.b16 %v4803, %v4802
    %v4891 = vpack.c.b16 %v4805, %v4804
    %v4892 = vpack.c.b16 %v4807, %v4806
    %v4893 = vpack.c.b16 %v4809, %v4808
    %v4894 = vpack.c.b16 %v4811, %v4810
    %v4895 = vpack.c.b16 %v4813, %v4812
    %v4896 = vpack.c.b16 %v4815, %v4814
    %v4897 = vpack.c.b16 %v4817, %v4816
    %v4898 = vpack.c.b16 %v4819, %v4818
    %v4899 = vpack.c.b16 %v4821, %v4820
    %v4900 = vpack.c.b16 %v4823, %v4822
    %v4901 = vpack.c.b16 %v4825, %v4824
    %v4902 = vpack.c.b16 %v4827, %v4826
    %v4903 = vpack.c.b16 %v4829, %v4828
    %v4904 = vpack.c.b16 %v4831, %v4830
    %v4905 = vpack.c.b16 %v4833, %v4832
    %v4906 = vpack.c.b16 %v4835, %v4834
    %v4907 = vpack.c.b16 %v4837, %v4836
    %v4908 = vpack.c.b16 %v4839, %v4838
    %v4909 = vpack.c.b16 %v4841, %v4840
    %v4910 = vpack.c.b16 %v4843, %v4842
    %v4911 = vpack.c.b16 %v4845, %v4844
    %v4912 = vpack.c.b16 %v4847, %v4846
    %v4913 = vpack.c.b16 %v4849, %v4848
    %v4914 = vpack.c.b16 %v4851, %v4850
    %v4915 = vpack.c.b16 %v4853, %v4852
    %v4916 = vpack.c.b16 %v4855, %v4854
    %v4917 = vpack.c.b16 %v4857, %v4856
    %v4918 = vpack.c.b16 %v4859, %v4858
    %v4919 = vpack.c.b16 %v4861, %v4860
    %v4920 = vpack.c.b16 %v4863, %v4862
    %v4921 = vpack.c.b16 %v4865, %v4864
    %v4922 = vpack.c.b16 %v4867, %v4866
    %v4923 = vpack.c.b16 %v4869, %v4868
    %v4924 = vpack.c.b16 %v4871, %v4870
    %v4925 = vpack.c.b16 %v4873, %v4872
    %v4926 = vpack.c.b16 %v4875, %v4874
    %v4927 = vpack.c.b16 %v4877, %v4876
    %v4928 = vpack.c.b16 %v4879, %v4878
    %v4929 = vpack.c.b16 %v4881, %v4880
    %4978 = vmatprep.subr.bf16.mxu0 0
    %4979 = vmatpush1.bf16.msra.mxu0 %v4882
    %4980 = vmatprep.subr.bf16.mxu0 0
    %4981 = vmatpush1.bf16.msra.mxu0 %v4883
    %4982 = vmatprep.subr.bf16.mxu0 0
    %4983 = vmatpush1.bf16.msra.mxu0 %v4884
    %4984 = vmatprep.subr.bf16.mxu0 0
    %4985 = vmatpush1.bf16.msra.mxu0 %v4885
    %4986 = vmatprep.subr.bf16.mxu0 0
    %4987 = vmatpush1.bf16.msra.mxu0 %v4886
    %4988 = vmatprep.subr.bf16.mxu0 0
    %4989 = vmatpush1.bf16.msra.mxu0 %v4887
    %4990 = vmatprep.subr.bf16.mxu0 0
    %4991 = vmatpush1.bf16.msra.mxu0 %v4888
    %4992 = vmatprep.subr.bf16.mxu0 0
    %4993 = vmatpush1.bf16.msra.mxu0 %v4889
    %4994 = vmatprep.subr.bf16.mxu0 0
    %4995 = vmatpush1.bf16.msra.mxu0 %v4890
    %4996 = vmatprep.subr.bf16.mxu0 0
    %4997 = vmatpush1.bf16.msra.mxu0 %v4891
    %4998 = vmatprep.subr.bf16.mxu0 0
    %4999 = vmatpush1.bf16.msra.mxu0 %v4892
    %5000 = vmatprep.subr.bf16.mxu0 0
    %5001 = vmatpush1.bf16.msra.mxu0 %v4893
    %5002 = vmatprep.subr.bf16.mxu0 0
    %5003 = vmatpush1.bf16.msra.mxu0 %v4894
    %5004 = vmatprep.subr.bf16.mxu0 0
    %5005 = vmatpush1.bf16.msra.mxu0 %v4895
    %5006 = vmatprep.subr.bf16.mxu0 0
    %5007 = vmatpush1.bf16.msra.mxu0 %v4896
    %5008 = vmatprep.subr.bf16.mxu0 0
    %5009 = vmatpush1.bf16.msra.mxu0 %v4897
    %5010 = vmatprep.mubr.bf16.mxu0 %v4038
    %5011 = vmatmul.mubr.bf16.gmra.mrb[0].mxu0 %v4037
    %v5012 = vpop.f32.mrb[0].mxu0
    %v5013 = vadd.f32 %v4676, %v5012
    %v5014 = vpop.f32.mrb[0].mxu0
    %v5015 = vpop.f32.mrb[0].mxu0
    %v5016 = vadd.f32 %v4679, %v5015
    %v5017 = vpop.f32.mrb[0].mxu0
    %5018 = vmatprep.mubr.bf16.mxu0 %v4044
    %5019 = vmatmul.mubr.bf16.gmra.mrb[0].mxu0 %v4043
    %v5020 = vpop.f32.mrb[0].mxu0
    %v5021 = vadd.f32 %v4684, %v5020
    %v5022 = vpop.f32.mrb[0].mxu0
    %v5023 = vpop.f32.mrb[0].mxu0
    %v5024 = vadd.f32 %v4687, %v5023
    %v5025 = vpop.f32.mrb[0].mxu0
    %5026 = vdwg.mxu0
    %5027 = vmatprep.subr.bf16.mxu0 0
    %5028 = vmatpush1.bf16.msra.mxu0 %v4898
    %5029 = vmatprep.subr.bf16.mxu0 0
    %5030 = vmatpush1.bf16.msra.mxu0 %v4899
    %5031 = vmatprep.subr.bf16.mxu0 0
    %5032 = vmatpush1.bf16.msra.mxu0 %v4900
    %5033 = vmatprep.subr.bf16.mxu0 0
    %5034 = vmatpush1.bf16.msra.mxu0 %v4901
    %5035 = vmatprep.subr.bf16.mxu0 0
    %5036 = vmatpush1.bf16.msra.mxu0 %v4902
    %5037 = vmatprep.subr.bf16.mxu0 0
    %5038 = vmatpush1.bf16.msra.mxu0 %v4903
    %5039 = vmatprep.subr.bf16.mxu0 0
    %5040 = vmatpush1.bf16.msra.mxu0 %v4904
    %5041 = vmatprep.subr.bf16.mxu0 0
    %5042 = vmatpush1.bf16.msra.mxu0 %v4905
    %5043 = vmatprep.subr.bf16.mxu0 0
    %5044 = vmatpush1.bf16.msra.mxu0 %v4906
    %5045 = vmatprep.subr.bf16.mxu0 0
    %5046 = vmatpush1.bf16.msra.mxu0 %v4907
    %5047 = vmatprep.subr.bf16.mxu0 0
    %5048 = vmatpush1.bf16.msra.mxu0 %v4908
    %5049 = vmatprep.subr.bf16.mxu0 0
    %5050 = vmatpush1.bf16.msra.mxu0 %v4909
    %5051 = vmatprep.subr.bf16.mxu0 0
    %5052 = vmatpush1.bf16.msra.mxu0 %v4910
    %5053 = vmatprep.subr.bf16.mxu0 0
    %5054 = vmatpush1.bf16.msra.mxu0 %v4911
    %5055 = vmatprep.subr.bf16.mxu0 0
    %5056 = vmatpush1.bf16.msra.mxu0 %v4912
    %5057 = vmatprep.subr.bf16.mxu0 0
    %5058 = vmatpush1.bf16.msra.mxu0 %v4913
    %5059 = vmatprep.mubr.bf16.mxu0 %v4040
    %5060 = vmatmul.mubr.bf16.gmra.mrb[0].mxu0 %v4039
    %v5061 = vpop.f32.mrb[0].mxu0
    %v5062 = vadd.f32 %v5013, %v5061
    %v5063 = vpop.f32.mrb[0].mxu0
    %v5064 = vpop.f32.mrb[0].mxu0
    %v5065 = vadd.f32 %v5016, %v5064
    %v5066 = vpop.f32.mrb[0].mxu0
    %5067 = vmatprep.mubr.bf16.mxu0 %v4046
    %5068 = vmatmul.mubr.bf16.gmra.mrb[0].mxu0 %v4045
    %v5069 = vpop.f32.mrb[0].mxu0
    %v5070 = vadd.f32 %v5021, %v5069
    %v5071 = vpop.f32.mrb[0].mxu0
    %v5072 = vpop.f32.mrb[0].mxu0
    %v5073 = vadd.f32 %v5024, %v5072
    %v5074 = vpop.f32.mrb[0].mxu0
    %5075 = vdwg.mxu0
    %5076 = vmatprep.subr.bf16.mxu0 0
    %5077 = vmatpush1.bf16.msra.mxu0 %v4914
    %5078 = vmatprep.subr.bf16.mxu0 0
    %5079 = vmatpush1.bf16.msra.mxu0 %v4915
    %5080 = vmatprep.subr.bf16.mxu0 0
    %5081 = vmatpush1.bf16.msra.mxu0 %v4916
    %5082 = vmatprep.subr.bf16.mxu0 0
    %5083 = vmatpush1.bf16.msra.mxu0 %v4917
    %5084 = vmatprep.subr.bf16.mxu0 0
    %5085 = vmatpush1.bf16.msra.mxu0 %v4918
    %5086 = vmatprep.subr.bf16.mxu0 0
    %5087 = vmatpush1.bf16.msra.mxu0 %v4919
    %5088 = vmatprep.subr.bf16.mxu0 0
    %5089 = vmatpush1.bf16.msra.mxu0 %v4920
    %5090 = vmatprep.subr.bf16.mxu0 0
    %5091 = vmatpush1.bf16.msra.mxu0 %v4921
    %5092 = vmatprep.subr.bf16.mxu0 0
    %5093 = vmatpush1.bf16.msra.mxu0 %v4922
    %5094 = vmatprep.subr.bf16.mxu0 0
    %5095 = vmatpush1.bf16.msra.mxu0 %v4923
    %5096 = vmatprep.subr.bf16.mxu0 0
    %5097 = vmatpush1.bf16.msra.mxu0 %v4924
    %5098 = vmatprep.subr.bf16.mxu0 0
    %5099 = vmatpush1.bf16.msra.mxu0 %v4925
    %5100 = vmatprep.subr.bf16.mxu0 0
    %5101 = vmatpush1.bf16.msra.mxu0 %v4926
    %5102 = vmatprep.subr.bf16.mxu0 0
    %5103 = vmatpush1.bf16.msra.mxu0 %v4927
    %5104 = vmatprep.subr.bf16.mxu0 0
    %5105 = vmatpush1.bf16.msra.mxu0 %v4928
    %5106 = vmatprep.subr.bf16.mxu0 0
    %5107 = vmatpush1.bf16.msra.mxu0 %v4929
    %5108 = vmatprep.mubr.bf16.mxu0 %v4042
    %5109 = vmatmul.mubr.bf16.gmra.mrb[0].mxu0 %v4041
    %v5110 = vpop.f32.mrb[0].mxu0
    %v5111 = vadd.f32 %v5062, %v5110
    %v5112 = vpop.f32.mrb[0].mxu0
    %v5113 = vpop.f32.mrb[0].mxu0
    %v5114 = vadd.f32 %v5065, %v5113
    %v5115 = vpop.f32.mrb[0].mxu0
    %5116 = vmatprep.mubr.bf16.mxu0 %v4048
    %5117 = vmatmul.mubr.bf16.gmra.mrb[0].mxu0 %v4047
    %v5118 = vpop.f32.mrb[0].mxu0
    %v5119 = vadd.f32 %v5070, %v5118
    %v5120 = vpop.f32.mrb[0].mxu0
    %v5121 = vpop.f32.mrb[0].mxu0
    %v5122 = vadd.f32 %v5073, %v5121
    %v5123 = vpop.f32.mrb[0].mxu0
    %5124 = vdwg.mxu0
    %v5129 = vrot.slane %v5111, 1
    %v5130 = vrot.slane %v5114, 1
    %v5131 = vsel %vm1306, %v5129, %v5130
    %v5132 = vrot.slane %v5119, 1
    %v5133 = vrot.slane %v5122, 1
    %v5134 = vsel %vm1306, %v5132, %v5133
    %5135 = vrot.lane.b32.xlu0 %v5131, 126
    %v5136 = vpop.permute.xlu0 %5135
    %5137 = vrot.lane.b32.xlu0 %v5130, 126
    %v5138 = vpop.permute.xlu0 %5137
    %5139 = vrot.lane.b32.xlu0 %v5134, 126
    %v5140 = vpop.permute.xlu0 %5139
    %5141 = vrot.lane.b32.xlu0 %v5133, 126
    %v5142 = vpop.permute.xlu0 %5141
    %v5147 = vadd.f32 %v5111, %v5136
    %v5148 = vadd.f32 %v5114, %v5138
    %v5149 = vadd.f32 %v5119, %v5140
    %v5150 = vadd.f32 %v5122, %v5142
    %v5151 = vrot.slane %v5111, 2
    %v5152 = vrot.slane %v5114, 2
    %v5153 = vsel %vm1329, %v5151, %v5152
    %v5154 = vrot.slane %v5119, 2
    %v5155 = vrot.slane %v5122, 2
    %v5156 = vsel %vm1329, %v5154, %v5155
    %5157 = vrot.lane.b32.xlu0 %v5153, 124
    %v5158 = vpop.permute.xlu0 %5157
    %5159 = vrot.lane.b32.xlu0 %v5152, 124
    %v5160 = vpop.permute.xlu0 %5159
    %5161 = vrot.lane.b32.xlu0 %v5156, 124
    %v5162 = vpop.permute.xlu0 %5161
    %5163 = vrot.lane.b32.xlu0 %v5155, 124
    %v5164 = vpop.permute.xlu0 %5163
    %v5169 = vadd.f32 %v5147, %v5158
    %v5170 = vadd.f32 %v5148, %v5160
    %v5171 = vadd.f32 %v5149, %v5162
    %v5172 = vadd.f32 %v5150, %v5164
    %5173 = vrot.lane.b32.xlu0 %v1355, 122
    %v5174 = vpop.permute.xlu0 %5173
    %v5176 = vadd.f32 %v5169, %v5174
    %v5177 = vadd.f32 %v5170, %v5174
    %v5178 = vadd.f32 %v5171, %v5174
    %v5179 = vadd.f32 %v5172, %v5174
    %v5180 = vmax.f32 %v5176, 0.0
    %v5181 = vmax.f32 %v5177, 0.0
    %v5182 = vmax.f32 %v5178, 0.0
    %v5183 = vmax.f32 %v5179, 0.0
    %v5184 = vsel %vm1364, %v5180, -inf
    %v5185 = vsel %vm1366, %v5181, -inf
    %v5186 = vmax.f32 %v5184, %v5185
    %v5187 = vrot.slane %v5186, 4
    %v5188 = vmax.f32 %v5186, %v5187
    %v5189 = vrot.slane %v5188, 2
    %v5190 = vmax.f32 %v5188, %v5189
    %v5191 = vrot.slane %v5190, 1
    %v5192 = vmax.f32 %v5190, %v5191
    %v5193 = vsel %vm1364, %v5182, -inf
    %v5194 = vsel %vm1366, %v5183, -inf
    %v5195 = vmax.f32 %v5193, %v5194
    %v5196 = vrot.slane %v5195, 4
    %v5197 = vmax.f32 %v5195, %v5196
    %v5198 = vrot.slane %v5197, 2
    %v5199 = vmax.f32 %v5197, %v5198
    %v5200 = vrot.slane %v5199, 1
    %v5201 = vmax.f32 %v5199, %v5200
    %v5202 = vrot.slane %v5111, 3
    %v5203 = vrot.slane %v5114, 3
    %v5204 = vsel %vm1384, %v5202, %v5203
    %v5205 = vrot.slane %v5119, 3
    %v5206 = vrot.slane %v5122, 3
    %v5207 = vsel %vm1384, %v5205, %v5206
    %5208 = vrot.lane.b32.xlu0 %v5204, 122
    %v5209 = vpop.permute.xlu0 %5208
    %5210 = vrot.lane.b32.xlu0 %v5203, 122
    %v5211 = vpop.permute.xlu0 %5210
    %5212 = vrot.lane.b32.xlu0 %v5207, 122
    %v5213 = vpop.permute.xlu0 %5212
    %5214 = vrot.lane.b32.xlu0 %v5206, 122
    %v5215 = vpop.permute.xlu0 %5214
    %v5220 = vadd.f32 %v5169, %v5209
    %v5221 = vadd.f32 %v5170, %v5211
    %v5222 = vadd.f32 %v5171, %v5213
    %v5223 = vadd.f32 %v5172, %v5215
    %v5224 = vadd.f32 %v5220, %v1410
    %v5225 = vadd.f32 %v5221, %v1410
    %v5226 = vadd.f32 %v5222, %v1410
    %v5227 = vadd.f32 %v5223, %v1410
    %v5228 = vmax.f32 %v5224, 0.0
    %v5229 = vmax.f32 %v5225, 0.0
    %v5230 = vmax.f32 %v5226, 0.0
    %v5231 = vmax.f32 %v5227, 0.0
    %v5232 = vsel %vm1423, %v5228, -inf
    %v5233 = vsel %vm1425, %v5229, -inf
    %v5234 = vmax.f32 %v5232, %v5233
    %v5235 = vrot.slane %v5234, 4
    %v5236 = vmax.f32 %v5234, %v5235
    %v5237 = vrot.slane %v5236, 2
    %v5238 = vmax.f32 %v5236, %v5237
    %v5239 = vrot.slane %v5238, 1
    %v5240 = vmax.f32 %v5238, %v5239
    %v5241 = vsel %vm1423, %v5230, -inf
    %v5242 = vsel %vm1425, %v5231, -inf
    %v5243 = vmax.f32 %v5241, %v5242
    %v5244 = vrot.slane %v5243, 4
    %v5245 = vmax.f32 %v5243, %v5244
    %v5246 = vrot.slane %v5245, 2
    %v5247 = vmax.f32 %v5245, %v5246
    %v5248 = vrot.slane %v5247, 1
    %v5249 = vmax.f32 %v5247, %v5248
    %v5250 = vrot.slane %v5111, 4
    %v5251 = vrot.slane %v5114, 4
    %v5252 = vsel %vm1443, %v5250, %v5251
    %v5253 = vrot.slane %v5119, 4
    %v5254 = vrot.slane %v5122, 4
    %v5255 = vsel %vm1443, %v5253, %v5254
    %5256 = vrot.lane.b32.xlu0 %v5252, 120
    %v5257 = vpop.permute.xlu0 %5256
    %5258 = vrot.lane.b32.xlu0 %v5251, 120
    %v5259 = vpop.permute.xlu0 %5258
    %5260 = vrot.lane.b32.xlu0 %v5255, 120
    %v5261 = vpop.permute.xlu0 %5260
    %5262 = vrot.lane.b32.xlu0 %v5254, 120
    %v5263 = vpop.permute.xlu0 %5262
    %v5268 = vadd.f32 %v5220, %v5257
    %v5269 = vadd.f32 %v5221, %v5259
    %v5270 = vadd.f32 %v5222, %v5261
    %v5271 = vadd.f32 %v5223, %v5263
    %5272 = vrot.lane.b32.xlu0 %v1469, 8
    %v5273 = vpop.permute.xlu0 %5272
    %v5275 = vadd.f32 %v5268, %v5273
    %v5276 = vadd.f32 %v5269, %v5273
    %v5277 = vadd.f32 %v5270, %v5273
    %v5278 = vadd.f32 %v5271, %v5273
    %v5279 = vmax.f32 %v5275, 0.0
    %v5280 = vmax.f32 %v5276, 0.0
    %v5281 = vmax.f32 %v5277, 0.0
    %v5282 = vmax.f32 %v5278, 0.0
    %v5283 = vsel %vm1482, %v5279, -inf
    %v5284 = vsel %vm1484, %v5280, -inf
    %v5285 = vmax.f32 %v5283, %v5284
    %v5286 = vrot.slane %v5285, 4
    %v5287 = vmax.f32 %v5285, %v5286
    %v5288 = vrot.slane %v5287, 2
    %v5289 = vmax.f32 %v5287, %v5288
    %v5290 = vrot.slane %v5289, 1
    %v5291 = vmax.f32 %v5289, %v5290
    %v5292 = vsel %vm1482, %v5281, -inf
    %v5293 = vsel %vm1484, %v5282, -inf
    %v5294 = vmax.f32 %v5292, %v5293
    %v5295 = vrot.slane %v5294, 4
    %v5296 = vmax.f32 %v5294, %v5295
    %v5297 = vrot.slane %v5296, 2
    %v5298 = vmax.f32 %v5296, %v5297
    %v5299 = vrot.slane %v5298, 1
    %v5300 = vmax.f32 %v5298, %v5299
    %vm5303 = vcmask 1041409
    %v5304 = vsel %vm5303, %v1383, %v1374
    %v5308 = vsel %vm5303, %v2667, %v2658
    %5309 = vrot.lane.b32.xlu0 %v5308, 2
    %v5310 = vpop.permute.xlu0 %5309
    %v5314 = vsel %vm5303, %v3934, %v3925
    %5315 = vrot.lane.b32.xlu0 %v5314, 4
    %v5316 = vpop.permute.xlu0 %5315
    %v5320 = vsel %vm5303, %v5201, %v5192
    %5321 = vrot.lane.b32.xlu0 %v5320, 6
    %v5322 = vpop.permute.xlu0 %5321
    %v5324 = vsel %vm1364, %v5304, %v5310
    %vm5325 = vcmask 31744
    %v5326 = vsel %vm5325, %v5324, %v5316
    %vm5327 = vcmask 48128
    %v5328 = vsel %vm5327, %v5326, %v5322
    %v5331 = vsel %vm5303, %v1442, %v1433
    %5332 = vrot.lane.b32.xlu0 %v5331, 122
    %v5333 = vpop.permute.xlu0 %5332
    %v5337 = vsel %vm5303, %v2718, %v2709
    %5338 = vrot.lane.b32.xlu0 %v5337, 124
    %v5339 = vpop.permute.xlu0 %5338
    %v5343 = vsel %vm5303, %v3985, %v3976
    %5344 = vrot.lane.b32.xlu0 %v5343, 126
    %v5345 = vpop.permute.xlu0 %5344
    %v5349 = vsel %vm5303, %v5249, %v5240
    %v5351 = vsel %vm1364, %v5333, %v5339
    %v5352 = vsel %vm5325, %v5351, %v5345
    %v5353 = vsel %vm5327, %v5352, %v5349
    %v5356 = vsel %vm5303, %v1501, %v1492
    %5357 = vrot.lane.b32.xlu0 %v5356, 114
    %v5358 = vpop.permute.xlu0 %5357
    %v5362 = vsel %vm5303, %v2769, %v2760
    %5363 = vrot.lane.b32.xlu0 %v5362, 116
    %v5364 = vpop.permute.xlu0 %5363
    %v5368 = vsel %vm5303, %v4036, %v4027
    %5369 = vrot.lane.b32.xlu0 %v5368, 118
    %v5370 = vpop.permute.xlu0 %5369
    %v5374 = vsel %vm5303, %v5300, %v5291
    %5375 = vrot.lane.b32.xlu0 %v5374, 120
    %v5376 = vpop.permute.xlu0 %5375
    %v5378 = vsel %vm1364, %v5358, %v5364
    %v5379 = vsel %vm5325, %v5378, %v5370
    %v5380 = vsel %vm5327, %v5379, %v5376
    %5382 = vrot.lane.b32.xlu0 %v5353, 8
    %v5383 = vpop.permute.xlu0 %5382
    %5386 = vrot.lane.b32.xlu0 %v5380, 16
    %v5387 = vpop.permute.xlu0 %5386
    %vm5389 = vcmask 64512
    %v5390 = vsel %vm5389, %v5328, %v5383
    %vm5391 = vcmask 130048
    %v5392 = vsel %vm5391, %v5390, %v5387
    %v5393 = vpack.c.bf16 %v5392, %v5392
    %v5394 = vld [vmem:[%s3] sm:$0xf]
    %v5395 = vld [vmem:[%s3 + $0x4] sm:$0xf]
    %v5396 = vld [vmem:[%s3 + $0x8] sm:$0xf]
    %v5397 = vld [vmem:[%s4] sm:$0x1]
    %v5399 = vlaneseq
    %v5400 = vshrl.u32 %v5399, 7
    %v5401 = vsub.s32 0, %v5400
    %v5402 = vrot.slane %v5397, %v5401
    %v5407 = vunpack.c.l.b16 %v5394
    %v5408 = vunpack.c.l.b16 %v5395
    %v5409 = vunpack.c.l.b16 %v5396
    %v5410 = vpack.c.b16 %v5408, %v5407
    %v5411 = vpack.c.b16 %v5409, %v5409
    %vm5413 = vcmask 195584
    %v5415 = vsel %vm5413, %v5393, 0
    %v5418 = vsel %vm1443, %v5411, 0
    %5420 = vmatprep.subr.bf16.mxu0 0
    %5421 = vmatpush1.bf16.msra.mxu0 %v5410
    %5422 = vmatprep.subr.bf16.mxu0 0
    %5423 = vmatpush1.bf16.msra.mxu0 %v5418
    %5424 = vmatprep.subr.bf16.mxu0 0
    %5425 = vmatpush1.bf16.msra.mxu0 0
    %5426 = vmatprep.subr.bf16.mxu0 0
    %5427 = vmatpush1.bf16.msra.mxu0 0
    %5428 = vmatprep.subr.bf16.mxu0 0
    %5429 = vmatpush1.bf16.msra.mxu0 0
    %5430 = vmatprep.subr.bf16.mxu0 0
    %5431 = vmatpush1.bf16.msra.mxu0 0
    %5432 = vmatprep.subr.bf16.mxu0 0
    %5433 = vmatpush1.bf16.msra.mxu0 0
    %5434 = vmatprep.subr.bf16.mxu0 0
    %5435 = vmatpush1.bf16.msra.mxu0 0
    %5436 = vmatprep.subr.bf16.mxu0 0
    %5437 = vmatpush1.bf16.msra.mxu0 0
    %5438 = vmatprep.subr.bf16.mxu0 0
    %5439 = vmatpush1.bf16.msra.mxu0 0
    %5440 = vmatprep.subr.bf16.mxu0 0
    %5441 = vmatpush1.bf16.msra.mxu0 0
    %5442 = vmatprep.subr.bf16.mxu0 0
    %5443 = vmatpush1.bf16.msra.mxu0 0
    %5444 = vmatprep.subr.bf16.mxu0 0
    %5445 = vmatpush1.bf16.msra.mxu0 0
    %5446 = vmatprep.subr.bf16.mxu0 0
    %5447 = vmatpush1.bf16.msra.mxu0 0
    %5448 = vmatprep.subr.bf16.mxu0 0
    %5449 = vmatpush1.bf16.msra.mxu0 0
    %5450 = vmatprep.subr.bf16.mxu0 0
    %5451 = vmatpush1.bf16.msra.mxu0 0
    %5452 = vmatprep.mubr.bf16.mxu0 0
    %5453 = vmatmul.mubr.bf16.gmra.mrb[0].mxu0 %v5415
    %v5454 = vpop.f32.mrb[0].mxu0
    %v5455 = vadd.f32 %v5402, %v5454
    %v5456 = vpop.f32.mrb[0].mxu0
    %v5457 = vpop.f32.mrb[0].mxu0
    %v5458 = vpop.f32.mrb[0].mxu0
    %5459 = vdwg.mxu0
    %v5460 = vtanh.pop %v5455
    %5461 = vst [vmem:[#allocation2] sm:$0x3] %v5460
    // Predicated region
    $region22: #{hierarchy_forward.1} parent=1 // pred_check
      _
    $region23: #{hierarchy_forward.1} parent=1 // pred_check_branch
      %5463 = sbr.rel (0) target = $region25
    $region24: #{hierarchy_forward.1} parent=1 // pred_region
      %s5465 = ssub.s32 32, 32
      %5466 = vsyncadd [#allocation3], %s5465
      %s5468 = sshll.u32 [#allocation2], 4
      %s5469 = int_to_ptr.vmem [resolvable:$true] %s5468
      %5471 = dma.vmem_to_hbm [thread:$0]  %s5469, 32, %s5, [#allocation3]
    $region25: #{hierarchy_forward.1} parent=1 // pred_fallthru
      _
    // Predicated region
    $region26: #{hierarchy_forward.1} parent=1 // pred_check
      _
    $region27: #{hierarchy_forward.1} parent=1 // pred_check_branch
      %5473 = sbr.rel (0) target = $region29
    $region28: #{hierarchy_forward.1} parent=1 // pred_region
      %5474 = dma.done [#allocation3], 32
    $region29: #{hierarchy_forward.1} parent=1 // pred_fallthru
      _
    %5475 = vsyncpa [#allocation3], 1

</llo_original>
